<compile_context>
chip_gen: v6e
topology: v6e:2x2x1
jax: 0.10.0
libtpu: 0.0.40
codegen_flags: <defaults>
</compile_context>

<pallas_src>
import jax
import jax.numpy as jnp
from jax.experimental import pallas as pl
from jax.experimental.pallas import tpu as pltpu

# ----------------------------- model hyper-params -----------------------------
PATCH_SIZE = 4
IN_CHANS = 3
IMG_SIZE = 16
EMBED_DIM = 32
NUM_HEADS = 4
HEAD_DIM = EMBED_DIM // NUM_HEADS
MLP_HIDDEN = 64
DEPTH = 2
LN_EPS = 1e-6
L2_EPS = 1e-12
ATTN_SCALE = float(HEAD_DIM) ** -0.5          # python float -> compile-time literal
CLASS_TOKEN = True                            # _ViT(class_token=True)
REGISTERS = False
INTERMEDIATE_FEATURES = [0]                   # return blocks.0 output
STRIP = 5 if REGISTERS else (1 if CLASS_TOKEN else 0)
N_INTER = len(INTERMEDIATE_FEATURES) if INTERMEDIATE_FEATURES is not None else 0


# ----------------------------- shared math helpers -----------------------------
def _layernorm(x, g, b):
    mu = jnp.mean(x, axis=-1, keepdims=True)
    xc = x - mu
    var = jnp.mean(xc * xc, axis=-1, keepdims=True)
    return xc * jax.lax.rsqrt(var + LN_EPS) * g + b


def _gelu(x):
    # tanh-approximate GELU (lowers to the EUP tanh slot); max |diff| vs the exact
    # erf GELU of torch.nn.GELU is ~1e-3, negligible at these activation scales.
    c = 0.7978845608028654  # sqrt(2/pi)
    return 0.5 * x * (1.0 + jnp.tanh(c * (x + 0.044715 * x * x * x)))


# ----------------------------- the fused Pallas kernel -------------------------
def _vit_forward_kernel(patches_ref, pew_ref, peb_ref, pos_ref, cls0_ref,
                        ln1g_ref, ln1b_ref, qkvw_ref, qkvb_ref,
                        projw_ref, projb_ref, ln2g_ref, ln2b_ref,
                        fc1w_ref, fc1b_ref, fc2w_ref, fc2b_ref,
                        normg_ref, normb_ref,
                        feat_ref, key_ref, *rest):
    """Whole ViT forward for one batch element (grid over batch)."""
    inter_refs = rest[:N_INTER]
    tok_ref = rest[N_INTER]                                   # VMEM scratch [N, E]
    E, D = EMBED_DIM, HEAD_DIM

    # ---- patch embedding (conv k=p, s=p == per-patch flatten @ W) + pos embed ----
    patch_tok = (jnp.dot(patches_ref[0], pew_ref[...],
                         preferred_element_type=jnp.float32)
                 + peb_ref[...] + pos_ref[...])               # [P, E]
    if CLASS_TOKEN:
        tok_ref[0:1, :] = cls0_ref[...]                       # cls token (+ its pos)
        tok_ref[1:, :] = patch_tok
        x = tok_ref[...]                                      # [N, E]
    else:
        x = patch_tok

    # ---- transformer blocks (statically unrolled over DEPTH) ----
    for d in range(DEPTH):
        h1 = _layernorm(x, ln1g_ref[d], ln1b_ref[d])          # [N, E]
        # single fused QKV matmul; columns ordered [Q(h,d) | K(h,d) | V(h,d)]
        qkv = (jnp.dot(h1, qkvw_ref[d], preferred_element_type=jnp.float32)
               + qkvb_ref[d])                                 # [N, 3E]

        if d == DEPTH - 1:
            # key features of the last block, lane-dense [P, H*D] (stripped)
            key_ref[0] = qkv[STRIP:, E:2 * E]

        heads = []
        for h in range(NUM_HEADS):                            # static unrolled loop
            qh = qkv[:, h * D:(h + 1) * D]                    # [N, D]
            kh = qkv[:, E + h * D:E + (h + 1) * D]            # [N, D]
            vh = qkv[:, 2 * E + h * D:2 * E + (h + 1) * D]    # [N, D]
            # scores = (q*scale) @ k^T, contracting last dims (no materialized T)
            s = jax.lax.dot_general(qh * ATTN_SCALE, kh,
                                    (((1,), (1,)), ((), ())),
                                    preferred_element_type=jnp.float32)   # [N, N]
            s = s - jnp.max(s, axis=-1, keepdims=True)
            p = jnp.exp(s)
            p = p * pl.reciprocal(jnp.sum(p, axis=-1, keepdims=True), approx=True)
            heads.append(jnp.dot(p, vh, preferred_element_type=jnp.float32))
        attn = jnp.concatenate(heads, axis=-1)                # [N, E] lane concat

        # single output projection + attention residual
        x = x + (jnp.dot(attn, projw_ref[d], preferred_element_type=jnp.float32)
                 + projb_ref[d])

        # MLP + residual
        h2 = _layernorm(x, ln2g_ref[d], ln2b_ref[d])
        m = jnp.dot(h2, fc1w_ref[d], preferred_element_type=jnp.float32) + fc1b_ref[d]
        m = _gelu(m)
        x = x + (jnp.dot(m, fc2w_ref[d], preferred_element_type=jnp.float32)
                 + fc2b_ref[d])

        if INTERMEDIATE_FEATURES is not None and d in INTERMEDIATE_FEATURES:
            inter_refs[INTERMEDIATE_FEATURES.index(d)][0] = x[STRIP:]

    # ---- final LayerNorm + cls strip + F.normalize(p=2, dim=-1), all fused ----
    y = _layernorm(x[STRIP:], normg_ref[...], normb_ref[...])   # [P, E]
    nrm = jnp.sqrt(jnp.sum(y * y, axis=-1, keepdims=True))
    feat_ref[0] = y / jnp.maximum(nrm, L2_EPS)


# ----------------------------- pallas_call wrapper -----------------------------
def _tok_spec(shape):
    zeros = (0,) * (len(shape) - 1)
    return pl.BlockSpec(shape, lambda i, _z=zeros: (i,) + _z)


def _const_spec(shape):
    zeros = (0,) * len(shape)
    return pl.BlockSpec(shape, lambda i, _z=zeros: _z)


def pallas_vit_forward(patches, packed):
    """patches: [B, P, C*p*p] -> (features_normalized, key_slab, *intermediates)."""
    B, P, CPP = patches.shape
    E, H, D, HID = EMBED_DIM, NUM_HEADS, HEAD_DIM, MLP_HIDDEN
    N = P + (1 if CLASS_TOKEN else 0)
    P_out = N - STRIP

    bw = packed["blocks"]
    args = (patches, packed["patch_w"], packed["patch_b"], packed["pos_patch"],
            packed["cls0"],
            bw["ln1_g"], bw["ln1_b"], bw["qkv_w"], bw["qkv_b"],
            bw["proj_w"], bw["proj_b"], bw["ln2_g"], bw["ln2_b"],
            bw["fc1_w"], bw["fc1_b"], bw["fc2_w"], bw["fc2_b"],
            packed["norm_g"], packed["norm_b"])

    in_specs = [_tok_spec((1, P, CPP))] + [_const_spec(tuple(a.shape)) for a in args[1:]]

    n_out = 2 + N_INTER
    out_shape = tuple(jax.ShapeDtypeStruct((B, P_out, E), jnp.float32)
                      for _ in range(n_out))
    out_specs = tuple(_tok_spec((1, P_out, E)) for _ in range(n_out))

    # advisory cost estimate so XLA schedules surrounding ops sensibly
    flops_img = (2 * P * CPP * E
                 + DEPTH * (2 * N * E * (3 * E)              # fused QKV
                            + H * 2 * (2 * N * N * D)        # scores + attn@V
                            + 2 * N * E * E                  # output projection
                            + 2 * (2 * N * E * HID)))        # MLP
    weight_bytes = 4 * sum(int(a.size) for a in args[1:])
    bytes_acc = int(4 * patches.size + B * weight_bytes
                    + 4 * B * n_out * P_out * E)
    cost = pl.CostEstimate(flops=int(B * flops_img),
                           transcendentals=int(B * DEPTH * (H * N * N + N * HID)),
                           bytes_accessed=bytes_acc)

    return pl.pallas_call(
        _vit_forward_kernel,
        out_shape=out_shape,
        grid=(B,),
        in_specs=in_specs,
        out_specs=out_specs,
        scratch_shapes=[pltpu.VMEM((N, E), jnp.float32)],
        compiler_params=pltpu.CompilerParams(dimension_semantics=("parallel",)),
        cost_estimate=cost,
    )(*args)


# ----------------------------- parameter init & packing ------------------------
def init_params(key):
    """Synthetic weights in PyTorch/timm layout ([out, in] linears, conv patch embed)."""
    num_patches = (IMG_SIZE // PATCH_SIZE) ** 2
    n_tokens = num_patches + (1 if CLASS_TOKEN else 0)
    keys = jax.random.split(key, 8 + DEPTH * 8)
    ki = iter(range(len(keys)))

    def nrm(shape):
        return (0.02 * jax.random.normal(keys[next(ki)], shape)).astype(jnp.float32)

    params = {
        "patch_w": nrm((EMBED_DIM, IN_CHANS, PATCH_SIZE, PATCH_SIZE)),
        "patch_b": jnp.zeros((EMBED_DIM,), jnp.float32),
        "cls_token": nrm((1, 1, EMBED_DIM)),
        "pos_embed": nrm((1, n_tokens, EMBED_DIM)),
        "norm_g": jnp.ones((EMBED_DIM,), jnp.float32),
        "norm_b": jnp.zeros((EMBED_DIM,), jnp.float32),
        "blocks": [],
    }
    for _ in range(DEPTH):
        params["blocks"].append({
            "ln1_g": jnp.ones((EMBED_DIM,), jnp.float32),
            "ln1_b": jnp.zeros((EMBED_DIM,), jnp.float32),
            "qkv_w": nrm((3 * EMBED_DIM, EMBED_DIM)),
            "qkv_b": jnp.zeros((3 * EMBED_DIM,), jnp.float32),
            "proj_w": nrm((EMBED_DIM, EMBED_DIM)),
            "proj_b": jnp.zeros((EMBED_DIM,), jnp.float32),
            "ln2_g": jnp.ones((EMBED_DIM,), jnp.float32),
            "ln2_b": jnp.zeros((EMBED_DIM,), jnp.float32),
            "fc1_w": nrm((MLP_HIDDEN, EMBED_DIM)),
            "fc1_b": jnp.zeros((MLP_HIDDEN,), jnp.float32),
            "fc2_w": nrm((EMBED_DIM, MLP_HIDDEN)),
            "fc2_b": jnp.zeros((EMBED_DIM,), jnp.float32),
        })
    return params


def pack_params(params):
    """One-time repack into kernel-friendly layouts.

    Linears become [K, N] (pre-transposed), per-block weights are stacked along a
    leading DEPTH axis, the cls token's positional embedding is pre-added.
    torch qkv weight [3E, E] -> W.T = [E, 3E]; its output column order is
    (q|k|v) x (head-major, then head_dim) which the kernel slices statically.
    """
    E, HID = EMBED_DIM, MLP_HIDDEN
    cpp = IN_CHANS * PATCH_SIZE * PATCH_SIZE
    pos = params["pos_embed"][0]                          # [n_tokens, E]
    if CLASS_TOKEN:
        cls0 = (params["cls_token"][0, 0] + pos[0]).reshape(1, E)
        pos_patch = pos[1:]
    else:
        cls0 = jnp.zeros((1, E), jnp.float32)
        pos_patch = pos

    def stack(name, fn):
        return jnp.stack([fn(bp[name]) for bp in params["blocks"]], axis=0)

    blocks = {
        "ln1_g": stack("ln1_g", lambda w: w.reshape(1, E)),
        "ln1_b": stack("ln1_b", lambda w: w.reshape(1, E)),
        "qkv_w": stack("qkv_w", lambda w: w.T),                   # [DEPTH, E, 3E]
        "qkv_b": stack("qkv_b", lambda w: w.reshape(1, 3 * E)),   # [DEPTH, 1, 3E]
        "proj_w": stack("proj_w", lambda w: w.T),                 # [DEPTH, E, E]
        "proj_b": stack("proj_b", lambda w: w.reshape(1, E)),
        "ln2_g": stack("ln2_g", lambda w: w.reshape(1, E)),
        "ln2_b": stack("ln2_b", lambda w: w.reshape(1, E)),
        "fc1_w": stack("fc1_w", lambda w: w.T),                   # [DEPTH, E, HID]
        "fc1_b": stack("fc1_b", lambda w: w.reshape(1, HID)),
        "fc2_w": stack("fc2_w", lambda w: w.T),                   # [DEPTH, HID, E]
        "fc2_b": stack("fc2_b", lambda w: w.reshape(1, E)),
    }
    return {
        "patch_w": params["patch_w"].reshape(E, cpp).T,           # [C*p*p, E]
        "patch_b": params["patch_b"].reshape(1, E),
        "pos_patch": pos_patch,                                   # [P, E]
        "cls0": cls0,                                             # [1, E]
        "norm_g": params["norm_g"].reshape(1, E),
        "norm_b": params["norm_b"].reshape(1, E),
        "blocks": blocks,
    }


# ----------------------------- forward pass ------------------------------------
def vit_forward(images, packed):
    """images: [B, 3, H, W] -> dict like _ViT.forward (cls token stripped)."""
    B, C, Himg, Wimg = images.shape
    p = PATCH_SIZE
    hp, wp = Himg // p, Wimg // p
    P = hp * wp

    # conv(k=p, s=p) patch embed == per-patch flatten in (c, ph, pw) order @ W + b
    patches = (images.reshape(B, C, hp, p, wp, p)
                     .transpose(0, 2, 4, 1, 3, 5)
                     .reshape(B, P, C * p * p))

    outs = pallas_vit_forward(patches, packed)                # single fused kernel
    feats, key_slab = outs[0], outs[1]
    key_features = (key_slab.reshape(B, -1, NUM_HEADS, HEAD_DIM)
                            .transpose(0, 2, 1, 3))           # [B, H, P, D]

    out = {"features_normalized": feats, "key_features": key_features}
    for idx in range(N_INTER):
        out[f"intermediate_features.{idx}"] = outs[2 + idx]
    return out


# ----------------------------- pure-JAX reference (sanity check) ---------------
def vit_forward_reference(images, packed):
    B, C, Himg, Wimg = images.shape
    p = PATCH_SIZE
    hp, wp = Himg // p, Wimg // p
    P = hp * wp
    E, H, D = EMBED_DIM, NUM_HEADS, HEAD_DIM
    patches = (images.reshape(B, C, hp, p, wp, p)
                     .transpose(0, 2, 4, 1, 3, 5)
                     .reshape(B, P, C * p * p))
    x = patches @ packed["patch_w"] + packed["patch_b"] + packed["pos_patch"]
    if CLASS_TOKEN:
        x = jnp.concatenate(
            [jnp.broadcast_to(packed["cls0"][None], (B, 1, E)), x], axis=1)
    bw = packed["blocks"]
    inters, k_last = {}, None
    for d in range(DEPTH):
        h1 = _layernorm(x, bw["ln1_g"][d], bw["ln1_b"][d])
        qkv = h1 @ bw["qkv_w"][d] + bw["qkv_b"][d]
        q = qkv[..., :E].reshape(B, -1, H, D).transpose(0, 2, 1, 3)
        k_last = qkv[..., E:2 * E].reshape(B, -1, H, D).transpose(0, 2, 1, 3)
        v = qkv[..., 2 * E:].reshape(B, -1, H, D).transpose(0, 2, 1, 3)
        s = (q * ATTN_SCALE) @ k_last.transpose(0, 1, 3, 2)
        o = (jax.nn.softmax(s, axis=-1) @ v).transpose(0, 2, 1, 3).reshape(B, -1, E)
        x = x + o @ bw["proj_w"][d] + bw["proj_b"][d]
        h2 = _layernorm(x, bw["ln2_g"][d], bw["ln2_b"][d])
        m = _gelu(h2 @ bw["fc1_w"][d] + bw["fc1_b"][d])
        x = x + m @ bw["fc2_w"][d] + bw["fc2_b"][d]
        if INTERMEDIATE_FEATURES is not None and d in INTERMEDIATE_FEATURES:
            inters[INTERMEDIATE_FEATURES.index(d)] = x[:, STRIP:]
    y = _layernorm(x[:, STRIP:], packed["norm_g"], packed["norm_b"])
    y = y / jnp.maximum(jnp.linalg.norm(y, axis=-1, keepdims=True), L2_EPS)
    out = {"features_normalized": y, "key_features": k_last[:, :, STRIP:]}
    for idx, val in inters.items():
        out[f"intermediate_features.{idx}"] = val
    return out


# ----------------------------- main --------------------------------------------
if __name__ == "__main__":
    key = jax.random.PRNGKey(0)
    k_img, k_param = jax.random.split(key)

    images = jax.random.uniform(k_img, (2, IN_CHANS, IMG_SIZE, IMG_SIZE),
                                dtype=jnp.float32)
    params = init_params(k_param)
    packed = pack_params(params)          # weight repack / pre-transpose done ONCE

    fwd = jax.jit(vit_forward)
    out = jax.block_until_ready(fwd(images, packed))

    # Shapes per the module contract (cls token stripped)
    num_patches = (IMG_SIZE // PATCH_SIZE) ** 2
    assert out["features_normalized"].shape == (2, num_patches, EMBED_DIM)
    assert out["key_features"].shape == (2, NUM_HEADS, num_patches, HEAD_DIM)
    assert out["intermediate_features.0"].shape == (2, num_patches, EMBED_DIM)
    # L2-norm + finiteness checks
    norms = jnp.linalg.norm(out["features_normalized"], axis=2)
    assert jnp.allclose(norms, 1.0, atol=1e-4)
    assert all(bool(jnp.all(jnp.isfinite(v))) for v in out.values())
    # Loose numeric sanity check against a pure-JAX reference of the same math
    ref = vit_forward_reference(images, packed)
    for name in out:
        assert jnp.allclose(out[name], ref[name], atol=2e-2), name

    print("KERNEL_OK")
</pallas_src>

<mosaic_0001>
module attributes {stable_mosaic.version = 11 : i64} {
  func.func @_vit_forward_kernel(%arg0: i32, %arg1: memref<1x16x48xf32, #tpu.memory_space<vmem>>, %arg2: memref<48x32xf32, #tpu.memory_space<vmem>>, %arg3: memref<1x32xf32, #tpu.memory_space<vmem>>, %arg4: memref<16x32xf32, #tpu.memory_space<vmem>>, %arg5: memref<1x32xf32, #tpu.memory_space<vmem>>, %arg6: memref<2x1x32xf32, #tpu.memory_space<vmem>>, %arg7: memref<2x1x32xf32, #tpu.memory_space<vmem>>, %arg8: memref<2x32x96xf32, #tpu.memory_space<vmem>>, %arg9: memref<2x1x96xf32, #tpu.memory_space<vmem>>, %arg10: memref<2x32x32xf32, #tpu.memory_space<vmem>>, %arg11: memref<2x1x32xf32, #tpu.memory_space<vmem>>, %arg12: memref<2x1x32xf32, #tpu.memory_space<vmem>>, %arg13: memref<2x1x32xf32, #tpu.memory_space<vmem>>, %arg14: memref<2x32x64xf32, #tpu.memory_space<vmem>>, %arg15: memref<2x1x64xf32, #tpu.memory_space<vmem>>, %arg16: memref<2x64x32xf32, #tpu.memory_space<vmem>>, %arg17: memref<2x1x32xf32, #tpu.memory_space<vmem>>, %arg18: memref<1x32xf32, #tpu.memory_space<vmem>>, %arg19: memref<1x32xf32, #tpu.memory_space<vmem>>, %arg20: memref<1x16x32xf32, #tpu.memory_space<vmem>>, %arg21: memref<1x16x32xf32, #tpu.memory_space<vmem>>, %arg22: memref<1x16x32xf32, #tpu.memory_space<vmem>>, %arg23: memref<17x32xf32, #tpu.memory_space<vmem>>) attributes {dimension_semantics = [#tpu.dimension_semantics<parallel>], iteration_bounds = array<i64: 2>, scalar_prefetch = 0 : i64, scratch_operands = 1 : i64, tpu.core_type = #tpu.core_type<tc>, window_params = [{transform_indices = @transform_0, window_bounds = array<i64: 1, 16, 48>}, {pipeline_mode = #tpu.pipeline_mode<synchronous>, transform_indices = @transform_1, window_bounds = array<i64: 48, 32>}, {pipeline_mode = #tpu.pipeline_mode<synchronous>, transform_indices = @transform_2, window_bounds = array<i64: 1, 32>}, {pipeline_mode = #tpu.pipeline_mode<synchronous>, transform_indices = @transform_3, window_bounds = array<i64: 16, 32>}, {pipeline_mode = #tpu.pipeline_mode<synchronous>, transform_indices = @transform_4, window_bounds = array<i64: 1, 32>}, {pipeline_mode = #tpu.pipeline_mode<synchronous>, transform_indices = @transform_5, window_bounds = array<i64: 2, 1, 32>}, {pipeline_mode = #tpu.pipeline_mode<synchronous>, transform_indices = @transform_6, window_bounds = array<i64: 2, 1, 32>}, {pipeline_mode = #tpu.pipeline_mode<synchronous>, transform_indices = @transform_7, window_bounds = array<i64: 2, 32, 96>}, {pipeline_mode = #tpu.pipeline_mode<synchronous>, transform_indices = @transform_8, window_bounds = array<i64: 2, 1, 96>}, {pipeline_mode = #tpu.pipeline_mode<synchronous>, transform_indices = @transform_9, window_bounds = array<i64: 2, 32, 32>}, {pipeline_mode = #tpu.pipeline_mode<synchronous>, transform_indices = @transform_10, window_bounds = array<i64: 2, 1, 32>}, {pipeline_mode = #tpu.pipeline_mode<synchronous>, transform_indices = @transform_11, window_bounds = array<i64: 2, 1, 32>}, {pipeline_mode = #tpu.pipeline_mode<synchronous>, transform_indices = @transform_12, window_bounds = array<i64: 2, 1, 32>}, {pipeline_mode = #tpu.pipeline_mode<synchronous>, transform_indices = @transform_13, window_bounds = array<i64: 2, 32, 64>}, {pipeline_mode = #tpu.pipeline_mode<synchronous>, transform_indices = @transform_14, window_bounds = array<i64: 2, 1, 64>}, {pipeline_mode = #tpu.pipeline_mode<synchronous>, transform_indices = @transform_15, window_bounds = array<i64: 2, 64, 32>}, {pipeline_mode = #tpu.pipeline_mode<synchronous>, transform_indices = @transform_16, window_bounds = array<i64: 2, 1, 32>}, {pipeline_mode = #tpu.pipeline_mode<synchronous>, transform_indices = @transform_17, window_bounds = array<i64: 1, 32>}, {pipeline_mode = #tpu.pipeline_mode<synchronous>, transform_indices = @transform_18, window_bounds = array<i64: 1, 32>}, {transform_indices = @transform_19, window_bounds = array<i64: 1, 16, 32>}, {transform_indices = @transform_20, window_bounds = array<i64: 1, 16, 32>}, {transform_indices = @transform_21, window_bounds = array<i64: 1, 16, 32>}]} {
    %c0 = arith.constant 0 : index
    %c0_0 = arith.constant 0 : index
    %c0_1 = arith.constant 0 : index
    %0 = vector.load %arg1[%c0, %c0_0, %c0_1] : memref<1x16x48xf32, #tpu.memory_space<vmem>>, vector<1x16x48xf32>
    %1 = vector.shape_cast %0 : vector<1x16x48xf32> to vector<16x48xf32>
    %c0_2 = arith.constant 0 : index
    %c0_3 = arith.constant 0 : index
    %2 = vector.load %arg2[%c0_2, %c0_3] : memref<48x32xf32, #tpu.memory_space<vmem>>, vector<48x32xf32>
    %cst = arith.constant dense<0.000000e+00> : vector<16x32xf32>
    %3 = tpu.matmul %1, %2, %cst {dimension_numbers = #tpu.dot_dimension_numbers<[1], [0], [0], [1], [0, 0, 1, 1], [], []>} : vector<16x48xf32>, vector<48x32xf32>, vector<16x32xf32> -> vector<16x32xf32>
    %c0_4 = arith.constant 0 : index
    %c0_5 = arith.constant 0 : index
    %4 = vector.load %arg3[%c0_4, %c0_5] : memref<1x32xf32, #tpu.memory_space<vmem>>, vector<1x32xf32>
    %5 = vector.broadcast %4 : vector<1x32xf32> to vector<16x32xf32>
    %6 = arith.addf %3, %5 : vector<16x32xf32>
    %c0_6 = arith.constant 0 : index
    %c0_7 = arith.constant 0 : index
    %7 = vector.load %arg4[%c0_6, %c0_7] : memref<16x32xf32, #tpu.memory_space<vmem>>, vector<16x32xf32>
    %8 = arith.addf %6, %7 : vector<16x32xf32>
    %c0_8 = arith.constant 0 : index
    %c0_9 = arith.constant 0 : index
    %9 = vector.load %arg5[%c0_8, %c0_9] : memref<1x32xf32, #tpu.memory_space<vmem>>, vector<1x32xf32>
    %c0_10 = arith.constant 0 : index
    %c0_11 = arith.constant 0 : index
    %10 = vector.load %arg23[%c0_10, %c0_11] : memref<17x32xf32, #tpu.memory_space<vmem>>, vector<1x32xf32>
    tpu.vector_store %arg23[%c0_10, %c0_11], %9 {strides = array<i32>} : memref<17x32xf32, #tpu.memory_space<vmem>>, vector<1x32xf32>,
    %c1 = arith.constant 1 : index
    %c0_12 = arith.constant 0 : index
    %11 = vector.load %arg23[%c1, %c0_12] : memref<17x32xf32, #tpu.memory_space<vmem>>, vector<16x32xf32>
    tpu.vector_store %arg23[%c1, %c0_12], %8 {strides = array<i32>} : memref<17x32xf32, #tpu.memory_space<vmem>>, vector<16x32xf32>,
    %c0_13 = arith.constant 0 : index
    %c0_14 = arith.constant 0 : index
    %12 = vector.load %arg23[%c0_13, %c0_14] : memref<17x32xf32, #tpu.memory_space<vmem>>, vector<17x32xf32>
    %c0_15 = arith.constant 0 : index
    %c0_16 = arith.constant 0 : index
    %c0_17 = arith.constant 0 : index
    %13 = vector.load %arg6[%c0_15, %c0_16, %c0_17] : memref<2x1x32xf32, #tpu.memory_space<vmem>>, vector<1x1x32xf32>
    %14 = vector.shape_cast %13 : vector<1x1x32xf32> to vector<1x32xf32>
    %c0_18 = arith.constant 0 : index
    %c0_19 = arith.constant 0 : index
    %c0_20 = arith.constant 0 : index
    %15 = vector.load %arg7[%c0_18, %c0_19, %c0_20] : memref<2x1x32xf32, #tpu.memory_space<vmem>>, vector<1x1x32xf32>
    %16 = vector.shape_cast %15 : vector<1x1x32xf32> to vector<1x32xf32>
    %cst_21 = arith.constant dense<0.000000e+00> : vector<17xf32>
    %17 = vector.multi_reduction <add>, %12, %cst_21 [1] : vector<17x32xf32> to vector<17xf32>
    %18 = vector.shape_cast %17 : vector<17xf32> to vector<17x1xf32>
    %cst_22 = arith.constant 3.200000e+01 : f32
    %19 = vector.broadcast %cst_22 : f32 to vector<17x1xf32>
    %20 = arith.divf %18, %19 : vector<17x1xf32>
    %21 = vector.broadcast %20 : vector<17x1xf32> to vector<17x32xf32>
    %22 = arith.subf %12, %21 : vector<17x32xf32>
    %23 = arith.mulf %22, %22 : vector<17x32xf32>
    %cst_23 = arith.constant dense<0.000000e+00> : vector<17xf32>
    %24 = vector.multi_reduction <add>, %23, %cst_23 [1] : vector<17x32xf32> to vector<17xf32>
    %25 = vector.shape_cast %24 : vector<17xf32> to vector<17x1xf32>
    %cst_24 = arith.constant 3.200000e+01 : f32
    %26 = vector.broadcast %cst_24 : f32 to vector<17x1xf32>
    %27 = arith.divf %25, %26 : vector<17x1xf32>
    %cst_25 = arith.constant 9.99999997E-7 : f32
    %28 = vector.broadcast %cst_25 : f32 to vector<17x1xf32>
    %29 = arith.addf %27, %28 : vector<17x1xf32>
    %30 = math.rsqrt %29 : vector<17x1xf32>
    %31 = vector.broadcast %30 : vector<17x1xf32> to vector<17x32xf32>
    %32 = arith.mulf %22, %31 : vector<17x32xf32>
    %33 = vector.broadcast %14 : vector<1x32xf32> to vector<17x32xf32>
    %34 = arith.mulf %32, %33 : vector<17x32xf32>
    %35 = vector.broadcast %16 : vector<1x32xf32> to vector<17x32xf32>
    %36 = arith.addf %34, %35 : vector<17x32xf32>
    %c0_26 = arith.constant 0 : index
    %c0_27 = arith.constant 0 : index
    %c0_28 = arith.constant 0 : index
    %37 = vector.load %arg8[%c0_26, %c0_27, %c0_28] : memref<2x32x96xf32, #tpu.memory_space<vmem>>, vector<1x32x96xf32>
    %38 = vector.shape_cast %37 : vector<1x32x96xf32> to vector<32x96xf32>
    %cst_29 = arith.constant dense<0.000000e+00> : vector<17x96xf32>
    %39 = tpu.matmul %36, %38, %cst_29 {dimension_numbers = #tpu.dot_dimension_numbers<[1], [0], [0], [1], [0, 0, 1, 1], [], []>} : vector<17x32xf32>, vector<32x96xf32>, vector<17x96xf32> -> vector<17x96xf32>
    %c0_30 = arith.constant 0 : index
    %c0_31 = arith.constant 0 : index
    %c0_32 = arith.constant 0 : index
    %40 = vector.load %arg9[%c0_30, %c0_31, %c0_32] : memref<2x1x96xf32, #tpu.memory_space<vmem>>, vector<1x1x96xf32>
    %41 = vector.shape_cast %40 : vector<1x1x96xf32> to vector<1x96xf32>
    %42 = vector.broadcast %41 : vector<1x96xf32> to vector<17x96xf32>
    %43 = arith.addf %39, %42 : vector<17x96xf32>
    %44 = vector.extract_strided_slice %43 {offsets = [0, 0], sizes = [17, 8], strides = [1, 1]} : vector<17x96xf32> to vector<17x8xf32>
    %45 = vector.extract_strided_slice %43 {offsets = [0, 32], sizes = [17, 8], strides = [1, 1]} : vector<17x96xf32> to vector<17x8xf32>
    %46 = vector.extract_strided_slice %43 {offsets = [0, 64], sizes = [17, 8], strides = [1, 1]} : vector<17x96xf32> to vector<17x8xf32>
    %cst_33 = arith.constant 0.353553385 : f32
    %47 = vector.broadcast %cst_33 : f32 to vector<17x8xf32>
    %48 = arith.mulf %44, %47 : vector<17x8xf32>
    %cst_34 = arith.constant dense<0.000000e+00> : vector<17x17xf32>
    %49 = tpu.matmul %48, %45, %cst_34 {dimension_numbers = #tpu.dot_dimension_numbers<[1], [1], [0], [0], [0, 0, 1, 0], [], []>} : vector<17x8xf32>, vector<17x8xf32>, vector<17x17xf32> -> vector<17x17xf32>
    %cst_35 = arith.constant dense<0xFF800000> : vector<17xf32>
    %50 = vector.multi_reduction <maximumf>, %49, %cst_35 [1] : vector<17x17xf32> to vector<17xf32>
    %51 = vector.shape_cast %50 : vector<17xf32> to vector<17x1xf32>
    %52 = vector.broadcast %51 : vector<17x1xf32> to vector<17x17xf32>
    %53 = arith.subf %49, %52 : vector<17x17xf32>
    %54 = math.exp %53 : vector<17x17xf32>
    %cst_36 = arith.constant dense<0.000000e+00> : vector<17xf32>
    %55 = vector.multi_reduction <add>, %54, %cst_36 [1] : vector<17x17xf32> to vector<17xf32>
    %56 = vector.shape_cast %55 : vector<17xf32> to vector<17x1xf32>
    %57 = tpu.reciprocal %56 {approx = true} : vector<17x1xf32> -> vector<17x1xf32>
    %58 = vector.broadcast %57 : vector<17x1xf32> to vector<17x17xf32>
    %59 = arith.mulf %54, %58 : vector<17x17xf32>
    %cst_37 = arith.constant dense<0.000000e+00> : vector<17x8xf32>
    %60 = tpu.matmul %59, %46, %cst_37 {dimension_numbers = #tpu.dot_dimension_numbers<[1], [0], [0], [1], [0, 0, 1, 1], [], []>} : vector<17x17xf32>, vector<17x8xf32>, vector<17x8xf32> -> vector<17x8xf32>
    %61 = vector.extract_strided_slice %43 {offsets = [0, 8], sizes = [17, 8], strides = [1, 1]} : vector<17x96xf32> to vector<17x8xf32>
    %62 = vector.extract_strided_slice %43 {offsets = [0, 40], sizes = [17, 8], strides = [1, 1]} : vector<17x96xf32> to vector<17x8xf32>
    %63 = vector.extract_strided_slice %43 {offsets = [0, 72], sizes = [17, 8], strides = [1, 1]} : vector<17x96xf32> to vector<17x8xf32>
    %cst_38 = arith.constant 0.353553385 : f32
    %64 = vector.broadcast %cst_38 : f32 to vector<17x8xf32>
    %65 = arith.mulf %61, %64 : vector<17x8xf32>
    %cst_39 = arith.constant dense<0.000000e+00> : vector<17x17xf32>
    %66 = tpu.matmul %65, %62, %cst_39 {dimension_numbers = #tpu.dot_dimension_numbers<[1], [1], [0], [0], [0, 0, 1, 0], [], []>} : vector<17x8xf32>, vector<17x8xf32>, vector<17x17xf32> -> vector<17x17xf32>
    %cst_40 = arith.constant dense<0xFF800000> : vector<17xf32>
    %67 = vector.multi_reduction <maximumf>, %66, %cst_40 [1] : vector<17x17xf32> to vector<17xf32>
    %68 = vector.shape_cast %67 : vector<17xf32> to vector<17x1xf32>
    %69 = vector.broadcast %68 : vector<17x1xf32> to vector<17x17xf32>
    %70 = arith.subf %66, %69 : vector<17x17xf32>
    %71 = math.exp %70 : vector<17x17xf32>
    %cst_41 = arith.constant dense<0.000000e+00> : vector<17xf32>
    %72 = vector.multi_reduction <add>, %71, %cst_41 [1] : vector<17x17xf32> to vector<17xf32>
    %73 = vector.shape_cast %72 : vector<17xf32> to vector<17x1xf32>
    %74 = tpu.reciprocal %73 {approx = true} : vector<17x1xf32> -> vector<17x1xf32>
    %75 = vector.broadcast %74 : vector<17x1xf32> to vector<17x17xf32>
    %76 = arith.mulf %71, %75 : vector<17x17xf32>
    %cst_42 = arith.constant dense<0.000000e+00> : vector<17x8xf32>
    %77 = tpu.matmul %76, %63, %cst_42 {dimension_numbers = #tpu.dot_dimension_numbers<[1], [0], [0], [1], [0, 0, 1, 1], [], []>} : vector<17x17xf32>, vector<17x8xf32>, vector<17x8xf32> -> vector<17x8xf32>
    %78 = vector.extract_strided_slice %43 {offsets = [0, 16], sizes = [17, 8], strides = [1, 1]} : vector<17x96xf32> to vector<17x8xf32>
    %79 = vector.extract_strided_slice %43 {offsets = [0, 48], sizes = [17, 8], strides = [1, 1]} : vector<17x96xf32> to vector<17x8xf32>
    %80 = vector.extract_strided_slice %43 {offsets = [0, 80], sizes = [17, 8], strides = [1, 1]} : vector<17x96xf32> to vector<17x8xf32>
    %cst_43 = arith.constant 0.353553385 : f32
    %81 = vector.broadcast %cst_43 : f32 to vector<17x8xf32>
    %82 = arith.mulf %78, %81 : vector<17x8xf32>
    %cst_44 = arith.constant dense<0.000000e+00> : vector<17x17xf32>
    %83 = tpu.matmul %82, %79, %cst_44 {dimension_numbers = #tpu.dot_dimension_numbers<[1], [1], [0], [0], [0, 0, 1, 0], [], []>} : vector<17x8xf32>, vector<17x8xf32>, vector<17x17xf32> -> vector<17x17xf32>
    %cst_45 = arith.constant dense<0xFF800000> : vector<17xf32>
    %84 = vector.multi_reduction <maximumf>, %83, %cst_45 [1] : vector<17x17xf32> to vector<17xf32>
    %85 = vector.shape_cast %84 : vector<17xf32> to vector<17x1xf32>
    %86 = vector.broadcast %85 : vector<17x1xf32> to vector<17x17xf32>
    %87 = arith.subf %83, %86 : vector<17x17xf32>
    %88 = math.exp %87 : vector<17x17xf32>
    %cst_46 = arith.constant dense<0.000000e+00> : vector<17xf32>
    %89 = vector.multi_reduction <add>, %88, %cst_46 [1] : vector<17x17xf32> to vector<17xf32>
    %90 = vector.shape_cast %89 : vector<17xf32> to vector<17x1xf32>
    %91 = tpu.reciprocal %90 {approx = true} : vector<17x1xf32> -> vector<17x1xf32>
    %92 = vector.broadcast %91 : vector<17x1xf32> to vector<17x17xf32>
    %93 = arith.mulf %88, %92 : vector<17x17xf32>
    %cst_47 = arith.constant dense<0.000000e+00> : vector<17x8xf32>
    %94 = tpu.matmul %93, %80, %cst_47 {dimension_numbers = #tpu.dot_dimension_numbers<[1], [0], [0], [1], [0, 0, 1, 1], [], []>} : vector<17x17xf32>, vector<17x8xf32>, vector<17x8xf32> -> vector<17x8xf32>
    %95 = vector.extract_strided_slice %43 {offsets = [0, 24], sizes = [17, 8], strides = [1, 1]} : vector<17x96xf32> to vector<17x8xf32>
    %96 = vector.extract_strided_slice %43 {offsets = [0, 56], sizes = [17, 8], strides = [1, 1]} : vector<17x96xf32> to vector<17x8xf32>
    %97 = vector.extract_strided_slice %43 {offsets = [0, 88], sizes = [17, 8], strides = [1, 1]} : vector<17x96xf32> to vector<17x8xf32>
    %cst_48 = arith.constant 0.353553385 : f32
    %98 = vector.broadcast %cst_48 : f32 to vector<17x8xf32>
    %99 = arith.mulf %95, %98 : vector<17x8xf32>
    %cst_49 = arith.constant dense<0.000000e+00> : vector<17x17xf32>
    %100 = tpu.matmul %99, %96, %cst_49 {dimension_numbers = #tpu.dot_dimension_numbers<[1], [1], [0], [0], [0, 0, 1, 0], [], []>} : vector<17x8xf32>, vector<17x8xf32>, vector<17x17xf32> -> vector<17x17xf32>
    %cst_50 = arith.constant dense<0xFF800000> : vector<17xf32>
    %101 = vector.multi_reduction <maximumf>, %100, %cst_50 [1] : vector<17x17xf32> to vector<17xf32>
    %102 = vector.shape_cast %101 : vector<17xf32> to vector<17x1xf32>
    %103 = vector.broadcast %102 : vector<17x1xf32> to vector<17x17xf32>
    %104 = arith.subf %100, %103 : vector<17x17xf32>
    %105 = math.exp %104 : vector<17x17xf32>
    %cst_51 = arith.constant dense<0.000000e+00> : vector<17xf32>
    %106 = vector.multi_reduction <add>, %105, %cst_51 [1] : vector<17x17xf32> to vector<17xf32>
    %107 = vector.shape_cast %106 : vector<17xf32> to vector<17x1xf32>
    %108 = tpu.reciprocal %107 {approx = true} : vector<17x1xf32> -> vector<17x1xf32>
    %109 = vector.broadcast %108 : vector<17x1xf32> to vector<17x17xf32>
    %110 = arith.mulf %105, %109 : vector<17x17xf32>
    %cst_52 = arith.constant dense<0.000000e+00> : vector<17x8xf32>
    %111 = tpu.matmul %110, %97, %cst_52 {dimension_numbers = #tpu.dot_dimension_numbers<[1], [0], [0], [1], [0, 0, 1, 1], [], []>} : vector<17x17xf32>, vector<17x8xf32>, vector<17x8xf32> -> vector<17x8xf32>
    %112 = tpu.concatenate %60, %77, %94, %111 in 1 : vector<17x8xf32>, vector<17x8xf32>, vector<17x8xf32>, vector<17x8xf32> -> vector<17x32xf32>
    %c0_53 = arith.constant 0 : index
    %c0_54 = arith.constant 0 : index
    %c0_55 = arith.constant 0 : index
    %113 = vector.load %arg10[%c0_53, %c0_54, %c0_55] : memref<2x32x32xf32, #tpu.memory_space<vmem>>, vector<1x32x32xf32>
    %114 = vector.shape_cast %113 : vector<1x32x32xf32> to vector<32x32xf32>
    %cst_56 = arith.constant dense<0.000000e+00> : vector<17x32xf32>
    %115 = tpu.matmul %112, %114, %cst_56 {dimension_numbers = #tpu.dot_dimension_numbers<[1], [0], [0], [1], [0, 0, 1, 1], [], []>} : vector<17x32xf32>, vector<32x32xf32>, vector<17x32xf32> -> vector<17x32xf32>
    %c0_57 = arith.constant 0 : index
    %c0_58 = arith.constant 0 : index
    %c0_59 = arith.constant 0 : index
    %116 = vector.load %arg11[%c0_57, %c0_58, %c0_59] : memref<2x1x32xf32, #tpu.memory_space<vmem>>, vector<1x1x32xf32>
    %117 = vector.shape_cast %116 : vector<1x1x32xf32> to vector<1x32xf32>
    %118 = vector.broadcast %117 : vector<1x32xf32> to vector<17x32xf32>
    %119 = arith.addf %115, %118 : vector<17x32xf32>
    %120 = arith.addf %12, %119 : vector<17x32xf32>
    %c0_60 = arith.constant 0 : index
    %c0_61 = arith.constant 0 : index
    %c0_62 = arith.constant 0 : index
    %121 = vector.load %arg12[%c0_60, %c0_61, %c0_62] : memref<2x1x32xf32, #tpu.memory_space<vmem>>, vector<1x1x32xf32>
    %122 = vector.shape_cast %121 : vector<1x1x32xf32> to vector<1x32xf32>
    %c0_63 = arith.constant 0 : index
    %c0_64 = arith.constant 0 : index
    %c0_65 = arith.constant 0 : index
    %123 = vector.load %arg13[%c0_63, %c0_64, %c0_65] : memref<2x1x32xf32, #tpu.memory_space<vmem>>, vector<1x1x32xf32>
    %124 = vector.shape_cast %123 : vector<1x1x32xf32> to vector<1x32xf32>
    %cst_66 = arith.constant dense<0.000000e+00> : vector<17xf32>
    %125 = vector.multi_reduction <add>, %120, %cst_66 [1] : vector<17x32xf32> to vector<17xf32>
    %126 = vector.shape_cast %125 : vector<17xf32> to vector<17x1xf32>
    %cst_67 = arith.constant 3.200000e+01 : f32
    %127 = vector.broadcast %cst_67 : f32 to vector<17x1xf32>
    %128 = arith.divf %126, %127 : vector<17x1xf32>
    %129 = vector.broadcast %128 : vector<17x1xf32> to vector<17x32xf32>
    %130 = arith.subf %120, %129 : vector<17x32xf32>
    %131 = arith.mulf %130, %130 : vector<17x32xf32>
    %cst_68 = arith.constant dense<0.000000e+00> : vector<17xf32>
    %132 = vector.multi_reduction <add>, %131, %cst_68 [1] : vector<17x32xf32> to vector<17xf32>
    %133 = vector.shape_cast %132 : vector<17xf32> to vector<17x1xf32>
    %cst_69 = arith.constant 3.200000e+01 : f32
    %134 = vector.broadcast %cst_69 : f32 to vector<17x1xf32>
    %135 = arith.divf %133, %134 : vector<17x1xf32>
    %cst_70 = arith.constant 9.99999997E-7 : f32
    %136 = vector.broadcast %cst_70 : f32 to vector<17x1xf32>
    %137 = arith.addf %135, %136 : vector<17x1xf32>
    %138 = math.rsqrt %137 : vector<17x1xf32>
    %139 = vector.broadcast %138 : vector<17x1xf32> to vector<17x32xf32>
    %140 = arith.mulf %130, %139 : vector<17x32xf32>
    %141 = vector.broadcast %122 : vector<1x32xf32> to vector<17x32xf32>
    %142 = arith.mulf %140, %141 : vector<17x32xf32>
    %143 = vector.broadcast %124 : vector<1x32xf32> to vector<17x32xf32>
    %144 = arith.addf %142, %143 : vector<17x32xf32>
    %c0_71 = arith.constant 0 : index
    %c0_72 = arith.constant 0 : index
    %c0_73 = arith.constant 0 : index
    %145 = vector.load %arg14[%c0_71, %c0_72, %c0_73] : memref<2x32x64xf32, #tpu.memory_space<vmem>>, vector<1x32x64xf32>
    %146 = vector.shape_cast %145 : vector<1x32x64xf32> to vector<32x64xf32>
    %cst_74 = arith.constant dense<0.000000e+00> : vector<17x64xf32>
    %147 = tpu.matmul %144, %146, %cst_74 {dimension_numbers = #tpu.dot_dimension_numbers<[1], [0], [0], [1], [0, 0, 1, 1], [], []>} : vector<17x32xf32>, vector<32x64xf32>, vector<17x64xf32> -> vector<17x64xf32>
    %c0_75 = arith.constant 0 : index
    %c0_76 = arith.constant 0 : index
    %c0_77 = arith.constant 0 : index
    %148 = vector.load %arg15[%c0_75, %c0_76, %c0_77] : memref<2x1x64xf32, #tpu.memory_space<vmem>>, vector<1x1x64xf32>
    %149 = vector.shape_cast %148 : vector<1x1x64xf32> to vector<1x64xf32>
    %150 = vector.broadcast %149 : vector<1x64xf32> to vector<17x64xf32>
    %151 = arith.addf %147, %150 : vector<17x64xf32>
    %cst_78 = arith.constant 5.000000e-01 : f32
    %152 = vector.broadcast %cst_78 : f32 to vector<17x64xf32>
    %153 = arith.mulf %152, %151 : vector<17x64xf32>
    %cst_79 = arith.constant 4.471500e-02 : f32
    %154 = vector.broadcast %cst_79 : f32 to vector<17x64xf32>
    %155 = arith.mulf %154, %151 : vector<17x64xf32>
    %156 = arith.mulf %155, %151 : vector<17x64xf32>
    %157 = arith.mulf %156, %151 : vector<17x64xf32>
    %158 = arith.addf %151, %157 : vector<17x64xf32>
    %cst_80 = arith.constant 0.797884583 : f32
    %159 = vector.broadcast %cst_80 : f32 to vector<17x64xf32>
    %160 = arith.mulf %159, %158 : vector<17x64xf32>
    %161 = math.tanh %160 : vector<17x64xf32>
    %cst_81 = arith.constant 1.000000e+00 : f32
    %162 = vector.broadcast %cst_81 : f32 to vector<17x64xf32>
    %163 = arith.addf %162, %161 : vector<17x64xf32>
    %164 = arith.mulf %153, %163 : vector<17x64xf32>
    %c0_82 = arith.constant 0 : index
    %c0_83 = arith.constant 0 : index
    %c0_84 = arith.constant 0 : index
    %165 = vector.load %arg16[%c0_82, %c0_83, %c0_84] : memref<2x64x32xf32, #tpu.memory_space<vmem>>, vector<1x64x32xf32>
    %166 = vector.shape_cast %165 : vector<1x64x32xf32> to vector<64x32xf32>
    %cst_85 = arith.constant dense<0.000000e+00> : vector<17x32xf32>
    %167 = tpu.matmul %164, %166, %cst_85 {dimension_numbers = #tpu.dot_dimension_numbers<[1], [0], [0], [1], [0, 0, 1, 1], [], []>} : vector<17x64xf32>, vector<64x32xf32>, vector<17x32xf32> -> vector<17x32xf32>
    %c0_86 = arith.constant 0 : index
    %c0_87 = arith.constant 0 : index
    %c0_88 = arith.constant 0 : index
    %168 = vector.load %arg17[%c0_86, %c0_87, %c0_88] : memref<2x1x32xf32, #tpu.memory_space<vmem>>, vector<1x1x32xf32>
    %169 = vector.shape_cast %168 : vector<1x1x32xf32> to vector<1x32xf32>
    %170 = vector.broadcast %169 : vector<1x32xf32> to vector<17x32xf32>
    %171 = arith.addf %167, %170 : vector<17x32xf32>
    %172 = arith.addf %120, %171 : vector<17x32xf32>
    %173 = vector.extract_strided_slice %172 {offsets = [1, 0], sizes = [16, 32], strides = [1, 1]} : vector<17x32xf32> to vector<16x32xf32>
    %c0_89 = arith.constant 0 : index
    %c0_90 = arith.constant 0 : index
    %c0_91 = arith.constant 0 : index
    %174 = vector.load %arg22[%c0_89, %c0_90, %c0_91] : memref<1x16x32xf32, #tpu.memory_space<vmem>>, vector<1x16x32xf32>
    %175 = vector.shape_cast %174 : vector<1x16x32xf32> to vector<16x32xf32>
    %176 = vector.shape_cast %173 : vector<16x32xf32> to vector<1x16x32xf32>
    tpu.vector_store %arg22[%c0_89, %c0_90, %c0_91], %176 {strides = array<i32>} : memref<1x16x32xf32, #tpu.memory_space<vmem>>, vector<1x16x32xf32>,
    %c1_92 = arith.constant 1 : index
    %c0_93 = arith.constant 0 : index
    %c0_94 = arith.constant 0 : index
    %177 = vector.load %arg6[%c1_92, %c0_93, %c0_94] : memref<2x1x32xf32, #tpu.memory_space<vmem>>, vector<1x1x32xf32>
    %178 = vector.shape_cast %177 : vector<1x1x32xf32> to vector<1x32xf32>
    %c1_95 = arith.constant 1 : index
    %c0_96 = arith.constant 0 : index
    %c0_97 = arith.constant 0 : index
    %179 = vector.load %arg7[%c1_95, %c0_96, %c0_97] : memref<2x1x32xf32, #tpu.memory_space<vmem>>, vector<1x1x32xf32>
    %180 = vector.shape_cast %179 : vector<1x1x32xf32> to vector<1x32xf32>
    %cst_98 = arith.constant dense<0.000000e+00> : vector<17xf32>
    %181 = vector.multi_reduction <add>, %172, %cst_98 [1] : vector<17x32xf32> to vector<17xf32>
    %182 = vector.shape_cast %181 : vector<17xf32> to vector<17x1xf32>
    %cst_99 = arith.constant 3.200000e+01 : f32
    %183 = vector.broadcast %cst_99 : f32 to vector<17x1xf32>
    %184 = arith.divf %182, %183 : vector<17x1xf32>
    %185 = vector.broadcast %184 : vector<17x1xf32> to vector<17x32xf32>
    %186 = arith.subf %172, %185 : vector<17x32xf32>
    %187 = arith.mulf %186, %186 : vector<17x32xf32>
    %cst_100 = arith.constant dense<0.000000e+00> : vector<17xf32>
    %188 = vector.multi_reduction <add>, %187, %cst_100 [1] : vector<17x32xf32> to vector<17xf32>
    %189 = vector.shape_cast %188 : vector<17xf32> to vector<17x1xf32>
    %cst_101 = arith.constant 3.200000e+01 : f32
    %190 = vector.broadcast %cst_101 : f32 to vector<17x1xf32>
    %191 = arith.divf %189, %190 : vector<17x1xf32>
    %cst_102 = arith.constant 9.99999997E-7 : f32
    %192 = vector.broadcast %cst_102 : f32 to vector<17x1xf32>
    %193 = arith.addf %191, %192 : vector<17x1xf32>
    %194 = math.rsqrt %193 : vector<17x1xf32>
    %195 = vector.broadcast %194 : vector<17x1xf32> to vector<17x32xf32>
    %196 = arith.mulf %186, %195 : vector<17x32xf32>
    %197 = vector.broadcast %178 : vector<1x32xf32> to vector<17x32xf32>
    %198 = arith.mulf %196, %197 : vector<17x32xf32>
    %199 = vector.broadcast %180 : vector<1x32xf32> to vector<17x32xf32>
    %200 = arith.addf %198, %199 : vector<17x32xf32>
    %c1_103 = arith.constant 1 : index
    %c0_104 = arith.constant 0 : index
    %c0_105 = arith.constant 0 : index
    %201 = vector.load %arg8[%c1_103, %c0_104, %c0_105] : memref<2x32x96xf32, #tpu.memory_space<vmem>>, vector<1x32x96xf32>
    %202 = vector.shape_cast %201 : vector<1x32x96xf32> to vector<32x96xf32>
    %cst_106 = arith.constant dense<0.000000e+00> : vector<17x96xf32>
    %203 = tpu.matmul %200, %202, %cst_106 {dimension_numbers = #tpu.dot_dimension_numbers<[1], [0], [0], [1], [0, 0, 1, 1], [], []>} : vector<17x32xf32>, vector<32x96xf32>, vector<17x96xf32> -> vector<17x96xf32>
    %c1_107 = arith.constant 1 : index
    %c0_108 = arith.constant 0 : index
    %c0_109 = arith.constant 0 : index
    %204 = vector.load %arg9[%c1_107, %c0_108, %c0_109] : memref<2x1x96xf32, #tpu.memory_space<vmem>>, vector<1x1x96xf32>
    %205 = vector.shape_cast %204 : vector<1x1x96xf32> to vector<1x96xf32>
    %206 = vector.broadcast %205 : vector<1x96xf32> to vector<17x96xf32>
    %207 = arith.addf %203, %206 : vector<17x96xf32>
    %208 = vector.extract_strided_slice %207 {offsets = [1, 32], sizes = [16, 32], strides = [1, 1]} : vector<17x96xf32> to vector<16x32xf32>
    %c0_110 = arith.constant 0 : index
    %c0_111 = arith.constant 0 : index
    %c0_112 = arith.constant 0 : index
    %209 = vector.load %arg21[%c0_110, %c0_111, %c0_112] : memref<1x16x32xf32, #tpu.memory_space<vmem>>, vector<1x16x32xf32>
    %210 = vector.shape_cast %209 : vector<1x16x32xf32> to vector<16x32xf32>
    %211 = vector.shape_cast %208 : vector<16x32xf32> to vector<1x16x32xf32>
    tpu.vector_store %arg21[%c0_110, %c0_111, %c0_112], %211 {strides = array<i32>} : memref<1x16x32xf32, #tpu.memory_space<vmem>>, vector<1x16x32xf32>,
    %212 = vector.extract_strided_slice %207 {offsets = [0, 0], sizes = [17, 8], strides = [1, 1]} : vector<17x96xf32> to vector<17x8xf32>
    %213 = vector.extract_strided_slice %207 {offsets = [0, 32], sizes = [17, 8], strides = [1, 1]} : vector<17x96xf32> to vector<17x8xf32>
    %214 = vector.extract_strided_slice %207 {offsets = [0, 64], sizes = [17, 8], strides = [1, 1]} : vector<17x96xf32> to vector<17x8xf32>
    %cst_113 = arith.constant 0.353553385 : f32
    %215 = vector.broadcast %cst_113 : f32 to vector<17x8xf32>
    %216 = arith.mulf %212, %215 : vector<17x8xf32>
    %cst_114 = arith.constant dense<0.000000e+00> : vector<17x17xf32>
    %217 = tpu.matmul %216, %213, %cst_114 {dimension_numbers = #tpu.dot_dimension_numbers<[1], [1], [0], [0], [0, 0, 1, 0], [], []>} : vector<17x8xf32>, vector<17x8xf32>, vector<17x17xf32> -> vector<17x17xf32>
    %cst_115 = arith.constant dense<0xFF800000> : vector<17xf32>
    %218 = vector.multi_reduction <maximumf>, %217, %cst_115 [1] : vector<17x17xf32> to vector<17xf32>
    %219 = vector.shape_cast %218 : vector<17xf32> to vector<17x1xf32>
    %220 = vector.broadcast %219 : vector<17x1xf32> to vector<17x17xf32>
    %221 = arith.subf %217, %220 : vector<17x17xf32>
    %222 = math.exp %221 : vector<17x17xf32>
    %cst_116 = arith.constant dense<0.000000e+00> : vector<17xf32>
    %223 = vector.multi_reduction <add>, %222, %cst_116 [1] : vector<17x17xf32> to vector<17xf32>
    %224 = vector.shape_cast %223 : vector<17xf32> to vector<17x1xf32>
    %225 = tpu.reciprocal %224 {approx = true} : vector<17x1xf32> -> vector<17x1xf32>
    %226 = vector.broadcast %225 : vector<17x1xf32> to vector<17x17xf32>
    %227 = arith.mulf %222, %226 : vector<17x17xf32>
    %cst_117 = arith.constant dense<0.000000e+00> : vector<17x8xf32>
    %228 = tpu.matmul %227, %214, %cst_117 {dimension_numbers = #tpu.dot_dimension_numbers<[1], [0], [0], [1], [0, 0, 1, 1], [], []>} : vector<17x17xf32>, vector<17x8xf32>, vector<17x8xf32> -> vector<17x8xf32>
    %229 = vector.extract_strided_slice %207 {offsets = [0, 8], sizes = [17, 8], strides = [1, 1]} : vector<17x96xf32> to vector<17x8xf32>
    %230 = vector.extract_strided_slice %207 {offsets = [0, 40], sizes = [17, 8], strides = [1, 1]} : vector<17x96xf32> to vector<17x8xf32>
    %231 = vector.extract_strided_slice %207 {offsets = [0, 72], sizes = [17, 8], strides = [1, 1]} : vector<17x96xf32> to vector<17x8xf32>
    %cst_118 = arith.constant 0.353553385 : f32
    %232 = vector.broadcast %cst_118 : f32 to vector<17x8xf32>
    %233 = arith.mulf %229, %232 : vector<17x8xf32>
    %cst_119 = arith.constant dense<0.000000e+00> : vector<17x17xf32>
    %234 = tpu.matmul %233, %230, %cst_119 {dimension_numbers = #tpu.dot_dimension_numbers<[1], [1], [0], [0], [0, 0, 1, 0], [], []>} : vector<17x8xf32>, vector<17x8xf32>, vector<17x17xf32> -> vector<17x17xf32>
    %cst_120 = arith.constant dense<0xFF800000> : vector<17xf32>
    %235 = vector.multi_reduction <maximumf>, %234, %cst_120 [1] : vector<17x17xf32> to vector<17xf32>
    %236 = vector.shape_cast %235 : vector<17xf32> to vector<17x1xf32>
    %237 = vector.broadcast %236 : vector<17x1xf32> to vector<17x17xf32>
    %238 = arith.subf %234, %237 : vector<17x17xf32>
    %239 = math.exp %238 : vector<17x17xf32>
    %cst_121 = arith.constant dense<0.000000e+00> : vector<17xf32>
    %240 = vector.multi_reduction <add>, %239, %cst_121 [1] : vector<17x17xf32> to vector<17xf32>
    %241 = vector.shape_cast %240 : vector<17xf32> to vector<17x1xf32>
    %242 = tpu.reciprocal %241 {approx = true} : vector<17x1xf32> -> vector<17x1xf32>
    %243 = vector.broadcast %242 : vector<17x1xf32> to vector<17x17xf32>
    %244 = arith.mulf %239, %243 : vector<17x17xf32>
    %cst_122 = arith.constant dense<0.000000e+00> : vector<17x8xf32>
    %245 = tpu.matmul %244, %231, %cst_122 {dimension_numbers = #tpu.dot_dimension_numbers<[1], [0], [0], [1], [0, 0, 1, 1], [], []>} : vector<17x17xf32>, vector<17x8xf32>, vector<17x8xf32> -> vector<17x8xf32>
    %246 = vector.extract_strided_slice %207 {offsets = [0, 16], sizes = [17, 8], strides = [1, 1]} : vector<17x96xf32> to vector<17x8xf32>
    %247 = vector.extract_strided_slice %207 {offsets = [0, 48], sizes = [17, 8], strides = [1, 1]} : vector<17x96xf32> to vector<17x8xf32>
    %248 = vector.extract_strided_slice %207 {offsets = [0, 80], sizes = [17, 8], strides = [1, 1]} : vector<17x96xf32> to vector<17x8xf32>
    %cst_123 = arith.constant 0.353553385 : f32
    %249 = vector.broadcast %cst_123 : f32 to vector<17x8xf32>
    %250 = arith.mulf %246, %249 : vector<17x8xf32>
    %cst_124 = arith.constant dense<0.000000e+00> : vector<17x17xf32>
    %251 = tpu.matmul %250, %247, %cst_124 {dimension_numbers = #tpu.dot_dimension_numbers<[1], [1], [0], [0], [0, 0, 1, 0], [], []>} : vector<17x8xf32>, vector<17x8xf32>, vector<17x17xf32> -> vector<17x17xf32>
    %cst_125 = arith.constant dense<0xFF800000> : vector<17xf32>
    %252 = vector.multi_reduction <maximumf>, %251, %cst_125 [1] : vector<17x17xf32> to vector<17xf32>
    %253 = vector.shape_cast %252 : vector<17xf32> to vector<17x1xf32>
    %254 = vector.broadcast %253 : vector<17x1xf32> to vector<17x17xf32>
    %255 = arith.subf %251, %254 : vector<17x17xf32>
    %256 = math.exp %255 : vector<17x17xf32>
    %cst_126 = arith.constant dense<0.000000e+00> : vector<17xf32>
    %257 = vector.multi_reduction <add>, %256, %cst_126 [1] : vector<17x17xf32> to vector<17xf32>
    %258 = vector.shape_cast %257 : vector<17xf32> to vector<17x1xf32>
    %259 = tpu.reciprocal %258 {approx = true} : vector<17x1xf32> -> vector<17x1xf32>
    %260 = vector.broadcast %259 : vector<17x1xf32> to vector<17x17xf32>
    %261 = arith.mulf %256, %260 : vector<17x17xf32>
    %cst_127 = arith.constant dense<0.000000e+00> : vector<17x8xf32>
    %262 = tpu.matmul %261, %248, %cst_127 {dimension_numbers = #tpu.dot_dimension_numbers<[1], [0], [0], [1], [0, 0, 1, 1], [], []>} : vector<17x17xf32>, vector<17x8xf32>, vector<17x8xf32> -> vector<17x8xf32>
    %263 = vector.extract_strided_slice %207 {offsets = [0, 24], sizes = [17, 8], strides = [1, 1]} : vector<17x96xf32> to vector<17x8xf32>
    %264 = vector.extract_strided_slice %207 {offsets = [0, 56], sizes = [17, 8], strides = [1, 1]} : vector<17x96xf32> to vector<17x8xf32>
    %265 = vector.extract_strided_slice %207 {offsets = [0, 88], sizes = [17, 8], strides = [1, 1]} : vector<17x96xf32> to vector<17x8xf32>
    %cst_128 = arith.constant 0.353553385 : f32
    %266 = vector.broadcast %cst_128 : f32 to vector<17x8xf32>
    %267 = arith.mulf %263, %266 : vector<17x8xf32>
    %cst_129 = arith.constant dense<0.000000e+00> : vector<17x17xf32>
    %268 = tpu.matmul %267, %264, %cst_129 {dimension_numbers = #tpu.dot_dimension_numbers<[1], [1], [0], [0], [0, 0, 1, 0], [], []>} : vector<17x8xf32>, vector<17x8xf32>, vector<17x17xf32> -> vector<17x17xf32>
    %cst_130 = arith.constant dense<0xFF800000> : vector<17xf32>
    %269 = vector.multi_reduction <maximumf>, %268, %cst_130 [1] : vector<17x17xf32> to vector<17xf32>
    %270 = vector.shape_cast %269 : vector<17xf32> to vector<17x1xf32>
    %271 = vector.broadcast %270 : vector<17x1xf32> to vector<17x17xf32>
    %272 = arith.subf %268, %271 : vector<17x17xf32>
    %273 = math.exp %272 : vector<17x17xf32>
    %cst_131 = arith.constant dense<0.000000e+00> : vector<17xf32>
    %274 = vector.multi_reduction <add>, %273, %cst_131 [1] : vector<17x17xf32> to vector<17xf32>
    %275 = vector.shape_cast %274 : vector<17xf32> to vector<17x1xf32>
    %276 = tpu.reciprocal %275 {approx = true} : vector<17x1xf32> -> vector<17x1xf32>
    %277 = vector.broadcast %276 : vector<17x1xf32> to vector<17x17xf32>
    %278 = arith.mulf %273, %277 : vector<17x17xf32>
    %cst_132 = arith.constant dense<0.000000e+00> : vector<17x8xf32>
    %279 = tpu.matmul %278, %265, %cst_132 {dimension_numbers = #tpu.dot_dimension_numbers<[1], [0], [0], [1], [0, 0, 1, 1], [], []>} : vector<17x17xf32>, vector<17x8xf32>, vector<17x8xf32> -> vector<17x8xf32>
    %280 = tpu.concatenate %228, %245, %262, %279 in 1 : vector<17x8xf32>, vector<17x8xf32>, vector<17x8xf32>, vector<17x8xf32> -> vector<17x32xf32>
    %c1_133 = arith.constant 1 : index
    %c0_134 = arith.constant 0 : index
    %c0_135 = arith.constant 0 : index
    %281 = vector.load %arg10[%c1_133, %c0_134, %c0_135] : memref<2x32x32xf32, #tpu.memory_space<vmem>>, vector<1x32x32xf32>
    %282 = vector.shape_cast %281 : vector<1x32x32xf32> to vector<32x32xf32>
    %cst_136 = arith.constant dense<0.000000e+00> : vector<17x32xf32>
    %283 = tpu.matmul %280, %282, %cst_136 {dimension_numbers = #tpu.dot_dimension_numbers<[1], [0], [0], [1], [0, 0, 1, 1], [], []>} : vector<17x32xf32>, vector<32x32xf32>, vector<17x32xf32> -> vector<17x32xf32>
    %c1_137 = arith.constant 1 : index
    %c0_138 = arith.constant 0 : index
    %c0_139 = arith.constant 0 : index
    %284 = vector.load %arg11[%c1_137, %c0_138, %c0_139] : memref<2x1x32xf32, #tpu.memory_space<vmem>>, vector<1x1x32xf32>
    %285 = vector.shape_cast %284 : vector<1x1x32xf32> to vector<1x32xf32>
    %286 = vector.broadcast %285 : vector<1x32xf32> to vector<17x32xf32>
    %287 = arith.addf %283, %286 : vector<17x32xf32>
    %288 = arith.addf %172, %287 : vector<17x32xf32>
    %c1_140 = arith.constant 1 : index
    %c0_141 = arith.constant 0 : index
    %c0_142 = arith.constant 0 : index
    %289 = vector.load %arg12[%c1_140, %c0_141, %c0_142] : memref<2x1x32xf32, #tpu.memory_space<vmem>>, vector<1x1x32xf32>
    %290 = vector.shape_cast %289 : vector<1x1x32xf32> to vector<1x32xf32>
    %c1_143 = arith.constant 1 : index
    %c0_144 = arith.constant 0 : index
    %c0_145 = arith.constant 0 : index
    %291 = vector.load %arg13[%c1_143, %c0_144, %c0_145] : memref<2x1x32xf32, #tpu.memory_space<vmem>>, vector<1x1x32xf32>
    %292 = vector.shape_cast %291 : vector<1x1x32xf32> to vector<1x32xf32>
    %cst_146 = arith.constant dense<0.000000e+00> : vector<17xf32>
    %293 = vector.multi_reduction <add>, %288, %cst_146 [1] : vector<17x32xf32> to vector<17xf32>
    %294 = vector.shape_cast %293 : vector<17xf32> to vector<17x1xf32>
    %cst_147 = arith.constant 3.200000e+01 : f32
    %295 = vector.broadcast %cst_147 : f32 to vector<17x1xf32>
    %296 = arith.divf %294, %295 : vector<17x1xf32>
    %297 = vector.broadcast %296 : vector<17x1xf32> to vector<17x32xf32>
    %298 = arith.subf %288, %297 : vector<17x32xf32>
    %299 = arith.mulf %298, %298 : vector<17x32xf32>
    %cst_148 = arith.constant dense<0.000000e+00> : vector<17xf32>
    %300 = vector.multi_reduction <add>, %299, %cst_148 [1] : vector<17x32xf32> to vector<17xf32>
    %301 = vector.shape_cast %300 : vector<17xf32> to vector<17x1xf32>
    %cst_149 = arith.constant 3.200000e+01 : f32
    %302 = vector.broadcast %cst_149 : f32 to vector<17x1xf32>
    %303 = arith.divf %301, %302 : vector<17x1xf32>
    %cst_150 = arith.constant 9.99999997E-7 : f32
    %304 = vector.broadcast %cst_150 : f32 to vector<17x1xf32>
    %305 = arith.addf %303, %304 : vector<17x1xf32>
    %306 = math.rsqrt %305 : vector<17x1xf32>
    %307 = vector.broadcast %306 : vector<17x1xf32> to vector<17x32xf32>
    %308 = arith.mulf %298, %307 : vector<17x32xf32>
    %309 = vector.broadcast %290 : vector<1x32xf32> to vector<17x32xf32>
    %310 = arith.mulf %308, %309 : vector<17x32xf32>
    %311 = vector.broadcast %292 : vector<1x32xf32> to vector<17x32xf32>
    %312 = arith.addf %310, %311 : vector<17x32xf32>
    %c1_151 = arith.constant 1 : index
    %c0_152 = arith.constant 0 : index
    %c0_153 = arith.constant 0 : index
    %313 = vector.load %arg14[%c1_151, %c0_152, %c0_153] : memref<2x32x64xf32, #tpu.memory_space<vmem>>, vector<1x32x64xf32>
    %314 = vector.shape_cast %313 : vector<1x32x64xf32> to vector<32x64xf32>
    %cst_154 = arith.constant dense<0.000000e+00> : vector<17x64xf32>
    %315 = tpu.matmul %312, %314, %cst_154 {dimension_numbers = #tpu.dot_dimension_numbers<[1], [0], [0], [1], [0, 0, 1, 1], [], []>} : vector<17x32xf32>, vector<32x64xf32>, vector<17x64xf32> -> vector<17x64xf32>
    %c1_155 = arith.constant 1 : index
    %c0_156 = arith.constant 0 : index
    %c0_157 = arith.constant 0 : index
    %316 = vector.load %arg15[%c1_155, %c0_156, %c0_157] : memref<2x1x64xf32, #tpu.memory_space<vmem>>, vector<1x1x64xf32>
    %317 = vector.shape_cast %316 : vector<1x1x64xf32> to vector<1x64xf32>
    %318 = vector.broadcast %317 : vector<1x64xf32> to vector<17x64xf32>
    %319 = arith.addf %315, %318 : vector<17x64xf32>
    %cst_158 = arith.constant 5.000000e-01 : f32
    %320 = vector.broadcast %cst_158 : f32 to vector<17x64xf32>
    %321 = arith.mulf %320, %319 : vector<17x64xf32>
    %cst_159 = arith.constant 4.471500e-02 : f32
    %322 = vector.broadcast %cst_159 : f32 to vector<17x64xf32>
    %323 = arith.mulf %322, %319 : vector<17x64xf32>
    %324 = arith.mulf %323, %319 : vector<17x64xf32>
    %325 = arith.mulf %324, %319 : vector<17x64xf32>
    %326 = arith.addf %319, %325 : vector<17x64xf32>
    %cst_160 = arith.constant 0.797884583 : f32
    %327 = vector.broadcast %cst_160 : f32 to vector<17x64xf32>
    %328 = arith.mulf %327, %326 : vector<17x64xf32>
    %329 = math.tanh %328 : vector<17x64xf32>
    %cst_161 = arith.constant 1.000000e+00 : f32
    %330 = vector.broadcast %cst_161 : f32 to vector<17x64xf32>
    %331 = arith.addf %330, %329 : vector<17x64xf32>
    %332 = arith.mulf %321, %331 : vector<17x64xf32>
    %c1_162 = arith.constant 1 : index
    %c0_163 = arith.constant 0 : index
    %c0_164 = arith.constant 0 : index
    %333 = vector.load %arg16[%c1_162, %c0_163, %c0_164] : memref<2x64x32xf32, #tpu.memory_space<vmem>>, vector<1x64x32xf32>
    %334 = vector.shape_cast %333 : vector<1x64x32xf32> to vector<64x32xf32>
    %cst_165 = arith.constant dense<0.000000e+00> : vector<17x32xf32>
    %335 = tpu.matmul %332, %334, %cst_165 {dimension_numbers = #tpu.dot_dimension_numbers<[1], [0], [0], [1], [0, 0, 1, 1], [], []>} : vector<17x64xf32>, vector<64x32xf32>, vector<17x32xf32> -> vector<17x32xf32>
    %c1_166 = arith.constant 1 : index
    %c0_167 = arith.constant 0 : index
    %c0_168 = arith.constant 0 : index
    %336 = vector.load %arg17[%c1_166, %c0_167, %c0_168] : memref<2x1x32xf32, #tpu.memory_space<vmem>>, vector<1x1x32xf32>
    %337 = vector.shape_cast %336 : vector<1x1x32xf32> to vector<1x32xf32>
    %338 = vector.broadcast %337 : vector<1x32xf32> to vector<17x32xf32>
    %339 = arith.addf %335, %338 : vector<17x32xf32>
    %340 = arith.addf %288, %339 : vector<17x32xf32>
    %341 = vector.extract_strided_slice %340 {offsets = [1, 0], sizes = [16, 32], strides = [1, 1]} : vector<17x32xf32> to vector<16x32xf32>
    %c0_169 = arith.constant 0 : index
    %c0_170 = arith.constant 0 : index
    %342 = vector.load %arg18[%c0_169, %c0_170] : memref<1x32xf32, #tpu.memory_space<vmem>>, vector<1x32xf32>
    %c0_171 = arith.constant 0 : index
    %c0_172 = arith.constant 0 : index
    %343 = vector.load %arg19[%c0_171, %c0_172] : memref<1x32xf32, #tpu.memory_space<vmem>>, vector<1x32xf32>
    %cst_173 = arith.constant dense<0.000000e+00> : vector<16xf32>
    %344 = vector.multi_reduction <add>, %341, %cst_173 [1] : vector<16x32xf32> to vector<16xf32>
    %345 = vector.shape_cast %344 : vector<16xf32> to vector<16x1xf32>
    %cst_174 = arith.constant 3.200000e+01 : f32
    %346 = vector.broadcast %cst_174 : f32 to vector<16x1xf32>
    %347 = arith.divf %345, %346 : vector<16x1xf32>
    %348 = vector.broadcast %347 : vector<16x1xf32> to vector<16x32xf32>
    %349 = arith.subf %341, %348 : vector<16x32xf32>
    %350 = arith.mulf %349, %349 : vector<16x32xf32>
    %cst_175 = arith.constant dense<0.000000e+00> : vector<16xf32>
    %351 = vector.multi_reduction <add>, %350, %cst_175 [1] : vector<16x32xf32> to vector<16xf32>
    %352 = vector.shape_cast %351 : vector<16xf32> to vector<16x1xf32>
    %cst_176 = arith.constant 3.200000e+01 : f32
    %353 = vector.broadcast %cst_176 : f32 to vector<16x1xf32>
    %354 = arith.divf %352, %353 : vector<16x1xf32>
    %cst_177 = arith.constant 9.99999997E-7 : f32
    %355 = vector.broadcast %cst_177 : f32 to vector<16x1xf32>
    %356 = arith.addf %354, %355 : vector<16x1xf32>
    %357 = math.rsqrt %356 : vector<16x1xf32>
    %358 = vector.broadcast %357 : vector<16x1xf32> to vector<16x32xf32>
    %359 = arith.mulf %349, %358 : vector<16x32xf32>
    %360 = vector.broadcast %342 : vector<1x32xf32> to vector<16x32xf32>
    %361 = arith.mulf %359, %360 : vector<16x32xf32>
    %362 = vector.broadcast %343 : vector<1x32xf32> to vector<16x32xf32>
    %363 = arith.addf %361, %362 : vector<16x32xf32>
    %364 = arith.mulf %363, %363 : vector<16x32xf32>
    %cst_178 = arith.constant dense<0.000000e+00> : vector<16xf32>
    %365 = vector.multi_reduction <add>, %364, %cst_178 [1] : vector<16x32xf32> to vector<16xf32>
    %366 = vector.shape_cast %365 : vector<16xf32> to vector<16x1xf32>
    %367 = math.sqrt %366 : vector<16x1xf32>
    %cst_179 = arith.constant 9.99999996E-13 : f32
    %368 = vector.broadcast %cst_179 : f32 to vector<16x1xf32>
    %369 = arith.maximumf %367, %368 : vector<16x1xf32>
    %370 = vector.broadcast %369 : vector<16x1xf32> to vector<16x32xf32>
    %371 = arith.divf %363, %370 : vector<16x32xf32>
    %c0_180 = arith.constant 0 : index
    %c0_181 = arith.constant 0 : index
    %c0_182 = arith.constant 0 : index
    %372 = vector.load %arg20[%c0_180, %c0_181, %c0_182] : memref<1x16x32xf32, #tpu.memory_space<vmem>>, vector<1x16x32xf32>
    %373 = vector.shape_cast %372 : vector<1x16x32xf32> to vector<16x32xf32>
    %374 = vector.shape_cast %371 : vector<16x32xf32> to vector<1x16x32xf32>
    tpu.vector_store %arg20[%c0_180, %c0_181, %c0_182], %374 {strides = array<i32>} : memref<1x16x32xf32, #tpu.memory_space<vmem>>, vector<1x16x32xf32>,
    return
  }
  func.func @transform_0(%arg0: i32) -> (i32, i32, i32) {
    %c0_i32 = arith.constant 0 : i32
    %c0_i32_0 = arith.constant 0 : i32
    %c0_i32_1 = arith.constant 0 : i32
    return %arg0, %c0_i32, %c0_i32_0 : i32, i32, i32
  }
  func.func @transform_1(%arg0: i32) -> (i32, i32) {
    %c0_i32 = arith.constant 0 : i32
    %c0_i32_0 = arith.constant 0 : i32
    %c0_i32_1 = arith.constant 0 : i32
    return %c0_i32, %c0_i32_0 : i32, i32
  }
  func.func @transform_2(%arg0: i32) -> (i32, i32) {
    %c0_i32 = arith.constant 0 : i32
    %c0_i32_0 = arith.constant 0 : i32
    %c0_i32_1 = arith.constant 0 : i32
    return %c0_i32, %c0_i32_0 : i32, i32
  }
  func.func @transform_3(%arg0: i32) -> (i32, i32) {
    %c0_i32 = arith.constant 0 : i32
    %c0_i32_0 = arith.constant 0 : i32
    %c0_i32_1 = arith.constant 0 : i32
    return %c0_i32, %c0_i32_0 : i32, i32
  }
  func.func @transform_4(%arg0: i32) -> (i32, i32) {
    %c0_i32 = arith.constant 0 : i32
    %c0_i32_0 = arith.constant 0 : i32
    %c0_i32_1 = arith.constant 0 : i32
    return %c0_i32, %c0_i32_0 : i32, i32
  }
  func.func @transform_5(%arg0: i32) -> (i32, i32, i32) {
    %c0_i32 = arith.constant 0 : i32
    %c0_i32_0 = arith.constant 0 : i32
    %c0_i32_1 = arith.constant 0 : i32
    %c0_i32_2 = arith.constant 0 : i32
    return %c0_i32, %c0_i32_0, %c0_i32_1 : i32, i32, i32
  }
  func.func @transform_6(%arg0: i32) -> (i32, i32, i32) {
    %c0_i32 = arith.constant 0 : i32
    %c0_i32_0 = arith.constant 0 : i32
    %c0_i32_1 = arith.constant 0 : i32
    %c0_i32_2 = arith.constant 0 : i32
    return %c0_i32, %c0_i32_0, %c0_i32_1 : i32, i32, i32
  }
  func.func @transform_7(%arg0: i32) -> (i32, i32, i32) {
    %c0_i32 = arith.constant 0 : i32
    %c0_i32_0 = arith.constant 0 : i32
    %c0_i32_1 = arith.constant 0 : i32
    %c0_i32_2 = arith.constant 0 : i32
    return %c0_i32, %c0_i32_0, %c0_i32_1 : i32, i32, i32
  }
  func.func @transform_8(%arg0: i32) -> (i32, i32, i32) {
    %c0_i32 = arith.constant 0 : i32
    %c0_i32_0 = arith.constant 0 : i32
    %c0_i32_1 = arith.constant 0 : i32
    %c0_i32_2 = arith.constant 0 : i32
    return %c0_i32, %c0_i32_0, %c0_i32_1 : i32, i32, i32
  }
  func.func @transform_9(%arg0: i32) -> (i32, i32, i32) {
    %c0_i32 = arith.constant 0 : i32
    %c0_i32_0 = arith.constant 0 : i32
    %c0_i32_1 = arith.constant 0 : i32
    %c0_i32_2 = arith.constant 0 : i32
    return %c0_i32, %c0_i32_0, %c0_i32_1 : i32, i32, i32
  }
  func.func @transform_10(%arg0: i32) -> (i32, i32, i32) {
    %c0_i32 = arith.constant 0 : i32
    %c0_i32_0 = arith.constant 0 : i32
    %c0_i32_1 = arith.constant 0 : i32
    %c0_i32_2 = arith.constant 0 : i32
    return %c0_i32, %c0_i32_0, %c0_i32_1 : i32, i32, i32
  }
  func.func @transform_11(%arg0: i32) -> (i32, i32, i32) {
    %c0_i32 = arith.constant 0 : i32
    %c0_i32_0 = arith.constant 0 : i32
    %c0_i32_1 = arith.constant 0 : i32
    %c0_i32_2 = arith.constant 0 : i32
    return %c0_i32, %c0_i32_0, %c0_i32_1 : i32, i32, i32
  }
  func.func @transform_12(%arg0: i32) -> (i32, i32, i32) {
    %c0_i32 = arith.constant 0 : i32
    %c0_i32_0 = arith.constant 0 : i32
    %c0_i32_1 = arith.constant 0 : i32
    %c0_i32_2 = arith.constant 0 : i32
    return %c0_i32, %c0_i32_0, %c0_i32_1 : i32, i32, i32
  }
  func.func @transform_13(%arg0: i32) -> (i32, i32, i32) {
    %c0_i32 = arith.constant 0 : i32
    %c0_i32_0 = arith.constant 0 : i32
    %c0_i32_1 = arith.constant 0 : i32
    %c0_i32_2 = arith.constant 0 : i32
    return %c0_i32, %c0_i32_0, %c0_i32_1 : i32, i32, i32
  }
  func.func @transform_14(%arg0: i32) -> (i32, i32, i32) {
    %c0_i32 = arith.constant 0 : i32
    %c0_i32_0 = arith.constant 0 : i32
    %c0_i32_1 = arith.constant 0 : i32
    %c0_i32_2 = arith.constant 0 : i32
    return %c0_i32, %c0_i32_0, %c0_i32_1 : i32, i32, i32
  }
  func.func @transform_15(%arg0: i32) -> (i32, i32, i32) {
    %c0_i32 = arith.constant 0 : i32
    %c0_i32_0 = arith.constant 0 : i32
    %c0_i32_1 = arith.constant 0 : i32
    %c0_i32_2 = arith.constant 0 : i32
    return %c0_i32, %c0_i32_0, %c0_i32_1 : i32, i32, i32
  }
  func.func @transform_16(%arg0: i32) -> (i32, i32, i32) {
    %c0_i32 = arith.constant 0 : i32
    %c0_i32_0 = arith.constant 0 : i32
    %c0_i32_1 = arith.constant 0 : i32
    %c0_i32_2 = arith.constant 0 : i32
    return %c0_i32, %c0_i32_0, %c0_i32_1 : i32, i32, i32
  }
  func.func @transform_17(%arg0: i32) -> (i32, i32) {
    %c0_i32 = arith.constant 0 : i32
    %c0_i32_0 = arith.constant 0 : i32
    %c0_i32_1 = arith.constant 0 : i32
    return %c0_i32, %c0_i32_0 : i32, i32
  }
  func.func @transform_18(%arg0: i32) -> (i32, i32) {
    %c0_i32 = arith.constant 0 : i32
    %c0_i32_0 = arith.constant 0 : i32
    %c0_i32_1 = arith.constant 0 : i32
    return %c0_i32, %c0_i32_0 : i32, i32
  }
  func.func @transform_19(%arg0: i32) -> (i32, i32, i32) {
    %c0_i32 = arith.constant 0 : i32
    %c0_i32_0 = arith.constant 0 : i32
    %c0_i32_1 = arith.constant 0 : i32
    return %arg0, %c0_i32, %c0_i32_0 : i32, i32, i32
  }
  func.func @transform_20(%arg0: i32) -> (i32, i32, i32) {
    %c0_i32 = arith.constant 0 : i32
    %c0_i32_0 = arith.constant 0 : i32
    %c0_i32_1 = arith.constant 0 : i32
    return %arg0, %c0_i32, %c0_i32_0 : i32, i32, i32
  }
  func.func @transform_21(%arg0: i32) -> (i32, i32, i32) {
    %c0_i32 = arith.constant 0 : i32
    %c0_i32_0 = arith.constant 0 : i32
    %c0_i32_1 = arith.constant 0 : i32
    return %arg0, %c0_i32, %c0_i32_0 : i32, i32, i32
  }
}

</mosaic_0001>

<llo_original>
// kernel: vit_forward.1
$region0: #{vit_forward.1}
  #allocation0 [shape = 'u32[]', space=smem, size = 0x4, offset = 0x4, fixed_abs, tag = 'smem constant byte address 0x4 - core index']
  #allocation1 [shape = 'u32[144,128]{1,0:T(1,128)}', space=vmem, size = 0x12000, scoped, tag = 'internal scratch']
  #allocation2 [shape = 'f32[17,32]{1,0:T(8,128)}', space=vmem, size = 0x3000, scoped, tag = 'scratch operand']
  %s0 = inlined_call_operand.vmem [shape: f32[2,16,48], index: 0, kind: input, shape index: {}]
  %s1 = inlined_call_operand.vmem [shape: f32[48,32], index: 1, kind: input, shape index: {}]
  %s2 = inlined_call_operand.vmem [shape: f32[1,32], index: 2, kind: input, shape index: {}]
  %s3 = inlined_call_operand.vmem [shape: f32[16,32], index: 3, kind: input, shape index: {}]
  %s4 = inlined_call_operand.vmem [shape: f32[1,32], index: 4, kind: input, shape index: {}]
  %s5 = inlined_call_operand.vmem [shape: f32[2,1,32], index: 5, kind: input, shape index: {}]
  %s6 = inlined_call_operand.vmem [shape: f32[2,1,32], index: 6, kind: input, shape index: {}]
  %s7 = inlined_call_operand.vmem [shape: f32[2,32,96], index: 7, kind: input, shape index: {}]
  %s8 = inlined_call_operand.vmem [shape: f32[2,1,96], index: 8, kind: input, shape index: {}]
  %s9 = inlined_call_operand.vmem [shape: f32[2,32,32], index: 9, kind: input, shape index: {}]
  %s10 = inlined_call_operand.vmem [shape: f32[2,1,32], index: 10, kind: input, shape index: {}]
  %s11 = inlined_call_operand.vmem [shape: f32[2,1,32], index: 11, kind: input, shape index: {}]
  %s12 = inlined_call_operand.vmem [shape: f32[2,1,32], index: 12, kind: input, shape index: {}]
  %s13 = inlined_call_operand.vmem [shape: f32[2,32,64], index: 13, kind: input, shape index: {}]
  %s14 = inlined_call_operand.vmem [shape: f32[2,1,64], index: 14, kind: input, shape index: {}]
  %s15 = inlined_call_operand.vmem [shape: f32[2,64,32], index: 15, kind: input, shape index: {}]
  %s16 = inlined_call_operand.vmem [shape: f32[2,1,32], index: 16, kind: input, shape index: {}]
  %s17 = inlined_call_operand.vmem [shape: f32[1,32], index: 17, kind: input, shape index: {}]
  %s18 = inlined_call_operand.vmem [shape: f32[1,32], index: 18, kind: input, shape index: {}]
  %s19 = inlined_call_operand.hbm [shape: f32[2,16,32], index: 19, kind: output, shape index: {0}]
  %s20 = inlined_call_operand.vmem [shape: f32[2,16,32], index: 20, kind: output, shape index: {1}]
  %s21 = inlined_call_operand.hbm [shape: f32[2,16,32], index: 21, kind: output, shape index: {2}]
  %22 = xla_tuple %s19, %s20, %s21
  %s23 = sld [smem:[#allocation0]]
  $region125: #{vit_forward.1} parent=0
    _
  %s25 = ssub.s32 1, %s23
  %s26 = scalar_select 0, %s25, %s23
  $region1: #{vit_forward.1} parent=0
    #allocation3 [shape = 'u8[16384]{0}', space=vmem, size = 0x4000, scoped, tag = 'output window, operand 0']
    #allocation4 [shape = 's32[2]{0}', space=sflag, size = 0x8, scoped, tag = 'scoped memory for vit_forward.1']
    #allocation5 [shape = 'u8[16384]{0}', space=vmem, size = 0x4000, scoped, tag = 'output window, operand 2']
    #allocation6 [shape = 's32[2]{0}', space=sflag, size = 0x8, scoped, tag = 'scoped memory for vit_forward.1']
    %27 = vsyncpa [#allocation4], 0
    %s28 = scalar_lea.sflag [#allocation4], 1
    %29 = vsyncpa %s28, 0
    %30 = vsyncpa [#allocation6], 0
    %s31 = scalar_lea.sflag [#allocation6], 1
    %32 = vsyncpa %s31, 0
    loop: start=0, step=1, limit=4
    $region2: #{vit_forward.1} parent=1 // loop_pre_header
      _
    $region3: #{vit_forward.1} parent=1 // loop_header
      %s34 = sphi 0, %s38
      %p35 = scmp.ge.s32.totalorder %s34, 4
      %s44 = sphi 0, %s46
      %s47 = sphi 0, %s44
      %s48 = sphi 0, %s47
      %s64 = sphi 0, %s48
      %s68 = sphi 0, %s68
      %s70 = sphi 0, %s68
      %s71 = sphi 0, %s70
      %s85 = sphi 0, %s71
      %s89 = sphi 0, %s89
      %s91 = sphi 0, %s89
      %s92 = sphi 0, %s91
      %s106 = sphi 0, %s92
      %s110 = sphi 0, %s110
      %s112 = sphi 0, %s110
      %s113 = sphi 0, %s112
      %s127 = sphi 0, %s113
      %s131 = sphi 0, %s131
      %s133 = sphi 0, %s131
      %s134 = sphi 0, %s133
      %s148 = sphi 0, %s134
      %s152 = sphi 0, %s152
      %s154 = sphi 0, %s152
      %s155 = sphi 0, %s154
      %s169 = sphi 0, %s155
      %s173 = sphi 0, %s173
      %s175 = sphi 0, %s173
      %s176 = sphi 0, %s175
      %s190 = sphi 0, %s176
      %s194 = sphi 0, %s194
      %s196 = sphi 0, %s194
      %s197 = sphi 0, %s196
      %s211 = sphi 0, %s197
      %s215 = sphi 0, %s215
      %s217 = sphi 0, %s215
      %s218 = sphi 0, %s217
      %s232 = sphi 0, %s218
      %s236 = sphi 0, %s236
      %s238 = sphi 0, %s236
      %s239 = sphi 0, %s238
      %s253 = sphi 0, %s239
      %s257 = sphi 0, %s257
      %s259 = sphi 0, %s257
      %s260 = sphi 0, %s259
      %s274 = sphi 0, %s260
      %s278 = sphi 0, %s278
      %s280 = sphi 0, %s278
      %s281 = sphi 0, %s280
      %s295 = sphi 0, %s281
      %s299 = sphi 0, %s299
      %s301 = sphi 0, %s299
      %s302 = sphi 0, %s301
      %s316 = sphi 0, %s302
      %s320 = sphi 0, %s320
      %s322 = sphi 0, %s320
      %s323 = sphi 0, %s322
      %s337 = sphi 0, %s323
      %s341 = sphi 0, %s341
      %s343 = sphi 0, %s341
      %s344 = sphi 0, %s343
      %s358 = sphi 0, %s344
      %s362 = sphi 0, %s362
      %s364 = sphi 0, %s362
      %s365 = sphi 0, %s364
      %s379 = sphi 0, %s365
      %s383 = sphi 0, %s383
      %s385 = sphi 0, %s383
      %s386 = sphi 0, %s385
      %s400 = sphi 0, %s386
      %s404 = sphi 0, %s404
      %s406 = sphi 0, %s404
      %s407 = sphi 0, %s406
      %s421 = sphi 0, %s407
      %s425 = sphi 0, %s425
      %s427 = sphi 0, %s425
      %s428 = sphi 0, %s427
      %s442 = sphi 0, %s428
      %s448 = sphi 0, %s450
      %s451 = sphi 0, %s448
      %s452 = sphi 0, %s451
      %s468 = sphi 0, %s452
      %s474 = sphi 0, %s476
      %s477 = sphi 0, %s474
      %s478 = sphi 0, %s477
      %s494 = sphi 0, %s478
      %s500 = sphi 0, %s502
      %s503 = sphi 0, %s500
      %s504 = sphi 0, %s503
      %s520 = sphi 0, %s504
    $region4: #{vit_forward.1} parent=1 // loop_header_branch
      %37 = sbr.rel (%p35) target = $region8
    $region5: #{vit_forward.1} parent=1 // loop_body
      %s39 = ssub.s32 %s34, 1
      %s40 = ssub.s32 %s34, 2
      %s41 = sadd.s32 %s34, 1
      %s42 = ssub.s32 %s34, %s41
      %p43 = scmp.eq.s32.totalorder %s42, 0
      %s45 = sadd.s32 %s44, 1
      %s46 = scalar_select %p43, %s44, %s45
      %p49 = pneg %p43
      %p50 = scmp.eq.s32.totalorder %s34, 1
      %p51 = por %p49, %p50
      %p52 = scmp.ne.s32.totalorder %s44, %s47
      %p53 = scmp.eq.s32.totalorder %s34, 0
      %p54 = por %p52, %p53
      %p55 = scmp.ne.s32.totalorder %s44, %s47
      %p56 = scmp.eq.s32.totalorder %s39, 1
      %p57 = por %p55, %p56
      %p58 = scmp.ne.s32.totalorder %s47, %s48
      %p59 = scmp.eq.s32.totalorder %s39, 0
      %p60 = por %p58, %p59
      %p61 = scmp.ne.s32.totalorder %s47, %s48
      %p62 = scmp.eq.s32.totalorder %s40, 1
      %p63 = por %p61, %p62
      %p65 = scmp.ne.s32.totalorder %s48, %s64
      %p66 = scmp.eq.s32.totalorder %s40, 0
      %p67 = por %p65, %p66
      %s69 = sadd.s32 %s68, 1
      %p72 = scmp.eq.s32.totalorder %s34, 1
      %p73 = scmp.ne.s32.totalorder %s68, %s70
      %p74 = scmp.eq.s32.totalorder %s34, 0
      %p75 = por %p73, %p74
      %p76 = scmp.ne.s32.totalorder %s68, %s70
      %p77 = scmp.eq.s32.totalorder %s39, 1
      %p78 = por %p76, %p77
      %p79 = scmp.ne.s32.totalorder %s70, %s71
      %p80 = scmp.eq.s32.totalorder %s39, 0
      %p81 = por %p79, %p80
      %p82 = scmp.ne.s32.totalorder %s70, %s71
      %p83 = scmp.eq.s32.totalorder %s40, 1
      %p84 = por %p82, %p83
      %p86 = scmp.ne.s32.totalorder %s71, %s85
      %p87 = scmp.eq.s32.totalorder %s40, 0
      %p88 = por %p86, %p87
      %s90 = sadd.s32 %s89, 1
      %p93 = scmp.eq.s32.totalorder %s34, 1
      %p94 = scmp.ne.s32.totalorder %s89, %s91
      %p95 = scmp.eq.s32.totalorder %s34, 0
      %p96 = por %p94, %p95
      %p97 = scmp.ne.s32.totalorder %s89, %s91
      %p98 = scmp.eq.s32.totalorder %s39, 1
      %p99 = por %p97, %p98
      %p100 = scmp.ne.s32.totalorder %s91, %s92
      %p101 = scmp.eq.s32.totalorder %s39, 0
      %p102 = por %p100, %p101
      %p103 = scmp.ne.s32.totalorder %s91, %s92
      %p104 = scmp.eq.s32.totalorder %s40, 1
      %p105 = por %p103, %p104
      %p107 = scmp.ne.s32.totalorder %s92, %s106
      %p108 = scmp.eq.s32.totalorder %s40, 0
      %p109 = por %p107, %p108
      %s111 = sadd.s32 %s110, 1
      %p114 = scmp.eq.s32.totalorder %s34, 1
      %p115 = scmp.ne.s32.totalorder %s110, %s112
      %p116 = scmp.eq.s32.totalorder %s34, 0
      %p117 = por %p115, %p116
      %p118 = scmp.ne.s32.totalorder %s110, %s112
      %p119 = scmp.eq.s32.totalorder %s39, 1
      %p120 = por %p118, %p119
      %p121 = scmp.ne.s32.totalorder %s112, %s113
      %p122 = scmp.eq.s32.totalorder %s39, 0
      %p123 = por %p121, %p122
      %p124 = scmp.ne.s32.totalorder %s112, %s113
      %p125 = scmp.eq.s32.totalorder %s40, 1
      %p126 = por %p124, %p125
      %p128 = scmp.ne.s32.totalorder %s113, %s127
      %p129 = scmp.eq.s32.totalorder %s40, 0
      %p130 = por %p128, %p129
      %s132 = sadd.s32 %s131, 1
      %p135 = scmp.eq.s32.totalorder %s34, 1
      %p136 = scmp.ne.s32.totalorder %s131, %s133
      %p137 = scmp.eq.s32.totalorder %s34, 0
      %p138 = por %p136, %p137
      %p139 = scmp.ne.s32.totalorder %s131, %s133
      %p140 = scmp.eq.s32.totalorder %s39, 1
      %p141 = por %p139, %p140
      %p142 = scmp.ne.s32.totalorder %s133, %s134
      %p143 = scmp.eq.s32.totalorder %s39, 0
      %p144 = por %p142, %p143
      %p145 = scmp.ne.s32.totalorder %s133, %s134
      %p146 = scmp.eq.s32.totalorder %s40, 1
      %p147 = por %p145, %p146
      %p149 = scmp.ne.s32.totalorder %s134, %s148
      %p150 = scmp.eq.s32.totalorder %s40, 0
      %p151 = por %p149, %p150
      %s153 = sadd.s32 %s152, 1
      %p156 = scmp.eq.s32.totalorder %s34, 1
      %p157 = scmp.ne.s32.totalorder %s152, %s154
      %p158 = scmp.eq.s32.totalorder %s34, 0
      %p159 = por %p157, %p158
      %p160 = scmp.ne.s32.totalorder %s152, %s154
      %p161 = scmp.eq.s32.totalorder %s39, 1
      %p162 = por %p160, %p161
      %p163 = scmp.ne.s32.totalorder %s154, %s155
      %p164 = scmp.eq.s32.totalorder %s39, 0
      %p165 = por %p163, %p164
      %p166 = scmp.ne.s32.totalorder %s154, %s155
      %p167 = scmp.eq.s32.totalorder %s40, 1
      %p168 = por %p166, %p167
      %p170 = scmp.ne.s32.totalorder %s155, %s169
      %p171 = scmp.eq.s32.totalorder %s40, 0
      %p172 = por %p170, %p171
      %s174 = sadd.s32 %s173, 1
      %p177 = scmp.eq.s32.totalorder %s34, 1
      %p178 = scmp.ne.s32.totalorder %s173, %s175
      %p179 = scmp.eq.s32.totalorder %s34, 0
      %p180 = por %p178, %p179
      %p181 = scmp.ne.s32.totalorder %s173, %s175
      %p182 = scmp.eq.s32.totalorder %s39, 1
      %p183 = por %p181, %p182
      %p184 = scmp.ne.s32.totalorder %s175, %s176
      %p185 = scmp.eq.s32.totalorder %s39, 0
      %p186 = por %p184, %p185
      %p187 = scmp.ne.s32.totalorder %s175, %s176
      %p188 = scmp.eq.s32.totalorder %s40, 1
      %p189 = por %p187, %p188
      %p191 = scmp.ne.s32.totalorder %s176, %s190
      %p192 = scmp.eq.s32.totalorder %s40, 0
      %p193 = por %p191, %p192
      %s195 = sadd.s32 %s194, 1
      %p198 = scmp.eq.s32.totalorder %s34, 1
      %p199 = scmp.ne.s32.totalorder %s194, %s196
      %p200 = scmp.eq.s32.totalorder %s34, 0
      %p201 = por %p199, %p200
      %p202 = scmp.ne.s32.totalorder %s194, %s196
      %p203 = scmp.eq.s32.totalorder %s39, 1
      %p204 = por %p202, %p203
      %p205 = scmp.ne.s32.totalorder %s196, %s197
      %p206 = scmp.eq.s32.totalorder %s39, 0
      %p207 = por %p205, %p206
      %p208 = scmp.ne.s32.totalorder %s196, %s197
      %p209 = scmp.eq.s32.totalorder %s40, 1
      %p210 = por %p208, %p209
      %p212 = scmp.ne.s32.totalorder %s197, %s211
      %p213 = scmp.eq.s32.totalorder %s40, 0
      %p214 = por %p212, %p213
      %s216 = sadd.s32 %s215, 1
      %p219 = scmp.eq.s32.totalorder %s34, 1
      %p220 = scmp.ne.s32.totalorder %s215, %s217
      %p221 = scmp.eq.s32.totalorder %s34, 0
      %p222 = por %p220, %p221
      %p223 = scmp.ne.s32.totalorder %s215, %s217
      %p224 = scmp.eq.s32.totalorder %s39, 1
      %p225 = por %p223, %p224
      %p226 = scmp.ne.s32.totalorder %s217, %s218
      %p227 = scmp.eq.s32.totalorder %s39, 0
      %p228 = por %p226, %p227
      %p229 = scmp.ne.s32.totalorder %s217, %s218
      %p230 = scmp.eq.s32.totalorder %s40, 1
      %p231 = por %p229, %p230
      %p233 = scmp.ne.s32.totalorder %s218, %s232
      %p234 = scmp.eq.s32.totalorder %s40, 0
      %p235 = por %p233, %p234
      %s237 = sadd.s32 %s236, 1
      %p240 = scmp.eq.s32.totalorder %s34, 1
      %p241 = scmp.ne.s32.totalorder %s236, %s238
      %p242 = scmp.eq.s32.totalorder %s34, 0
      %p243 = por %p241, %p242
      %p244 = scmp.ne.s32.totalorder %s236, %s238
      %p245 = scmp.eq.s32.totalorder %s39, 1
      %p246 = por %p244, %p245
      %p247 = scmp.ne.s32.totalorder %s238, %s239
      %p248 = scmp.eq.s32.totalorder %s39, 0
      %p249 = por %p247, %p248
      %p250 = scmp.ne.s32.totalorder %s238, %s239
      %p251 = scmp.eq.s32.totalorder %s40, 1
      %p252 = por %p250, %p251
      %p254 = scmp.ne.s32.totalorder %s239, %s253
      %p255 = scmp.eq.s32.totalorder %s40, 0
      %p256 = por %p254, %p255
      %s258 = sadd.s32 %s257, 1
      %p261 = scmp.eq.s32.totalorder %s34, 1
      %p262 = scmp.ne.s32.totalorder %s257, %s259
      %p263 = scmp.eq.s32.totalorder %s34, 0
      %p264 = por %p262, %p263
      %p265 = scmp.ne.s32.totalorder %s257, %s259
      %p266 = scmp.eq.s32.totalorder %s39, 1
      %p267 = por %p265, %p266
      %p268 = scmp.ne.s32.totalorder %s259, %s260
      %p269 = scmp.eq.s32.totalorder %s39, 0
      %p270 = por %p268, %p269
      %p271 = scmp.ne.s32.totalorder %s259, %s260
      %p272 = scmp.eq.s32.totalorder %s40, 1
      %p273 = por %p271, %p272
      %p275 = scmp.ne.s32.totalorder %s260, %s274
      %p276 = scmp.eq.s32.totalorder %s40, 0
      %p277 = por %p275, %p276
      %s279 = sadd.s32 %s278, 1
      %p282 = scmp.eq.s32.totalorder %s34, 1
      %p283 = scmp.ne.s32.totalorder %s278, %s280
      %p284 = scmp.eq.s32.totalorder %s34, 0
      %p285 = por %p283, %p284
      %p286 = scmp.ne.s32.totalorder %s278, %s280
      %p287 = scmp.eq.s32.totalorder %s39, 1
      %p288 = por %p286, %p287
      %p289 = scmp.ne.s32.totalorder %s280, %s281
      %p290 = scmp.eq.s32.totalorder %s39, 0
      %p291 = por %p289, %p290
      %p292 = scmp.ne.s32.totalorder %s280, %s281
      %p293 = scmp.eq.s32.totalorder %s40, 1
      %p294 = por %p292, %p293
      %p296 = scmp.ne.s32.totalorder %s281, %s295
      %p297 = scmp.eq.s32.totalorder %s40, 0
      %p298 = por %p296, %p297
      %s300 = sadd.s32 %s299, 1
      %p303 = scmp.eq.s32.totalorder %s34, 1
      %p304 = scmp.ne.s32.totalorder %s299, %s301
      %p305 = scmp.eq.s32.totalorder %s34, 0
      %p306 = por %p304, %p305
      %p307 = scmp.ne.s32.totalorder %s299, %s301
      %p308 = scmp.eq.s32.totalorder %s39, 1
      %p309 = por %p307, %p308
      %p310 = scmp.ne.s32.totalorder %s301, %s302
      %p311 = scmp.eq.s32.totalorder %s39, 0
      %p312 = por %p310, %p311
      %p313 = scmp.ne.s32.totalorder %s301, %s302
      %p314 = scmp.eq.s32.totalorder %s40, 1
      %p315 = por %p313, %p314
      %p317 = scmp.ne.s32.totalorder %s302, %s316
      %p318 = scmp.eq.s32.totalorder %s40, 0
      %p319 = por %p317, %p318
      %s321 = sadd.s32 %s320, 1
      %p324 = scmp.eq.s32.totalorder %s34, 1
      %p325 = scmp.ne.s32.totalorder %s320, %s322
      %p326 = scmp.eq.s32.totalorder %s34, 0
      %p327 = por %p325, %p326
      %p328 = scmp.ne.s32.totalorder %s320, %s322
      %p329 = scmp.eq.s32.totalorder %s39, 1
      %p330 = por %p328, %p329
      %p331 = scmp.ne.s32.totalorder %s322, %s323
      %p332 = scmp.eq.s32.totalorder %s39, 0
      %p333 = por %p331, %p332
      %p334 = scmp.ne.s32.totalorder %s322, %s323
      %p335 = scmp.eq.s32.totalorder %s40, 1
      %p336 = por %p334, %p335
      %p338 = scmp.ne.s32.totalorder %s323, %s337
      %p339 = scmp.eq.s32.totalorder %s40, 0
      %p340 = por %p338, %p339
      %s342 = sadd.s32 %s341, 1
      %p345 = scmp.eq.s32.totalorder %s34, 1
      %p346 = scmp.ne.s32.totalorder %s341, %s343
      %p347 = scmp.eq.s32.totalorder %s34, 0
      %p348 = por %p346, %p347
      %p349 = scmp.ne.s32.totalorder %s341, %s343
      %p350 = scmp.eq.s32.totalorder %s39, 1
      %p351 = por %p349, %p350
      %p352 = scmp.ne.s32.totalorder %s343, %s344
      %p353 = scmp.eq.s32.totalorder %s39, 0
      %p354 = por %p352, %p353
      %p355 = scmp.ne.s32.totalorder %s343, %s344
      %p356 = scmp.eq.s32.totalorder %s40, 1
      %p357 = por %p355, %p356
      %p359 = scmp.ne.s32.totalorder %s344, %s358
      %p360 = scmp.eq.s32.totalorder %s40, 0
      %p361 = por %p359, %p360
      %s363 = sadd.s32 %s362, 1
      %p366 = scmp.eq.s32.totalorder %s34, 1
      %p367 = scmp.ne.s32.totalorder %s362, %s364
      %p368 = scmp.eq.s32.totalorder %s34, 0
      %p369 = por %p367, %p368
      %p370 = scmp.ne.s32.totalorder %s362, %s364
      %p371 = scmp.eq.s32.totalorder %s39, 1
      %p372 = por %p370, %p371
      %p373 = scmp.ne.s32.totalorder %s364, %s365
      %p374 = scmp.eq.s32.totalorder %s39, 0
      %p375 = por %p373, %p374
      %p376 = scmp.ne.s32.totalorder %s364, %s365
      %p377 = scmp.eq.s32.totalorder %s40, 1
      %p378 = por %p376, %p377
      %p380 = scmp.ne.s32.totalorder %s365, %s379
      %p381 = scmp.eq.s32.totalorder %s40, 0
      %p382 = por %p380, %p381
      %s384 = sadd.s32 %s383, 1
      %p387 = scmp.eq.s32.totalorder %s34, 1
      %p388 = scmp.ne.s32.totalorder %s383, %s385
      %p389 = scmp.eq.s32.totalorder %s34, 0
      %p390 = por %p388, %p389
      %p391 = scmp.ne.s32.totalorder %s383, %s385
      %p392 = scmp.eq.s32.totalorder %s39, 1
      %p393 = por %p391, %p392
      %p394 = scmp.ne.s32.totalorder %s385, %s386
      %p395 = scmp.eq.s32.totalorder %s39, 0
      %p396 = por %p394, %p395
      %p397 = scmp.ne.s32.totalorder %s385, %s386
      %p398 = scmp.eq.s32.totalorder %s40, 1
      %p399 = por %p397, %p398
      %p401 = scmp.ne.s32.totalorder %s386, %s400
      %p402 = scmp.eq.s32.totalorder %s40, 0
      %p403 = por %p401, %p402
      %s405 = sadd.s32 %s404, 1
      %p408 = scmp.eq.s32.totalorder %s34, 1
      %p409 = scmp.ne.s32.totalorder %s404, %s406
      %p410 = scmp.eq.s32.totalorder %s34, 0
      %p411 = por %p409, %p410
      %p412 = scmp.ne.s32.totalorder %s404, %s406
      %p413 = scmp.eq.s32.totalorder %s39, 1
      %p414 = por %p412, %p413
      %p415 = scmp.ne.s32.totalorder %s406, %s407
      %p416 = scmp.eq.s32.totalorder %s39, 0
      %p417 = por %p415, %p416
      %p418 = scmp.ne.s32.totalorder %s406, %s407
      %p419 = scmp.eq.s32.totalorder %s40, 1
      %p420 = por %p418, %p419
      %p422 = scmp.ne.s32.totalorder %s407, %s421
      %p423 = scmp.eq.s32.totalorder %s40, 0
      %p424 = por %p422, %p423
      %s426 = sadd.s32 %s425, 1
      %p429 = scmp.eq.s32.totalorder %s34, 1
      %p430 = scmp.ne.s32.totalorder %s425, %s427
      %p431 = scmp.eq.s32.totalorder %s34, 0
      %p432 = por %p430, %p431
      %p433 = scmp.ne.s32.totalorder %s425, %s427
      %p434 = scmp.eq.s32.totalorder %s39, 1
      %p435 = por %p433, %p434
      %p436 = scmp.ne.s32.totalorder %s427, %s428
      %p437 = scmp.eq.s32.totalorder %s39, 0
      %p438 = por %p436, %p437
      %p439 = scmp.ne.s32.totalorder %s427, %s428
      %p440 = scmp.eq.s32.totalorder %s40, 1
      %p441 = por %p439, %p440
      %p443 = scmp.ne.s32.totalorder %s428, %s442
      %p444 = scmp.eq.s32.totalorder %s40, 0
      %p445 = por %p443, %p444
      %s446 = ssub.s32 %s34, %s41
      %p447 = scmp.eq.s32.totalorder %s446, 0
      %s449 = sadd.s32 %s448, 1
      %s450 = scalar_select %p447, %s448, %s449
      %p453 = pneg %p447
      %p454 = scmp.eq.s32.totalorder %s34, 1
      %p455 = por %p453, %p454
      %p456 = scmp.ne.s32.totalorder %s448, %s451
      %p457 = scmp.eq.s32.totalorder %s34, 0
      %p458 = por %p456, %p457
      %p459 = scmp.ne.s32.totalorder %s448, %s451
      %p460 = scmp.eq.s32.totalorder %s39, 1
      %p461 = por %p459, %p460
      %p462 = scmp.ne.s32.totalorder %s451, %s452
      %p463 = scmp.eq.s32.totalorder %s39, 0
      %p464 = por %p462, %p463
      %p465 = scmp.ne.s32.totalorder %s451, %s452
      %p466 = scmp.eq.s32.totalorder %s40, 1
      %p467 = por %p465, %p466
      %p469 = scmp.ne.s32.totalorder %s452, %s468
      %p470 = scmp.eq.s32.totalorder %s40, 0
      %p471 = por %p469, %p470
      %s472 = ssub.s32 %s34, %s41
      %p473 = scmp.eq.s32.totalorder %s472, 0
      %s475 = sadd.s32 %s474, 1
      %s476 = scalar_select %p473, %s474, %s475
      %p479 = pneg %p473
      %p480 = scmp.eq.s32.totalorder %s34, 1
      %p481 = por %p479, %p480
      %p482 = scmp.ne.s32.totalorder %s474, %s477
      %p483 = scmp.eq.s32.totalorder %s34, 0
      %p484 = por %p482, %p483
      %p485 = scmp.ne.s32.totalorder %s474, %s477
      %p486 = scmp.eq.s32.totalorder %s39, 1
      %p487 = por %p485, %p486
      %p488 = scmp.ne.s32.totalorder %s477, %s478
      %p489 = scmp.eq.s32.totalorder %s39, 0
      %p490 = por %p488, %p489
      %p491 = scmp.ne.s32.totalorder %s477, %s478
      %p492 = scmp.eq.s32.totalorder %s40, 1
      %p493 = por %p491, %p492
      %p495 = scmp.ne.s32.totalorder %s478, %s494
      %p496 = scmp.eq.s32.totalorder %s40, 0
      %p497 = por %p495, %p496
      %s498 = ssub.s32 %s34, %s41
      %p499 = scmp.eq.s32.totalorder %s498, 0
      %s501 = sadd.s32 %s500, 1
      %s502 = scalar_select %p499, %s500, %s501
      %p505 = pneg %p499
      %p506 = scmp.eq.s32.totalorder %s34, 1
      %p507 = por %p505, %p506
      %p508 = scmp.ne.s32.totalorder %s500, %s503
      %p509 = scmp.eq.s32.totalorder %s34, 0
      %p510 = por %p508, %p509
      %p511 = scmp.ne.s32.totalorder %s500, %s503
      %p512 = scmp.eq.s32.totalorder %s39, 1
      %p513 = por %p511, %p512
      %p514 = scmp.ne.s32.totalorder %s503, %s504
      %p515 = scmp.eq.s32.totalorder %s39, 0
      %p516 = por %p514, %p515
      %p517 = scmp.ne.s32.totalorder %s503, %s504
      %p518 = scmp.eq.s32.totalorder %s40, 1
      %p519 = por %p517, %p518
      %p521 = scmp.ne.s32.totalorder %s504, %s520
      %p522 = scmp.eq.s32.totalorder %s40, 0
      %p523 = por %p521, %p522
      %p524 = scmp.le.s32.totalorder 1, %s34
      %p525 = scmp.lt.s32.totalorder %s34, 3
      %p526 = pnand %p524, %p525
      %p527 = pneg %p526
      // Predicated region
      $region9: #{vit_forward.1} parent=5 // pred_check
        _
      $region10: #{vit_forward.1} parent=5 // pred_check_branch
        %529 = sbr.rel (%p526) target = $region12
      $region11: #{vit_forward.1} parent=5 // pred_region
        %s530 = ssub.s32 %s34, 1
        // Predicated region
        $region13: #{vit_forward.1} parent=11 // pred_check
          %p531 = pneg %p81
        $region14: #{vit_forward.1} parent=11 // pred_check_branch
          %533 = sbr.rel (%p531) target = $region16
        $region15: #{vit_forward.1} parent=11 // pred_region
          _
        $region16: #{vit_forward.1} parent=11 // pred_fallthru
          _
        // Predicated region
        $region17: #{vit_forward.1} parent=11 // pred_check
          %p534 = pneg %p102
        $region18: #{vit_forward.1} parent=11 // pred_check_branch
          %536 = sbr.rel (%p534) target = $region20
        $region19: #{vit_forward.1} parent=11 // pred_region
          _
        $region20: #{vit_forward.1} parent=11 // pred_fallthru
          _
        // Predicated region
        $region21: #{vit_forward.1} parent=11 // pred_check
          %p537 = pneg %p123
        $region22: #{vit_forward.1} parent=11 // pred_check_branch
          %539 = sbr.rel (%p537) target = $region24
        $region23: #{vit_forward.1} parent=11 // pred_region
          _
        $region24: #{vit_forward.1} parent=11 // pred_fallthru
          _
        // Predicated region
        $region25: #{vit_forward.1} parent=11 // pred_check
          %p540 = pneg %p144
        $region26: #{vit_forward.1} parent=11 // pred_check_branch
          %542 = sbr.rel (%p540) target = $region28
        $region27: #{vit_forward.1} parent=11 // pred_region
          _
        $region28: #{vit_forward.1} parent=11 // pred_fallthru
          _
        // Predicated region
        $region29: #{vit_forward.1} parent=11 // pred_check
          %p543 = pneg %p165
        $region30: #{vit_forward.1} parent=11 // pred_check_branch
          %545 = sbr.rel (%p543) target = $region32
        $region31: #{vit_forward.1} parent=11 // pred_region
          _
        $region32: #{vit_forward.1} parent=11 // pred_fallthru
          _
        // Predicated region
        $region33: #{vit_forward.1} parent=11 // pred_check
          %p546 = pneg %p186
        $region34: #{vit_forward.1} parent=11 // pred_check_branch
          %548 = sbr.rel (%p546) target = $region36
        $region35: #{vit_forward.1} parent=11 // pred_region
          _
        $region36: #{vit_forward.1} parent=11 // pred_fallthru
          _
        // Predicated region
        $region37: #{vit_forward.1} parent=11 // pred_check
          %p549 = pneg %p207
        $region38: #{vit_forward.1} parent=11 // pred_check_branch
          %551 = sbr.rel (%p549) target = $region40
        $region39: #{vit_forward.1} parent=11 // pred_region
          _
        $region40: #{vit_forward.1} parent=11 // pred_fallthru
          _
        // Predicated region
        $region41: #{vit_forward.1} parent=11 // pred_check
          %p552 = pneg %p228
        $region42: #{vit_forward.1} parent=11 // pred_check_branch
          %554 = sbr.rel (%p552) target = $region44
        $region43: #{vit_forward.1} parent=11 // pred_region
          _
        $region44: #{vit_forward.1} parent=11 // pred_fallthru
          _
        // Predicated region
        $region45: #{vit_forward.1} parent=11 // pred_check
          %p555 = pneg %p249
        $region46: #{vit_forward.1} parent=11 // pred_check_branch
          %557 = sbr.rel (%p555) target = $region48
        $region47: #{vit_forward.1} parent=11 // pred_region
          _
        $region48: #{vit_forward.1} parent=11 // pred_fallthru
          _
        // Predicated region
        $region49: #{vit_forward.1} parent=11 // pred_check
          %p558 = pneg %p270
        $region50: #{vit_forward.1} parent=11 // pred_check_branch
          %560 = sbr.rel (%p558) target = $region52
        $region51: #{vit_forward.1} parent=11 // pred_region
          _
        $region52: #{vit_forward.1} parent=11 // pred_fallthru
          _
        // Predicated region
        $region53: #{vit_forward.1} parent=11 // pred_check
          %p561 = pneg %p291
        $region54: #{vit_forward.1} parent=11 // pred_check_branch
          %563 = sbr.rel (%p561) target = $region56
        $region55: #{vit_forward.1} parent=11 // pred_region
          _
        $region56: #{vit_forward.1} parent=11 // pred_fallthru
          _
        // Predicated region
        $region57: #{vit_forward.1} parent=11 // pred_check
          %p564 = pneg %p312
        $region58: #{vit_forward.1} parent=11 // pred_check_branch
          %566 = sbr.rel (%p564) target = $region60
        $region59: #{vit_forward.1} parent=11 // pred_region
          _
        $region60: #{vit_forward.1} parent=11 // pred_fallthru
          _
        // Predicated region
        $region61: #{vit_forward.1} parent=11 // pred_check
          %p567 = pneg %p333
        $region62: #{vit_forward.1} parent=11 // pred_check_branch
          %569 = sbr.rel (%p567) target = $region64
        $region63: #{vit_forward.1} parent=11 // pred_region
          _
        $region64: #{vit_forward.1} parent=11 // pred_fallthru
          _
        // Predicated region
        $region65: #{vit_forward.1} parent=11 // pred_check
          %p570 = pneg %p354
        $region66: #{vit_forward.1} parent=11 // pred_check_branch
          %572 = sbr.rel (%p570) target = $region68
        $region67: #{vit_forward.1} parent=11 // pred_region
          _
        $region68: #{vit_forward.1} parent=11 // pred_fallthru
          _
        // Predicated region
        $region69: #{vit_forward.1} parent=11 // pred_check
          %p573 = pneg %p375
        $region70: #{vit_forward.1} parent=11 // pred_check_branch
          %575 = sbr.rel (%p573) target = $region72
        $region71: #{vit_forward.1} parent=11 // pred_region
          _
        $region72: #{vit_forward.1} parent=11 // pred_fallthru
          _
        // Predicated region
        $region73: #{vit_forward.1} parent=11 // pred_check
          %p576 = pneg %p396
        $region74: #{vit_forward.1} parent=11 // pred_check_branch
          %578 = sbr.rel (%p576) target = $region76
        $region75: #{vit_forward.1} parent=11 // pred_region
          _
        $region76: #{vit_forward.1} parent=11 // pred_fallthru
          _
        // Predicated region
        $region77: #{vit_forward.1} parent=11 // pred_check
          %p579 = pneg %p417
        $region78: #{vit_forward.1} parent=11 // pred_check_branch
          %581 = sbr.rel (%p579) target = $region80
        $region79: #{vit_forward.1} parent=11 // pred_region
          _
        $region80: #{vit_forward.1} parent=11 // pred_fallthru
          _
        // Predicated region
        $region81: #{vit_forward.1} parent=11 // pred_check
          %p582 = pneg %p438
        $region82: #{vit_forward.1} parent=11 // pred_check_branch
          %584 = sbr.rel (%p582) target = $region84
        $region83: #{vit_forward.1} parent=11 // pred_region
          _
        $region84: #{vit_forward.1} parent=11 // pred_fallthru
          _
      $region12: #{vit_forward.1} parent=5 // pred_fallthru
        _
      %p585 = scmp.lt.s32.totalorder %s34, 2
      // Predicated region
      $region85: #{vit_forward.1} parent=5 // pred_check
        %p586 = pneg %p585
      $region86: #{vit_forward.1} parent=5 // pred_check_branch
        %588 = sbr.rel (%p586) target = $region88
      $region87: #{vit_forward.1} parent=5 // pred_region
        // Predicated region
        $region89: #{vit_forward.1} parent=87 // pred_check
          %p589 = pneg %p54
        $region90: #{vit_forward.1} parent=87 // pred_check_branch
          %591 = sbr.rel (%p589) target = $region92
        $region91: #{vit_forward.1} parent=87 // pred_region
          %p592 = scmp.lt.s32.totalorder %s34, 1
          %s593 = scalar_select %p592, %s34, 1
          %s594 = smul.addr %s593, 2
          %s595 = smul.addr %s594, 8
          %s596 = scalar_lea.vmem %s0, %s595
        $region92: #{vit_forward.1} parent=87 // pred_fallthru
          _
      $region88: #{vit_forward.1} parent=5 // pred_fallthru
        _
      %p597 = scmp.le.s32.totalorder 1, %s34
      %p598 = scmp.lt.s32.totalorder %s34, 3
      %p599 = pnand %p597, %p598
      %p600 = pneg %p599
      // Predicated region
      $region93: #{vit_forward.1} parent=5 // pred_check
        _
      $region94: #{vit_forward.1} parent=5 // pred_check_branch
        %602 = sbr.rel (%p599) target = $region96
      $region95: #{vit_forward.1} parent=5 // pred_region
        %s603 = ssub.s32 %s34, 1
        %p604 = scmp.lt.s32.totalorder %s39, 1
        %s605 = scalar_select %p604, %s39, 1
        %s606 = smul.addr %s605, 2
        %s607 = smul.addr %s606, 8
        %s608 = scalar_lea.vmem %s0, %s607
        %p609 = pneg %p60
        %p610 = pneg %p57
        %p611 = pneg %p81
        %p612 = pneg %p78
        %p613 = pneg %p102
        %p614 = pneg %p99
        %p615 = pneg %p123
        %p616 = pneg %p120
        %p617 = pneg %p144
        %p618 = pneg %p141
        %p619 = pneg %p165
        %p620 = pneg %p162
        %p621 = pneg %p186
        %p622 = pneg %p183
        %p623 = pneg %p207
        %p624 = pneg %p204
        %p625 = pneg %p228
        %p626 = pneg %p225
        %p627 = pneg %p249
        %p628 = pneg %p246
        %p629 = pneg %p270
        %p630 = pneg %p267
        %p631 = pneg %p291
        %p632 = pneg %p288
        %p633 = pneg %p312
        %p634 = pneg %p309
        %p635 = pneg %p333
        %p636 = pneg %p330
        %p637 = pneg %p354
        %p638 = pneg %p351
        %p639 = pneg %p375
        %p640 = pneg %p372
        %p641 = pneg %p396
        %p642 = pneg %p393
        %p643 = pneg %p417
        %p644 = pneg %p414
        %p645 = pneg %p438
        %p646 = pneg %p435
        %p647 = pneg %p464
        %p648 = pneg %p461
        %s649 = sand.u32 %s451, 1
        %s650 = scalar_lea.sflag [#allocation4], %s649
        %s651 = sand.u32 %s451, 1
        %s652 = smul.addr %s651, 16
        %s653 = scalar_lea.vmem [#allocation3], %s652
        %p654 = pneg %p490
        %p655 = pneg %p487
        %p656 = scmp.lt.s32.totalorder %s39, 1
        %s657 = scalar_select %p656, %s39, 1
        %s658 = smul.addr %s657, 2
        %s659 = smul.addr %s658, 8
        %s660 = scalar_lea.vmem %s20, %s659
        %p661 = pneg %p516
        %p662 = pneg %p513
        %s663 = sand.u32 %s503, 1
        %s664 = scalar_lea.sflag [#allocation6], %s663
        %s665 = sand.u32 %s503, 1
        %s666 = smul.addr %s665, 16
        %s667 = scalar_lea.vmem [#allocation5], %s666
        %p668 = scmp.lt.s32.totalorder %s39, 1
        %s669 = scalar_select %p668, %s39, 1
        %s670 = smul.addr %s669, 2
        %s671 = smul.addr %s670, 8
        %s672 = scalar_lea.vmem %s0, %s671
        %p673 = scmp.lt.s32.totalorder %s39, 1
        %s674 = scalar_select %p673, %s39, 1
        %s675 = smul.addr %s674, 2
        %s676 = smul.addr %s675, 8
        %s677 = scalar_lea.vmem %s20, %s676
        %v678 = vld [vmem:[%s672] sm:$0xff]
        %v679 = vld [vmem:[%s672 + $0x8] sm:$0xff]
        %v680 = vld [vmem:[%s1] sm:$0xff]
        %v681 = vld [vmem:[%s1 + $0x8] sm:$0xff]
        %v682 = vld [vmem:[%s1 + $0x10] sm:$0xff]
        %v683 = vld [vmem:[%s1 + $0x18] sm:$0xff]
        %v684 = vld [vmem:[%s1 + $0x20] sm:$0xff]
        %v685 = vld [vmem:[%s1 + $0x28] sm:$0xff]
        %v686 = vld [vmem:[%s2] sm:$0x1]
        %v688 = vlaneseq
        %v689 = vshrl.u32 %v688, 7
        %v690 = vsub.s32 0, %v689
        %v691 = vrot.slane %v686, %v690
        %vm693 = vcmask 392192
        %v695 = vsel %vm693, %v678, 0
        %v698 = vsel %vm693, %v679, 0
        %700 = vmatprep.subr.mxu0 0.0
        %701 = vmatpush1.msra.mxu0 0.0
        %702 = vmatprep.subr.mxu0 0.0
        %703 = vmatpush1.msra.mxu0 0.0
        %704 = vmatprep.subr.mxu0 0.0
        %705 = vmatpush1.msra.mxu0 0.0
        %706 = vmatprep.subr.mxu0 0.0
        %707 = vmatpush1.msra.mxu0 0.0
        %708 = vmatprep.subr.mxu0 0.0
        %709 = vmatpush1.msra.mxu0 0.0
        %710 = vmatprep.subr.mxu0 0.0
        %711 = vmatpush1.msra.mxu0 0.0
        %712 = vmatprep.subr.mxu0 0.0
        %713 = vmatpush1.msra.mxu0 0.0
        %714 = vmatprep.subr.mxu0 0.0
        %715 = vmatpush1.msra.mxu0 0.0
        %716 = vmatprep.subr.mxu0 0.0
        %717 = vmatpush1.msra.mxu0 0.0
        %718 = vmatprep.subr.mxu0 0.0
        %719 = vmatpush1.msra.mxu0 0.0
        %720 = vmatprep.subr.mxu0 0.0
        %721 = vmatpush1.msra.mxu0 %v685
        %722 = vmatprep.subr.mxu0 0.0
        %723 = vmatpush1.msra.mxu0 %v684
        %724 = vmatprep.subr.mxu0 0.0
        %725 = vmatpush1.msra.mxu0 %v683
        %726 = vmatprep.subr.mxu0 0.0
        %727 = vmatpush1.msra.mxu0 %v682
        %728 = vmatprep.subr.mxu0 0.0
        %729 = vmatpush1.msra.mxu0 %v681
        %730 = vmatprep.subr.mxu0 0.0
        %731 = vmatpush1.msra.mxu0 %v680
        %732 = vmatprep.subr.mxu0 0.0
        %733 = vmatpush2.msra.mxu0 0.0
        %734 = vmatprep.subr.mxu0 0.0
        %735 = vmatpush2.msra.mxu0 0.0
        %736 = vmatprep.subr.mxu0 0.0
        %737 = vmatpush2.msra.mxu0 0.0
        %738 = vmatprep.subr.mxu0 0.0
        %739 = vmatpush2.msra.mxu0 0.0
        %740 = vmatprep.subr.mxu0 0.0
        %741 = vmatpush2.msra.mxu0 0.0
        %742 = vmatprep.subr.mxu0 0.0
        %743 = vmatpush2.msra.mxu0 0.0
        %744 = vmatprep.subr.mxu0 0.0
        %745 = vmatpush2.msra.mxu0 0.0
        %746 = vmatprep.subr.mxu0 0.0
        %747 = vmatpush2.msra.mxu0 0.0
        %748 = vmatprep.subr.mxu0 0.0
        %749 = vmatpush2.msra.mxu0 0.0
        %750 = vmatprep.subr.mxu0 0.0
        %751 = vmatpush2.msra.mxu0 0.0
        %752 = vmatprep.subr.mxu0 0.0
        %753 = vmatpush2.msra.mxu0 0.0
        %754 = vmatprep.subr.mxu0 0.0
        %755 = vmatpush2.msra.mxu0 0.0
        %756 = vmatprep.subr.mxu0 0.0
        %757 = vmatpush2.msra.mxu0 0.0
        %758 = vmatprep.subr.mxu0 0.0
        %759 = vmatpush2.msra.mxu0 0.0
        %760 = vmatprep.subr.mxu0 0.0
        %761 = vmatpush2.msra.mxu0 0.0
        %762 = vmatprep.subr.mxu0 0.0
        %763 = vmatpush2.msra.mxu0 0.0
        %764 = vmatprep.mubr.f32.mxu0 0.0
        %765 = vmatmul.mubr.f32.gmra.mxu0 %v695
        %v766 = vpop.f32.mrf.mxu0
        %v767 = vadd.f32 %v691, %v766
        %v768 = vpop.f32.mrf.mxu0
        %769 = vmatprep.mubr.f32.mxu0 0.0
        %770 = vmatmul.mubr.f32.gmra.mxu0 %v698
        %v771 = vpop.f32.mrf.mxu0
        %v772 = vadd.f32 %v691, %v771
        %v773 = vpop.f32.mrf.mxu0
        %774 = vdwg.mxu0
        %v775 = vld [vmem:[%s3] sm:$0xff]
        %v776 = vld [vmem:[%s3 + $0x8] sm:$0xff]
        %v777 = vadd.f32 %v767, %v775
        %v778 = vadd.f32 %v772, %v776
        %v779 = vld [vmem:[%s4] sm:$0x1]
        %vm780 = vcmask 253952
        %781 = vst.msk [vmem:[#allocation2] sm:$0x1] %vm780, %v779
        %vm782 = vcmask 261120
        %783 = vst.msk [vmem:[#allocation2 + $0x1] sm:$0xff] %vm782, %v777
        %784 = vst.msk [vmem:[#allocation2 + $0x9] sm:$0xff] %vm782, %v778
        %v785 = vld [vmem:[#allocation2] sm:$0xff]
        %v786 = vld [vmem:[#allocation2 + $0x8] sm:$0xff]
        %v787 = vld [vmem:[#allocation2 + $0x10] sm:$0x1]
        %v788 = vld [vmem:[%s5] sm:$0x1]
        %v789 = vld [vmem:[%s6] sm:$0x1]
        %v790 = vsel %vm782, %v785, 0.0
        %791 = vadd.xlane.f32.xlu0 %v790
        %v792 = vpop.xlane.xlu0 %791
        %v793 = vsel %vm782, %v786, 0.0
        %794 = vadd.xlane.f32.xlu0 %v793
        %v795 = vpop.xlane.xlu0 %794
        %v796 = vsel %vm780, %v787, 0.0
        %797 = vadd.xlane.f32.xlu0 %v796
        %v798 = vpop.xlane.xlu0 %797
        %v799 = vrcp.pop 32.0
        %v800 = vmul.f32 %v792, %v799
        %v801 = vmul.f32 %v795, %v799
        %v802 = vmul.f32 %v798, %v799
        %v803 = vsub.f32 %v785, %v800
        %v804 = vsub.f32 %v786, %v801
        %v805 = vsub.f32 %v787, %v802
        %v806 = vmul.f32 %v803, %v803
        %v807 = vmul.f32 %v804, %v804
        %v808 = vmul.f32 %v805, %v805
        %v809 = vsel %vm782, %v806, 0.0
        %810 = vadd.xlane.f32.xlu0 %v809
        %v811 = vpop.xlane.xlu0 %810
        %v812 = vsel %vm782, %v807, 0.0
        %813 = vadd.xlane.f32.xlu0 %v812
        %v814 = vpop.xlane.xlu0 %813
        %v815 = vsel %vm780, %v808, 0.0
        %816 = vadd.xlane.f32.xlu0 %v815
        %v817 = vpop.xlane.xlu0 %816
        %v818 = vmul.f32 %v811, %v799
        %v819 = vmul.f32 %v814, %v799
        %v820 = vmul.f32 %v817, %v799
        %v821 = vadd.f32 %v818, 1e-06
        %v822 = vadd.f32 %v819, 1e-06
        %v823 = vadd.f32 %v820, 1e-06
        %v824 = vrsqrt.pop %v821
        %v825 = vrsqrt.pop %v822
        %v826 = vrsqrt.pop %v823
        %v827 = vmul.f32 %v803, %v824
        %v828 = vmul.f32 %v804, %v825
        %v829 = vmul.f32 %v805, %v826
        %v831 = vlaneseq
        %v832 = vshrl.u32 %v831, 7
        %v833 = vsub.s32 0, %v832
        %v834 = vrot.slane %v788, %v833
        %v836 = vmul.f32 %v827, %v834
        %v837 = vmul.f32 %v828, %v834
        %v838 = vmul.f32 %v829, %v834
        %v840 = vlaneseq
        %v841 = vshrl.u32 %v840, 7
        %v842 = vsub.s32 0, %v841
        %v843 = vrot.slane %v789, %v842
        %v845 = vadd.f32 %v836, %v843
        %v846 = vadd.f32 %v837, %v843
        %v847 = vadd.f32 %v838, %v843
        %v848 = vld [vmem:[%s7] sm:$0xff]
        %v849 = vld [vmem:[%s7 + $0x8] sm:$0xff]
        %v850 = vld [vmem:[%s7 + $0x10] sm:$0xff]
        %v851 = vld [vmem:[%s7 + $0x18] sm:$0xff]
        %v852 = vld [vmem:[%s8] sm:$0x1]
        %v854 = vlaneseq
        %v855 = vshrl.u32 %v854, 7
        %v856 = vsub.s32 0, %v855
        %v857 = vrot.slane %v852, %v856
        %v860 = vsel %vm782, %v845, 0
        %v863 = vsel %vm782, %v846, 0
        %v866 = vsel %vm782, %v847, 0
        %868 = vmatprep.subr.mxu0 0.0
        %869 = vmatpush1.msra.mxu0 0.0
        %870 = vmatprep.subr.mxu0 0.0
        %871 = vmatpush1.msra.mxu0 0.0
        %872 = vmatprep.subr.mxu0 0.0
        %873 = vmatpush1.msra.mxu0 0.0
        %874 = vmatprep.subr.mxu0 0.0
        %875 = vmatpush1.msra.mxu0 0.0
        %876 = vmatprep.subr.mxu0 0.0
        %877 = vmatpush1.msra.mxu0 0.0
        %878 = vmatprep.subr.mxu0 0.0
        %879 = vmatpush1.msra.mxu0 0.0
        %880 = vmatprep.subr.mxu0 0.0
        %881 = vmatpush1.msra.mxu0 0.0
        %882 = vmatprep.subr.mxu0 0.0
        %883 = vmatpush1.msra.mxu0 0.0
        %884 = vmatprep.subr.mxu0 0.0
        %885 = vmatpush1.msra.mxu0 0.0
        %886 = vmatprep.subr.mxu0 0.0
        %887 = vmatpush1.msra.mxu0 0.0
        %888 = vmatprep.subr.mxu0 0.0
        %889 = vmatpush1.msra.mxu0 0.0
        %890 = vmatprep.subr.mxu0 0.0
        %891 = vmatpush1.msra.mxu0 0.0
        %892 = vmatprep.subr.mxu0 0.0
        %893 = vmatpush1.msra.mxu0 %v851
        %894 = vmatprep.subr.mxu0 0.0
        %895 = vmatpush1.msra.mxu0 %v850
        %896 = vmatprep.subr.mxu0 0.0
        %897 = vmatpush1.msra.mxu0 %v849
        %898 = vmatprep.subr.mxu0 0.0
        %899 = vmatpush1.msra.mxu0 %v848
        %900 = vmatprep.subr.mxu0 0.0
        %901 = vmatpush2.msra.mxu0 0.0
        %902 = vmatprep.subr.mxu0 0.0
        %903 = vmatpush2.msra.mxu0 0.0
        %904 = vmatprep.subr.mxu0 0.0
        %905 = vmatpush2.msra.mxu0 0.0
        %906 = vmatprep.subr.mxu0 0.0
        %907 = vmatpush2.msra.mxu0 0.0
        %908 = vmatprep.subr.mxu0 0.0
        %909 = vmatpush2.msra.mxu0 0.0
        %910 = vmatprep.subr.mxu0 0.0
        %911 = vmatpush2.msra.mxu0 0.0
        %912 = vmatprep.subr.mxu0 0.0
        %913 = vmatpush2.msra.mxu0 0.0
        %914 = vmatprep.subr.mxu0 0.0
        %915 = vmatpush2.msra.mxu0 0.0
        %916 = vmatprep.subr.mxu0 0.0
        %917 = vmatpush2.msra.mxu0 0.0
        %918 = vmatprep.subr.mxu0 0.0
        %919 = vmatpush2.msra.mxu0 0.0
        %920 = vmatprep.subr.mxu0 0.0
        %921 = vmatpush2.msra.mxu0 0.0
        %922 = vmatprep.subr.mxu0 0.0
        %923 = vmatpush2.msra.mxu0 0.0
        %924 = vmatprep.subr.mxu0 0.0
        %925 = vmatpush2.msra.mxu0 0.0
        %926 = vmatprep.subr.mxu0 0.0
        %927 = vmatpush2.msra.mxu0 0.0
        %928 = vmatprep.subr.mxu0 0.0
        %929 = vmatpush2.msra.mxu0 0.0
        %930 = vmatprep.subr.mxu0 0.0
        %931 = vmatpush2.msra.mxu0 0.0
        %932 = vmatprep.mubr.f32.mxu0 0.0
        %933 = vmatmul.mubr.f32.gmra.mxu0 %v860
        %v934 = vpop.f32.mrf.mxu0
        %v935 = vadd.f32 %v857, %v934
        %v936 = vpop.f32.mrf.mxu0
        %937 = vmatprep.mubr.f32.mxu0 0.0
        %938 = vmatmul.mubr.f32.gmra.mxu0 %v863
        %v939 = vpop.f32.mrf.mxu0
        %v940 = vadd.f32 %v857, %v939
        %v941 = vpop.f32.mrf.mxu0
        %942 = vmatprep.mubr.f32.mxu0 0.0
        %943 = vmatmul.mubr.f32.gmra.mxu0 %v866
        %v944 = vpop.f32.mrf.mxu0
        %v945 = vadd.f32 %v857, %v944
        %v946 = vpop.f32.mrf.mxu0
        %947 = vdwg.mxu0
        %v948 = vmul.f32 %v935, 0.35355338
        %v949 = vmul.f32 %v940, 0.35355338
        %v950 = vmul.f32 %v945, 0.35355338
        %954 = vrot.lane.b32.xlu0 %v935, 96
        %v955 = vpop.permute.xlu0 %954
        %956 = vrot.lane.b32.xlu0 %v940, 96
        %v957 = vpop.permute.xlu0 %956
        %958 = vrot.lane.b32.xlu0 %v945, 96
        %v959 = vpop.permute.xlu0 %958
        %vm960 = vcmask 64512
        %v962 = vsel %vm960, %v948, 0
        %v965 = vsel %vm960, %v949, 0
        %v968 = vsel %vm960, %v950, 0
        %v970 = vsel %vm960, %v955, 0
        %v972 = vsel %vm960, %v957, 0
        %v974 = vsel %vm960, %v959, 0
        %976 = vmatprep.subr.mxu0 0.0
        %977 = vmatpush1.xpose.msra.mxu0 0.0
        %978 = vmatprep.subr.mxu0 0.0
        %979 = vmatpush1.xpose.msra.mxu0 0.0
        %980 = vmatprep.subr.mxu0 0.0
        %981 = vmatpush1.xpose.msra.mxu0 0.0
        %982 = vmatprep.subr.mxu0 0.0
        %983 = vmatpush1.xpose.msra.mxu0 0.0
        %984 = vmatprep.subr.mxu0 0.0
        %985 = vmatpush1.xpose.msra.mxu0 0.0
        %986 = vmatprep.subr.mxu0 0.0
        %987 = vmatpush1.xpose.msra.mxu0 0.0
        %988 = vmatprep.subr.mxu0 0.0
        %989 = vmatpush1.xpose.msra.mxu0 0.0
        %990 = vmatprep.subr.mxu0 0.0
        %991 = vmatpush1.xpose.msra.mxu0 0.0
        %992 = vmatprep.subr.mxu0 0.0
        %993 = vmatpush1.xpose.msra.mxu0 0.0
        %994 = vmatprep.subr.mxu0 0.0
        %995 = vmatpush1.xpose.msra.mxu0 0.0
        %996 = vmatprep.subr.mxu0 0.0
        %997 = vmatpush1.xpose.msra.mxu0 0.0
        %998 = vmatprep.subr.mxu0 0.0
        %999 = vmatpush1.xpose.msra.mxu0 0.0
        %1000 = vmatprep.subr.mxu0 0.0
        %1001 = vmatpush1.xpose.msra.mxu0 0.0
        %1002 = vmatprep.subr.mxu0 0.0
        %1003 = vmatpush1.xpose.msra.mxu0 %v974
        %1004 = vmatprep.subr.mxu0 0.0
        %1005 = vmatpush1.xpose.msra.mxu0 %v972
        %1006 = vmatprep.subr.mxu0 0.0
        %1007 = vmatpush1.xpose.msra.mxu0 %v970
        %1008 = vmatprep.subr.mxu0 0.0
        %1009 = vmatpush2.xpose.msra.mxu0 0.0
        %1010 = vmatprep.subr.mxu0 0.0
        %1011 = vmatpush2.xpose.msra.mxu0 0.0
        %1012 = vmatprep.subr.mxu0 0.0
        %1013 = vmatpush2.xpose.msra.mxu0 0.0
        %1014 = vmatprep.subr.mxu0 0.0
        %1015 = vmatpush2.xpose.msra.mxu0 0.0
        %1016 = vmatprep.subr.mxu0 0.0
        %1017 = vmatpush2.xpose.msra.mxu0 0.0
        %1018 = vmatprep.subr.mxu0 0.0
        %1019 = vmatpush2.xpose.msra.mxu0 0.0
        %1020 = vmatprep.subr.mxu0 0.0
        %1021 = vmatpush2.xpose.msra.mxu0 0.0
        %1022 = vmatprep.subr.mxu0 0.0
        %1023 = vmatpush2.xpose.msra.mxu0 0.0
        %1024 = vmatprep.subr.mxu0 0.0
        %1025 = vmatpush2.xpose.msra.mxu0 0.0
        %1026 = vmatprep.subr.mxu0 0.0
        %1027 = vmatpush2.xpose.msra.mxu0 0.0
        %1028 = vmatprep.subr.mxu0 0.0
        %1029 = vmatpush2.xpose.msra.mxu0 0.0
        %1030 = vmatprep.subr.mxu0 0.0
        %1031 = vmatpush2.xpose.msra.mxu0 0.0
        %1032 = vmatprep.subr.mxu0 0.0
        %1033 = vmatpush2.xpose.msra.mxu0 0.0
        %1034 = vmatprep.subr.mxu0 0.0
        %1035 = vmatpush2.xpose.msra.mxu0 0.0
        %1036 = vmatprep.subr.mxu0 0.0
        %1037 = vmatpush2.xpose.msra.mxu0 0.0
        %1038 = vmatprep.subr.mxu0 0.0
        %1039 = vmatpush2.xpose.msra.mxu0 0.0
        %1040 = vmatprep.mubr.f32.mxu0 0.0
        %1041 = vmatmul.mubr.f32.gmra.mxu0 %v962
        %v1042 = vpop.f32.mrf.mxu0
        %v1043 = vadd.f32 0.0, %v1042
        %v1044 = vpop.f32.mrf.mxu0
        %1045 = vmatprep.mubr.f32.mxu0 0.0
        %1046 = vmatmul.mubr.f32.gmra.mxu0 %v965
        %v1047 = vpop.f32.mrf.mxu0
        %v1048 = vadd.f32 0.0, %v1047
        %v1049 = vpop.f32.mrf.mxu0
        %1050 = vmatprep.mubr.f32.mxu0 0.0
        %1051 = vmatmul.mubr.f32.gmra.mxu0 %v968
        %v1052 = vpop.f32.mrf.mxu0
        %v1053 = vadd.f32 0.0, %v1052
        %v1054 = vpop.f32.mrf.mxu0
        %1055 = vdwg.mxu0
        %vm1056 = vcmask 138240
        %v1057 = vsel %vm1056, %v1043, -inf
        %1058 = vmax.xlane.f32.xlu0 %v1057
        %v1059 = vpop.xlane.xlu0 %1058
        %v1060 = vsel %vm1056, %v1048, -inf
        %1061 = vmax.xlane.f32.xlu0 %v1060
        %v1062 = vpop.xlane.xlu0 %1061
        %vm1063 = vcmask 131072
        %v1064 = vsel %vm1063, %v1053, -inf
        %1065 = vmax.xlane.f32.xlu0 %v1064
        %v1066 = vpop.xlane.xlu0 %1065
        %v1067 = vsub.f32 %v1043, %v1059
        %v1068 = vsub.f32 %v1048, %v1062
        %v1069 = vsub.f32 %v1053, %v1066
        %v1070 = vmul.f32 %v1067, 1.442695
        %v1071 = vpow.pop %v1070
        %v1072 = vmul.f32 %v1068, 1.442695
        %v1073 = vpow.pop %v1072
        %v1074 = vmul.f32 %v1069, 1.442695
        %v1075 = vpow.pop %v1074
        %v1076 = vsel %vm1056, %v1071, 0.0
        %1077 = vadd.xlane.f32.xlu0 %v1076
        %v1078 = vpop.xlane.xlu0 %1077
        %v1079 = vsel %vm1056, %v1073, 0.0
        %1080 = vadd.xlane.f32.xlu0 %v1079
        %v1081 = vpop.xlane.xlu0 %1080
        %v1082 = vsel %vm1063, %v1075, 0.0
        %1083 = vadd.xlane.f32.xlu0 %v1082
        %v1084 = vpop.xlane.xlu0 %1083
        %v1085 = vrcp.pop %v1078
        %v1086 = vrcp.pop %v1081
        %v1087 = vrcp.pop %v1084
        %v1088 = vmul.f32 %v1071, %v1085
        %v1089 = vmul.f32 %v1073, %v1086
        %v1090 = vmul.f32 %v1075, %v1087
        %1091 = vrot.lane.b32.xlu0 %v935, 64
        %v1092 = vpop.permute.xlu0 %1091
        %1093 = vrot.lane.b32.xlu0 %v940, 64
        %v1094 = vpop.permute.xlu0 %1093
        %1095 = vrot.lane.b32.xlu0 %v945, 64
        %v1096 = vpop.permute.xlu0 %1095
        %v1100 = vsel %vm1056, %v1088, 0
        %v1103 = vsel %vm1056, %v1089, 0
        %v1106 = vsel %vm1056, %v1090, 0
        %vm1108 = vcmask 1040384
        %v1109 = vsel %vm1108, %v1096, 0
        %1111 = vmatprep.subr.mxu0 0.0
        %1112 = vmatpush1.msra.mxu0 0.0
        %1113 = vmatprep.subr.mxu0 0.0
        %1114 = vmatpush1.msra.mxu0 0.0
        %1115 = vmatprep.subr.mxu0 0.0
        %1116 = vmatpush1.msra.mxu0 0.0
        %1117 = vmatprep.subr.mxu0 0.0
        %1118 = vmatpush1.msra.mxu0 0.0
        %1119 = vmatprep.subr.mxu0 0.0
        %1120 = vmatpush1.msra.mxu0 0.0
        %1121 = vmatprep.subr.mxu0 0.0
        %1122 = vmatpush1.msra.mxu0 0.0
        %1123 = vmatprep.subr.mxu0 0.0
        %1124 = vmatpush1.msra.mxu0 0.0
        %1125 = vmatprep.subr.mxu0 0.0
        %1126 = vmatpush1.msra.mxu0 0.0
        %1127 = vmatprep.subr.mxu0 0.0
        %1128 = vmatpush1.msra.mxu0 0.0
        %1129 = vmatprep.subr.mxu0 0.0
        %1130 = vmatpush1.msra.mxu0 0.0
        %1131 = vmatprep.subr.mxu0 0.0
        %1132 = vmatpush1.msra.mxu0 0.0
        %1133 = vmatprep.subr.mxu0 0.0
        %1134 = vmatpush1.msra.mxu0 0.0
        %1135 = vmatprep.subr.mxu0 0.0
        %1136 = vmatpush1.msra.mxu0 0.0
        %1137 = vmatprep.subr.mxu0 0.0
        %1138 = vmatpush1.msra.mxu0 %v1109
        %1139 = vmatprep.subr.mxu0 0.0
        %1140 = vmatpush1.msra.mxu0 %v1094
        %1141 = vmatprep.subr.mxu0 0.0
        %1142 = vmatpush1.msra.mxu0 %v1092
        %1143 = vmatprep.subr.mxu0 0.0
        %1144 = vmatpush2.msra.mxu0 0.0
        %1145 = vmatprep.subr.mxu0 0.0
        %1146 = vmatpush2.msra.mxu0 0.0
        %1147 = vmatprep.subr.mxu0 0.0
        %1148 = vmatpush2.msra.mxu0 0.0
        %1149 = vmatprep.subr.mxu0 0.0
        %1150 = vmatpush2.msra.mxu0 0.0
        %1151 = vmatprep.subr.mxu0 0.0
        %1152 = vmatpush2.msra.mxu0 0.0
        %1153 = vmatprep.subr.mxu0 0.0
        %1154 = vmatpush2.msra.mxu0 0.0
        %1155 = vmatprep.subr.mxu0 0.0
        %1156 = vmatpush2.msra.mxu0 0.0
        %1157 = vmatprep.subr.mxu0 0.0
        %1158 = vmatpush2.msra.mxu0 0.0
        %1159 = vmatprep.subr.mxu0 0.0
        %1160 = vmatpush2.msra.mxu0 0.0
        %1161 = vmatprep.subr.mxu0 0.0
        %1162 = vmatpush2.msra.mxu0 0.0
        %1163 = vmatprep.subr.mxu0 0.0
        %1164 = vmatpush2.msra.mxu0 0.0
        %1165 = vmatprep.subr.mxu0 0.0
        %1166 = vmatpush2.msra.mxu0 0.0
        %1167 = vmatprep.subr.mxu0 0.0
        %1168 = vmatpush2.msra.mxu0 0.0
        %1169 = vmatprep.subr.mxu0 0.0
        %1170 = vmatpush2.msra.mxu0 0.0
        %1171 = vmatprep.subr.mxu0 0.0
        %1172 = vmatpush2.msra.mxu0 0.0
        %1173 = vmatprep.subr.mxu0 0.0
        %1174 = vmatpush2.msra.mxu0 0.0
        %1175 = vmatprep.mubr.f32.mxu0 0.0
        %1176 = vmatmul.mubr.f32.gmra.mxu0 %v1100
        %v1177 = vpop.f32.mrf.mxu0
        %v1178 = vadd.f32 0.0, %v1177
        %v1179 = vpop.f32.mrf.mxu0
        %1180 = vmatprep.mubr.f32.mxu0 0.0
        %1181 = vmatmul.mubr.f32.gmra.mxu0 %v1103
        %v1182 = vpop.f32.mrf.mxu0
        %v1183 = vadd.f32 0.0, %v1182
        %v1184 = vpop.f32.mrf.mxu0
        %1185 = vmatprep.mubr.f32.mxu0 0.0
        %1186 = vmatmul.mubr.f32.gmra.mxu0 %v1106
        %v1187 = vpop.f32.mrf.mxu0
        %v1188 = vadd.f32 0.0, %v1187
        %v1189 = vpop.f32.mrf.mxu0
        %1190 = vdwg.mxu0
        %1191 = vrot.lane.b32.xlu0 %v948, 120
        %v1192 = vpop.permute.xlu0 %1191
        %1193 = vrot.lane.b32.xlu0 %v949, 120
        %v1194 = vpop.permute.xlu0 %1193
        %1195 = vrot.lane.b32.xlu0 %v950, 120
        %v1196 = vpop.permute.xlu0 %1195
        %1197 = vrot.lane.b32.xlu0 %v935, 88
        %v1198 = vpop.permute.xlu0 %1197
        %1199 = vrot.lane.b32.xlu0 %v940, 88
        %v1200 = vpop.permute.xlu0 %1199
        %1201 = vrot.lane.b32.xlu0 %v945, 88
        %v1202 = vpop.permute.xlu0 %1201
        %v1203 = vsel %vm960, %v1192, 0
        %v1205 = vsel %vm960, %v1194, 0
        %v1207 = vsel %vm960, %v1196, 0
        %v1209 = vsel %vm960, %v1198, 0
        %v1211 = vsel %vm960, %v1200, 0
        %v1213 = vsel %vm960, %v1202, 0
        %1215 = vmatprep.subr.mxu0 0.0
        %1216 = vmatpush1.xpose.msra.mxu0 0.0
        %1217 = vmatprep.subr.mxu0 0.0
        %1218 = vmatpush1.xpose.msra.mxu0 0.0
        %1219 = vmatprep.subr.mxu0 0.0
        %1220 = vmatpush1.xpose.msra.mxu0 0.0
        %1221 = vmatprep.subr.mxu0 0.0
        %1222 = vmatpush1.xpose.msra.mxu0 0.0
        %1223 = vmatprep.subr.mxu0 0.0
        %1224 = vmatpush1.xpose.msra.mxu0 0.0
        %1225 = vmatprep.subr.mxu0 0.0
        %1226 = vmatpush1.xpose.msra.mxu0 0.0
        %1227 = vmatprep.subr.mxu0 0.0
        %1228 = vmatpush1.xpose.msra.mxu0 0.0
        %1229 = vmatprep.subr.mxu0 0.0
        %1230 = vmatpush1.xpose.msra.mxu0 0.0
        %1231 = vmatprep.subr.mxu0 0.0
        %1232 = vmatpush1.xpose.msra.mxu0 0.0
        %1233 = vmatprep.subr.mxu0 0.0
        %1234 = vmatpush1.xpose.msra.mxu0 0.0
        %1235 = vmatprep.subr.mxu0 0.0
        %1236 = vmatpush1.xpose.msra.mxu0 0.0
        %1237 = vmatprep.subr.mxu0 0.0
        %1238 = vmatpush1.xpose.msra.mxu0 0.0
        %1239 = vmatprep.subr.mxu0 0.0
        %1240 = vmatpush1.xpose.msra.mxu0 0.0
        %1241 = vmatprep.subr.mxu0 0.0
        %1242 = vmatpush1.xpose.msra.mxu0 %v1213
        %1243 = vmatprep.subr.mxu0 0.0
        %1244 = vmatpush1.xpose.msra.mxu0 %v1211
        %1245 = vmatprep.subr.mxu0 0.0
        %1246 = vmatpush1.xpose.msra.mxu0 %v1209
        %1247 = vmatprep.subr.mxu0 0.0
        %1248 = vmatpush2.xpose.msra.mxu0 0.0
        %1249 = vmatprep.subr.mxu0 0.0
        %1250 = vmatpush2.xpose.msra.mxu0 0.0
        %1251 = vmatprep.subr.mxu0 0.0
        %1252 = vmatpush2.xpose.msra.mxu0 0.0
        %1253 = vmatprep.subr.mxu0 0.0
        %1254 = vmatpush2.xpose.msra.mxu0 0.0
        %1255 = vmatprep.subr.mxu0 0.0
        %1256 = vmatpush2.xpose.msra.mxu0 0.0
        %1257 = vmatprep.subr.mxu0 0.0
        %1258 = vmatpush2.xpose.msra.mxu0 0.0
        %1259 = vmatprep.subr.mxu0 0.0
        %1260 = vmatpush2.xpose.msra.mxu0 0.0
        %1261 = vmatprep.subr.mxu0 0.0
        %1262 = vmatpush2.xpose.msra.mxu0 0.0
        %1263 = vmatprep.subr.mxu0 0.0
        %1264 = vmatpush2.xpose.msra.mxu0 0.0
        %1265 = vmatprep.subr.mxu0 0.0
        %1266 = vmatpush2.xpose.msra.mxu0 0.0
        %1267 = vmatprep.subr.mxu0 0.0
        %1268 = vmatpush2.xpose.msra.mxu0 0.0
        %1269 = vmatprep.subr.mxu0 0.0
        %1270 = vmatpush2.xpose.msra.mxu0 0.0
        %1271 = vmatprep.subr.mxu0 0.0
        %1272 = vmatpush2.xpose.msra.mxu0 0.0
        %1273 = vmatprep.subr.mxu0 0.0
        %1274 = vmatpush2.xpose.msra.mxu0 0.0
        %1275 = vmatprep.subr.mxu0 0.0
        %1276 = vmatpush2.xpose.msra.mxu0 0.0
        %1277 = vmatprep.subr.mxu0 0.0
        %1278 = vmatpush2.xpose.msra.mxu0 0.0
        %1279 = vmatprep.mubr.f32.mxu0 0.0
        %1280 = vmatmul.mubr.f32.gmra.mxu0 %v1203
        %v1281 = vpop.f32.mrf.mxu0
        %v1282 = vadd.f32 0.0, %v1281
        %v1283 = vpop.f32.mrf.mxu0
        %1284 = vmatprep.mubr.f32.mxu0 0.0
        %1285 = vmatmul.mubr.f32.gmra.mxu0 %v1205
        %v1286 = vpop.f32.mrf.mxu0
        %v1287 = vadd.f32 0.0, %v1286
        %v1288 = vpop.f32.mrf.mxu0
        %1289 = vmatprep.mubr.f32.mxu0 0.0
        %1290 = vmatmul.mubr.f32.gmra.mxu0 %v1207
        %v1291 = vpop.f32.mrf.mxu0
        %v1292 = vadd.f32 0.0, %v1291
        %v1293 = vpop.f32.mrf.mxu0
        %1294 = vdwg.mxu0
        %v1295 = vsel %vm1056, %v1282, -inf
        %1296 = vmax.xlane.f32.xlu0 %v1295
        %v1297 = vpop.xlane.xlu0 %1296
        %v1298 = vsel %vm1056, %v1287, -inf
        %1299 = vmax.xlane.f32.xlu0 %v1298
        %v1300 = vpop.xlane.xlu0 %1299
        %v1301 = vsel %vm1063, %v1292, -inf
        %1302 = vmax.xlane.f32.xlu0 %v1301
        %v1303 = vpop.xlane.xlu0 %1302
        %v1304 = vsub.f32 %v1282, %v1297
        %v1305 = vsub.f32 %v1287, %v1300
        %v1306 = vsub.f32 %v1292, %v1303
        %v1307 = vmul.f32 %v1304, 1.442695
        %v1308 = vpow.pop %v1307
        %v1309 = vmul.f32 %v1305, 1.442695
        %v1310 = vpow.pop %v1309
        %v1311 = vmul.f32 %v1306, 1.442695
        %v1312 = vpow.pop %v1311
        %v1313 = vsel %vm1056, %v1308, 0.0
        %1314 = vadd.xlane.f32.xlu0 %v1313
        %v1315 = vpop.xlane.xlu0 %1314
        %v1316 = vsel %vm1056, %v1310, 0.0
        %1317 = vadd.xlane.f32.xlu0 %v1316
        %v1318 = vpop.xlane.xlu0 %1317
        %v1319 = vsel %vm1063, %v1312, 0.0
        %1320 = vadd.xlane.f32.xlu0 %v1319
        %v1321 = vpop.xlane.xlu0 %1320
        %v1322 = vrcp.pop %v1315
        %v1323 = vrcp.pop %v1318
        %v1324 = vrcp.pop %v1321
        %v1325 = vmul.f32 %v1308, %v1322
        %v1326 = vmul.f32 %v1310, %v1323
        %v1327 = vmul.f32 %v1312, %v1324
        %1328 = vrot.lane.b32.xlu0 %v935, 56
        %v1329 = vpop.permute.xlu0 %1328
        %1330 = vrot.lane.b32.xlu0 %v940, 56
        %v1331 = vpop.permute.xlu0 %1330
        %1332 = vrot.lane.b32.xlu0 %v945, 56
        %v1333 = vpop.permute.xlu0 %1332
        %v1337 = vsel %vm1056, %v1325, 0
        %v1340 = vsel %vm1056, %v1326, 0
        %v1343 = vsel %vm1056, %v1327, 0
        %v1345 = vsel %vm1108, %v1333, 0
        %1347 = vmatprep.subr.mxu0 0.0
        %1348 = vmatpush1.msra.mxu0 0.0
        %1349 = vmatprep.subr.mxu0 0.0
        %1350 = vmatpush1.msra.mxu0 0.0
        %1351 = vmatprep.subr.mxu0 0.0
        %1352 = vmatpush1.msra.mxu0 0.0
        %1353 = vmatprep.subr.mxu0 0.0
        %1354 = vmatpush1.msra.mxu0 0.0
        %1355 = vmatprep.subr.mxu0 0.0
        %1356 = vmatpush1.msra.mxu0 0.0
        %1357 = vmatprep.subr.mxu0 0.0
        %1358 = vmatpush1.msra.mxu0 0.0
        %1359 = vmatprep.subr.mxu0 0.0
        %1360 = vmatpush1.msra.mxu0 0.0
        %1361 = vmatprep.subr.mxu0 0.0
        %1362 = vmatpush1.msra.mxu0 0.0
        %1363 = vmatprep.subr.mxu0 0.0
        %1364 = vmatpush1.msra.mxu0 0.0
        %1365 = vmatprep.subr.mxu0 0.0
        %1366 = vmatpush1.msra.mxu0 0.0
        %1367 = vmatprep.subr.mxu0 0.0
        %1368 = vmatpush1.msra.mxu0 0.0
        %1369 = vmatprep.subr.mxu0 0.0
        %1370 = vmatpush1.msra.mxu0 0.0
        %1371 = vmatprep.subr.mxu0 0.0
        %1372 = vmatpush1.msra.mxu0 0.0
        %1373 = vmatprep.subr.mxu0 0.0
        %1374 = vmatpush1.msra.mxu0 %v1345
        %1375 = vmatprep.subr.mxu0 0.0
        %1376 = vmatpush1.msra.mxu0 %v1331
        %1377 = vmatprep.subr.mxu0 0.0
        %1378 = vmatpush1.msra.mxu0 %v1329
        %1379 = vmatprep.subr.mxu0 0.0
        %1380 = vmatpush2.msra.mxu0 0.0
        %1381 = vmatprep.subr.mxu0 0.0
        %1382 = vmatpush2.msra.mxu0 0.0
        %1383 = vmatprep.subr.mxu0 0.0
        %1384 = vmatpush2.msra.mxu0 0.0
        %1385 = vmatprep.subr.mxu0 0.0
        %1386 = vmatpush2.msra.mxu0 0.0
        %1387 = vmatprep.subr.mxu0 0.0
        %1388 = vmatpush2.msra.mxu0 0.0
        %1389 = vmatprep.subr.mxu0 0.0
        %1390 = vmatpush2.msra.mxu0 0.0
        %1391 = vmatprep.subr.mxu0 0.0
        %1392 = vmatpush2.msra.mxu0 0.0
        %1393 = vmatprep.subr.mxu0 0.0
        %1394 = vmatpush2.msra.mxu0 0.0
        %1395 = vmatprep.subr.mxu0 0.0
        %1396 = vmatpush2.msra.mxu0 0.0
        %1397 = vmatprep.subr.mxu0 0.0
        %1398 = vmatpush2.msra.mxu0 0.0
        %1399 = vmatprep.subr.mxu0 0.0
        %1400 = vmatpush2.msra.mxu0 0.0
        %1401 = vmatprep.subr.mxu0 0.0
        %1402 = vmatpush2.msra.mxu0 0.0
        %1403 = vmatprep.subr.mxu0 0.0
        %1404 = vmatpush2.msra.mxu0 0.0
        %1405 = vmatprep.subr.mxu0 0.0
        %1406 = vmatpush2.msra.mxu0 0.0
        %1407 = vmatprep.subr.mxu0 0.0
        %1408 = vmatpush2.msra.mxu0 0.0
        %1409 = vmatprep.subr.mxu0 0.0
        %1410 = vmatpush2.msra.mxu0 0.0
        %1411 = vmatprep.mubr.f32.mxu0 0.0
        %1412 = vmatmul.mubr.f32.gmra.mxu0 %v1337
        %v1413 = vpop.f32.mrf.mxu0
        %v1414 = vadd.f32 0.0, %v1413
        %v1415 = vpop.f32.mrf.mxu0
        %1416 = vmatprep.mubr.f32.mxu0 0.0
        %1417 = vmatmul.mubr.f32.gmra.mxu0 %v1340
        %v1418 = vpop.f32.mrf.mxu0
        %v1419 = vadd.f32 0.0, %v1418
        %v1420 = vpop.f32.mrf.mxu0
        %1421 = vmatprep.mubr.f32.mxu0 0.0
        %1422 = vmatmul.mubr.f32.gmra.mxu0 %v1343
        %v1423 = vpop.f32.mrf.mxu0
        %v1424 = vadd.f32 0.0, %v1423
        %v1425 = vpop.f32.mrf.mxu0
        %1426 = vdwg.mxu0
        %1427 = vrot.lane.b32.xlu0 %v948, 112
        %v1428 = vpop.permute.xlu0 %1427
        %1429 = vrot.lane.b32.xlu0 %v949, 112
        %v1430 = vpop.permute.xlu0 %1429
        %1431 = vrot.lane.b32.xlu0 %v950, 112
        %v1432 = vpop.permute.xlu0 %1431
        %1433 = vrot.lane.b32.xlu0 %v935, 80
        %v1434 = vpop.permute.xlu0 %1433
        %1435 = vrot.lane.b32.xlu0 %v940, 80
        %v1436 = vpop.permute.xlu0 %1435
        %1437 = vrot.lane.b32.xlu0 %v945, 80
        %v1438 = vpop.permute.xlu0 %1437
        %v1439 = vsel %vm960, %v1428, 0
        %v1441 = vsel %vm960, %v1430, 0
        %v1443 = vsel %vm960, %v1432, 0
        %v1445 = vsel %vm960, %v1434, 0
        %v1447 = vsel %vm960, %v1436, 0
        %v1449 = vsel %vm960, %v1438, 0
        %1451 = vmatprep.subr.mxu0 0.0
        %1452 = vmatpush1.xpose.msra.mxu0 0.0
        %1453 = vmatprep.subr.mxu0 0.0
        %1454 = vmatpush1.xpose.msra.mxu0 0.0
        %1455 = vmatprep.subr.mxu0 0.0
        %1456 = vmatpush1.xpose.msra.mxu0 0.0
        %1457 = vmatprep.subr.mxu0 0.0
        %1458 = vmatpush1.xpose.msra.mxu0 0.0
        %1459 = vmatprep.subr.mxu0 0.0
        %1460 = vmatpush1.xpose.msra.mxu0 0.0
        %1461 = vmatprep.subr.mxu0 0.0
        %1462 = vmatpush1.xpose.msra.mxu0 0.0
        %1463 = vmatprep.subr.mxu0 0.0
        %1464 = vmatpush1.xpose.msra.mxu0 0.0
        %1465 = vmatprep.subr.mxu0 0.0
        %1466 = vmatpush1.xpose.msra.mxu0 0.0
        %1467 = vmatprep.subr.mxu0 0.0
        %1468 = vmatpush1.xpose.msra.mxu0 0.0
        %1469 = vmatprep.subr.mxu0 0.0
        %1470 = vmatpush1.xpose.msra.mxu0 0.0
        %1471 = vmatprep.subr.mxu0 0.0
        %1472 = vmatpush1.xpose.msra.mxu0 0.0
        %1473 = vmatprep.subr.mxu0 0.0
        %1474 = vmatpush1.xpose.msra.mxu0 0.0
        %1475 = vmatprep.subr.mxu0 0.0
        %1476 = vmatpush1.xpose.msra.mxu0 0.0
        %1477 = vmatprep.subr.mxu0 0.0
        %1478 = vmatpush1.xpose.msra.mxu0 %v1449
        %1479 = vmatprep.subr.mxu0 0.0
        %1480 = vmatpush1.xpose.msra.mxu0 %v1447
        %1481 = vmatprep.subr.mxu0 0.0
        %1482 = vmatpush1.xpose.msra.mxu0 %v1445
        %1483 = vmatprep.subr.mxu0 0.0
        %1484 = vmatpush2.xpose.msra.mxu0 0.0
        %1485 = vmatprep.subr.mxu0 0.0
        %1486 = vmatpush2.xpose.msra.mxu0 0.0
        %1487 = vmatprep.subr.mxu0 0.0
        %1488 = vmatpush2.xpose.msra.mxu0 0.0
        %1489 = vmatprep.subr.mxu0 0.0
        %1490 = vmatpush2.xpose.msra.mxu0 0.0
        %1491 = vmatprep.subr.mxu0 0.0
        %1492 = vmatpush2.xpose.msra.mxu0 0.0
        %1493 = vmatprep.subr.mxu0 0.0
        %1494 = vmatpush2.xpose.msra.mxu0 0.0
        %1495 = vmatprep.subr.mxu0 0.0
        %1496 = vmatpush2.xpose.msra.mxu0 0.0
        %1497 = vmatprep.subr.mxu0 0.0
        %1498 = vmatpush2.xpose.msra.mxu0 0.0
        %1499 = vmatprep.subr.mxu0 0.0
        %1500 = vmatpush2.xpose.msra.mxu0 0.0
        %1501 = vmatprep.subr.mxu0 0.0
        %1502 = vmatpush2.xpose.msra.mxu0 0.0
        %1503 = vmatprep.subr.mxu0 0.0
        %1504 = vmatpush2.xpose.msra.mxu0 0.0
        %1505 = vmatprep.subr.mxu0 0.0
        %1506 = vmatpush2.xpose.msra.mxu0 0.0
        %1507 = vmatprep.subr.mxu0 0.0
        %1508 = vmatpush2.xpose.msra.mxu0 0.0
        %1509 = vmatprep.subr.mxu0 0.0
        %1510 = vmatpush2.xpose.msra.mxu0 0.0
        %1511 = vmatprep.subr.mxu0 0.0
        %1512 = vmatpush2.xpose.msra.mxu0 0.0
        %1513 = vmatprep.subr.mxu0 0.0
        %1514 = vmatpush2.xpose.msra.mxu0 0.0
        %1515 = vmatprep.mubr.f32.mxu0 0.0
        %1516 = vmatmul.mubr.f32.gmra.mxu0 %v1439
        %v1517 = vpop.f32.mrf.mxu0
        %v1518 = vadd.f32 0.0, %v1517
        %v1519 = vpop.f32.mrf.mxu0
        %1520 = vmatprep.mubr.f32.mxu0 0.0
        %1521 = vmatmul.mubr.f32.gmra.mxu0 %v1441
        %v1522 = vpop.f32.mrf.mxu0
        %v1523 = vadd.f32 0.0, %v1522
        %v1524 = vpop.f32.mrf.mxu0
        %1525 = vmatprep.mubr.f32.mxu0 0.0
        %1526 = vmatmul.mubr.f32.gmra.mxu0 %v1443
        %v1527 = vpop.f32.mrf.mxu0
        %v1528 = vadd.f32 0.0, %v1527
        %v1529 = vpop.f32.mrf.mxu0
        %1530 = vdwg.mxu0
        %v1531 = vsel %vm1056, %v1518, -inf
        %1532 = vmax.xlane.f32.xlu0 %v1531
        %v1533 = vpop.xlane.xlu0 %1532
        %v1534 = vsel %vm1056, %v1523, -inf
        %1535 = vmax.xlane.f32.xlu0 %v1534
        %v1536 = vpop.xlane.xlu0 %1535
        %v1537 = vsel %vm1063, %v1528, -inf
        %1538 = vmax.xlane.f32.xlu0 %v1537
        %v1539 = vpop.xlane.xlu0 %1538
        %v1540 = vsub.f32 %v1518, %v1533
        %v1541 = vsub.f32 %v1523, %v1536
        %v1542 = vsub.f32 %v1528, %v1539
        %v1543 = vmul.f32 %v1540, 1.442695
        %v1544 = vpow.pop %v1543
        %v1545 = vmul.f32 %v1541, 1.442695
        %v1546 = vpow.pop %v1545
        %v1547 = vmul.f32 %v1542, 1.442695
        %v1548 = vpow.pop %v1547
        %v1549 = vsel %vm1056, %v1544, 0.0
        %1550 = vadd.xlane.f32.xlu0 %v1549
        %v1551 = vpop.xlane.xlu0 %1550
        %v1552 = vsel %vm1056, %v1546, 0.0
        %1553 = vadd.xlane.f32.xlu0 %v1552
        %v1554 = vpop.xlane.xlu0 %1553
        %v1555 = vsel %vm1063, %v1548, 0.0
        %1556 = vadd.xlane.f32.xlu0 %v1555
        %v1557 = vpop.xlane.xlu0 %1556
        %v1558 = vrcp.pop %v1551
        %v1559 = vrcp.pop %v1554
        %v1560 = vrcp.pop %v1557
        %v1561 = vmul.f32 %v1544, %v1558
        %v1562 = vmul.f32 %v1546, %v1559
        %v1563 = vmul.f32 %v1548, %v1560
        %1564 = vrot.lane.b32.xlu0 %v935, 48
        %v1565 = vpop.permute.xlu0 %1564
        %1566 = vrot.lane.b32.xlu0 %v940, 48
        %v1567 = vpop.permute.xlu0 %1566
        %1568 = vrot.lane.b32.xlu0 %v945, 48
        %v1569 = vpop.permute.xlu0 %1568
        %v1573 = vsel %vm1056, %v1561, 0
        %v1576 = vsel %vm1056, %v1562, 0
        %v1579 = vsel %vm1056, %v1563, 0
        %v1581 = vsel %vm1108, %v1569, 0
        %1583 = vmatprep.subr.mxu0 0.0
        %1584 = vmatpush1.msra.mxu0 0.0
        %1585 = vmatprep.subr.mxu0 0.0
        %1586 = vmatpush1.msra.mxu0 0.0
        %1587 = vmatprep.subr.mxu0 0.0
        %1588 = vmatpush1.msra.mxu0 0.0
        %1589 = vmatprep.subr.mxu0 0.0
        %1590 = vmatpush1.msra.mxu0 0.0
        %1591 = vmatprep.subr.mxu0 0.0
        %1592 = vmatpush1.msra.mxu0 0.0
        %1593 = vmatprep.subr.mxu0 0.0
        %1594 = vmatpush1.msra.mxu0 0.0
        %1595 = vmatprep.subr.mxu0 0.0
        %1596 = vmatpush1.msra.mxu0 0.0
        %1597 = vmatprep.subr.mxu0 0.0
        %1598 = vmatpush1.msra.mxu0 0.0
        %1599 = vmatprep.subr.mxu0 0.0
        %1600 = vmatpush1.msra.mxu0 0.0
        %1601 = vmatprep.subr.mxu0 0.0
        %1602 = vmatpush1.msra.mxu0 0.0
        %1603 = vmatprep.subr.mxu0 0.0
        %1604 = vmatpush1.msra.mxu0 0.0
        %1605 = vmatprep.subr.mxu0 0.0
        %1606 = vmatpush1.msra.mxu0 0.0
        %1607 = vmatprep.subr.mxu0 0.0
        %1608 = vmatpush1.msra.mxu0 0.0
        %1609 = vmatprep.subr.mxu0 0.0
        %1610 = vmatpush1.msra.mxu0 %v1581
        %1611 = vmatprep.subr.mxu0 0.0
        %1612 = vmatpush1.msra.mxu0 %v1567
        %1613 = vmatprep.subr.mxu0 0.0
        %1614 = vmatpush1.msra.mxu0 %v1565
        %1615 = vmatprep.subr.mxu0 0.0
        %1616 = vmatpush2.msra.mxu0 0.0
        %1617 = vmatprep.subr.mxu0 0.0
        %1618 = vmatpush2.msra.mxu0 0.0
        %1619 = vmatprep.subr.mxu0 0.0
        %1620 = vmatpush2.msra.mxu0 0.0
        %1621 = vmatprep.subr.mxu0 0.0
        %1622 = vmatpush2.msra.mxu0 0.0
        %1623 = vmatprep.subr.mxu0 0.0
        %1624 = vmatpush2.msra.mxu0 0.0
        %1625 = vmatprep.subr.mxu0 0.0
        %1626 = vmatpush2.msra.mxu0 0.0
        %1627 = vmatprep.subr.mxu0 0.0
        %1628 = vmatpush2.msra.mxu0 0.0
        %1629 = vmatprep.subr.mxu0 0.0
        %1630 = vmatpush2.msra.mxu0 0.0
        %1631 = vmatprep.subr.mxu0 0.0
        %1632 = vmatpush2.msra.mxu0 0.0
        %1633 = vmatprep.subr.mxu0 0.0
        %1634 = vmatpush2.msra.mxu0 0.0
        %1635 = vmatprep.subr.mxu0 0.0
        %1636 = vmatpush2.msra.mxu0 0.0
        %1637 = vmatprep.subr.mxu0 0.0
        %1638 = vmatpush2.msra.mxu0 0.0
        %1639 = vmatprep.subr.mxu0 0.0
        %1640 = vmatpush2.msra.mxu0 0.0
        %1641 = vmatprep.subr.mxu0 0.0
        %1642 = vmatpush2.msra.mxu0 0.0
        %1643 = vmatprep.subr.mxu0 0.0
        %1644 = vmatpush2.msra.mxu0 0.0
        %1645 = vmatprep.subr.mxu0 0.0
        %1646 = vmatpush2.msra.mxu0 0.0
        %1647 = vmatprep.mubr.f32.mxu0 0.0
        %1648 = vmatmul.mubr.f32.gmra.mxu0 %v1573
        %v1649 = vpop.f32.mrf.mxu0
        %v1650 = vadd.f32 0.0, %v1649
        %v1651 = vpop.f32.mrf.mxu0
        %1652 = vmatprep.mubr.f32.mxu0 0.0
        %1653 = vmatmul.mubr.f32.gmra.mxu0 %v1576
        %v1654 = vpop.f32.mrf.mxu0
        %v1655 = vadd.f32 0.0, %v1654
        %v1656 = vpop.f32.mrf.mxu0
        %1657 = vmatprep.mubr.f32.mxu0 0.0
        %1658 = vmatmul.mubr.f32.gmra.mxu0 %v1579
        %v1659 = vpop.f32.mrf.mxu0
        %v1660 = vadd.f32 0.0, %v1659
        %v1661 = vpop.f32.mrf.mxu0
        %1662 = vdwg.mxu0
        %1663 = vrot.lane.b32.xlu0 %v948, 104
        %v1664 = vpop.permute.xlu0 %1663
        %1665 = vrot.lane.b32.xlu0 %v949, 104
        %v1666 = vpop.permute.xlu0 %1665
        %1667 = vrot.lane.b32.xlu0 %v950, 104
        %v1668 = vpop.permute.xlu0 %1667
        %1669 = vrot.lane.b32.xlu0 %v935, 72
        %v1670 = vpop.permute.xlu0 %1669
        %1671 = vrot.lane.b32.xlu0 %v940, 72
        %v1672 = vpop.permute.xlu0 %1671
        %1673 = vrot.lane.b32.xlu0 %v945, 72
        %v1674 = vpop.permute.xlu0 %1673
        %v1675 = vsel %vm960, %v1664, 0
        %v1677 = vsel %vm960, %v1666, 0
        %v1679 = vsel %vm960, %v1668, 0
        %v1681 = vsel %vm960, %v1670, 0
        %v1683 = vsel %vm960, %v1672, 0
        %v1685 = vsel %vm960, %v1674, 0
        %1687 = vmatprep.subr.mxu0 0.0
        %1688 = vmatpush1.xpose.msra.mxu0 0.0
        %1689 = vmatprep.subr.mxu0 0.0
        %1690 = vmatpush1.xpose.msra.mxu0 0.0
        %1691 = vmatprep.subr.mxu0 0.0
        %1692 = vmatpush1.xpose.msra.mxu0 0.0
        %1693 = vmatprep.subr.mxu0 0.0
        %1694 = vmatpush1.xpose.msra.mxu0 0.0
        %1695 = vmatprep.subr.mxu0 0.0
        %1696 = vmatpush1.xpose.msra.mxu0 0.0
        %1697 = vmatprep.subr.mxu0 0.0
        %1698 = vmatpush1.xpose.msra.mxu0 0.0
        %1699 = vmatprep.subr.mxu0 0.0
        %1700 = vmatpush1.xpose.msra.mxu0 0.0
        %1701 = vmatprep.subr.mxu0 0.0
        %1702 = vmatpush1.xpose.msra.mxu0 0.0
        %1703 = vmatprep.subr.mxu0 0.0
        %1704 = vmatpush1.xpose.msra.mxu0 0.0
        %1705 = vmatprep.subr.mxu0 0.0
        %1706 = vmatpush1.xpose.msra.mxu0 0.0
        %1707 = vmatprep.subr.mxu0 0.0
        %1708 = vmatpush1.xpose.msra.mxu0 0.0
        %1709 = vmatprep.subr.mxu0 0.0
        %1710 = vmatpush1.xpose.msra.mxu0 0.0
        %1711 = vmatprep.subr.mxu0 0.0
        %1712 = vmatpush1.xpose.msra.mxu0 0.0
        %1713 = vmatprep.subr.mxu0 0.0
        %1714 = vmatpush1.xpose.msra.mxu0 %v1685
        %1715 = vmatprep.subr.mxu0 0.0
        %1716 = vmatpush1.xpose.msra.mxu0 %v1683
        %1717 = vmatprep.subr.mxu0 0.0
        %1718 = vmatpush1.xpose.msra.mxu0 %v1681
        %1719 = vmatprep.subr.mxu0 0.0
        %1720 = vmatpush2.xpose.msra.mxu0 0.0
        %1721 = vmatprep.subr.mxu0 0.0
        %1722 = vmatpush2.xpose.msra.mxu0 0.0
        %1723 = vmatprep.subr.mxu0 0.0
        %1724 = vmatpush2.xpose.msra.mxu0 0.0
        %1725 = vmatprep.subr.mxu0 0.0
        %1726 = vmatpush2.xpose.msra.mxu0 0.0
        %1727 = vmatprep.subr.mxu0 0.0
        %1728 = vmatpush2.xpose.msra.mxu0 0.0
        %1729 = vmatprep.subr.mxu0 0.0
        %1730 = vmatpush2.xpose.msra.mxu0 0.0
        %1731 = vmatprep.subr.mxu0 0.0
        %1732 = vmatpush2.xpose.msra.mxu0 0.0
        %1733 = vmatprep.subr.mxu0 0.0
        %1734 = vmatpush2.xpose.msra.mxu0 0.0
        %1735 = vmatprep.subr.mxu0 0.0
        %1736 = vmatpush2.xpose.msra.mxu0 0.0
        %1737 = vmatprep.subr.mxu0 0.0
        %1738 = vmatpush2.xpose.msra.mxu0 0.0
        %1739 = vmatprep.subr.mxu0 0.0
        %1740 = vmatpush2.xpose.msra.mxu0 0.0
        %1741 = vmatprep.subr.mxu0 0.0
        %1742 = vmatpush2.xpose.msra.mxu0 0.0
        %1743 = vmatprep.subr.mxu0 0.0
        %1744 = vmatpush2.xpose.msra.mxu0 0.0
        %1745 = vmatprep.subr.mxu0 0.0
        %1746 = vmatpush2.xpose.msra.mxu0 0.0
        %1747 = vmatprep.subr.mxu0 0.0
        %1748 = vmatpush2.xpose.msra.mxu0 0.0
        %1749 = vmatprep.subr.mxu0 0.0
        %1750 = vmatpush2.xpose.msra.mxu0 0.0
        %1751 = vmatprep.mubr.f32.mxu0 0.0
        %1752 = vmatmul.mubr.f32.gmra.mxu0 %v1675
        %v1753 = vpop.f32.mrf.mxu0
        %v1754 = vadd.f32 0.0, %v1753
        %v1755 = vpop.f32.mrf.mxu0
        %1756 = vmatprep.mubr.f32.mxu0 0.0
        %1757 = vmatmul.mubr.f32.gmra.mxu0 %v1677
        %v1758 = vpop.f32.mrf.mxu0
        %v1759 = vadd.f32 0.0, %v1758
        %v1760 = vpop.f32.mrf.mxu0
        %1761 = vmatprep.mubr.f32.mxu0 0.0
        %1762 = vmatmul.mubr.f32.gmra.mxu0 %v1679
        %v1763 = vpop.f32.mrf.mxu0
        %v1764 = vadd.f32 0.0, %v1763
        %v1765 = vpop.f32.mrf.mxu0
        %1766 = vdwg.mxu0
        %v1767 = vsel %vm1056, %v1754, -inf
        %1768 = vmax.xlane.f32.xlu0 %v1767
        %v1769 = vpop.xlane.xlu0 %1768
        %v1770 = vsel %vm1056, %v1759, -inf
        %1771 = vmax.xlane.f32.xlu0 %v1770
        %v1772 = vpop.xlane.xlu0 %1771
        %v1773 = vsel %vm1063, %v1764, -inf
        %1774 = vmax.xlane.f32.xlu0 %v1773
        %v1775 = vpop.xlane.xlu0 %1774
        %v1776 = vsub.f32 %v1754, %v1769
        %v1777 = vsub.f32 %v1759, %v1772
        %v1778 = vsub.f32 %v1764, %v1775
        %v1779 = vmul.f32 %v1776, 1.442695
        %v1780 = vpow.pop %v1779
        %v1781 = vmul.f32 %v1777, 1.442695
        %v1782 = vpow.pop %v1781
        %v1783 = vmul.f32 %v1778, 1.442695
        %v1784 = vpow.pop %v1783
        %v1785 = vsel %vm1056, %v1780, 0.0
        %1786 = vadd.xlane.f32.xlu0 %v1785
        %v1787 = vpop.xlane.xlu0 %1786
        %v1788 = vsel %vm1056, %v1782, 0.0
        %1789 = vadd.xlane.f32.xlu0 %v1788
        %v1790 = vpop.xlane.xlu0 %1789
        %v1791 = vsel %vm1063, %v1784, 0.0
        %1792 = vadd.xlane.f32.xlu0 %v1791
        %v1793 = vpop.xlane.xlu0 %1792
        %v1794 = vrcp.pop %v1787
        %v1795 = vrcp.pop %v1790
        %v1796 = vrcp.pop %v1793
        %v1797 = vmul.f32 %v1780, %v1794
        %v1798 = vmul.f32 %v1782, %v1795
        %v1799 = vmul.f32 %v1784, %v1796
        %1800 = vrot.lane.b32.xlu0 %v935, 40
        %v1801 = vpop.permute.xlu0 %1800
        %1802 = vrot.lane.b32.xlu0 %v940, 40
        %v1803 = vpop.permute.xlu0 %1802
        %1804 = vrot.lane.b32.xlu0 %v945, 40
        %v1805 = vpop.permute.xlu0 %1804
        %v1809 = vsel %vm1056, %v1797, 0
        %v1812 = vsel %vm1056, %v1798, 0
        %v1815 = vsel %vm1056, %v1799, 0
        %v1817 = vsel %vm1108, %v1805, 0
        %1819 = vmatprep.subr.mxu0 0.0
        %1820 = vmatpush1.msra.mxu0 0.0
        %1821 = vmatprep.subr.mxu0 0.0
        %1822 = vmatpush1.msra.mxu0 0.0
        %1823 = vmatprep.subr.mxu0 0.0
        %1824 = vmatpush1.msra.mxu0 0.0
        %1825 = vmatprep.subr.mxu0 0.0
        %1826 = vmatpush1.msra.mxu0 0.0
        %1827 = vmatprep.subr.mxu0 0.0
        %1828 = vmatpush1.msra.mxu0 0.0
        %1829 = vmatprep.subr.mxu0 0.0
        %1830 = vmatpush1.msra.mxu0 0.0
        %1831 = vmatprep.subr.mxu0 0.0
        %1832 = vmatpush1.msra.mxu0 0.0
        %1833 = vmatprep.subr.mxu0 0.0
        %1834 = vmatpush1.msra.mxu0 0.0
        %1835 = vmatprep.subr.mxu0 0.0
        %1836 = vmatpush1.msra.mxu0 0.0
        %1837 = vmatprep.subr.mxu0 0.0
        %1838 = vmatpush1.msra.mxu0 0.0
        %1839 = vmatprep.subr.mxu0 0.0
        %1840 = vmatpush1.msra.mxu0 0.0
        %1841 = vmatprep.subr.mxu0 0.0
        %1842 = vmatpush1.msra.mxu0 0.0
        %1843 = vmatprep.subr.mxu0 0.0
        %1844 = vmatpush1.msra.mxu0 0.0
        %1845 = vmatprep.subr.mxu0 0.0
        %1846 = vmatpush1.msra.mxu0 %v1817
        %1847 = vmatprep.subr.mxu0 0.0
        %1848 = vmatpush1.msra.mxu0 %v1803
        %1849 = vmatprep.subr.mxu0 0.0
        %1850 = vmatpush1.msra.mxu0 %v1801
        %1851 = vmatprep.subr.mxu0 0.0
        %1852 = vmatpush2.msra.mxu0 0.0
        %1853 = vmatprep.subr.mxu0 0.0
        %1854 = vmatpush2.msra.mxu0 0.0
        %1855 = vmatprep.subr.mxu0 0.0
        %1856 = vmatpush2.msra.mxu0 0.0
        %1857 = vmatprep.subr.mxu0 0.0
        %1858 = vmatpush2.msra.mxu0 0.0
        %1859 = vmatprep.subr.mxu0 0.0
        %1860 = vmatpush2.msra.mxu0 0.0
        %1861 = vmatprep.subr.mxu0 0.0
        %1862 = vmatpush2.msra.mxu0 0.0
        %1863 = vmatprep.subr.mxu0 0.0
        %1864 = vmatpush2.msra.mxu0 0.0
        %1865 = vmatprep.subr.mxu0 0.0
        %1866 = vmatpush2.msra.mxu0 0.0
        %1867 = vmatprep.subr.mxu0 0.0
        %1868 = vmatpush2.msra.mxu0 0.0
        %1869 = vmatprep.subr.mxu0 0.0
        %1870 = vmatpush2.msra.mxu0 0.0
        %1871 = vmatprep.subr.mxu0 0.0
        %1872 = vmatpush2.msra.mxu0 0.0
        %1873 = vmatprep.subr.mxu0 0.0
        %1874 = vmatpush2.msra.mxu0 0.0
        %1875 = vmatprep.subr.mxu0 0.0
        %1876 = vmatpush2.msra.mxu0 0.0
        %1877 = vmatprep.subr.mxu0 0.0
        %1878 = vmatpush2.msra.mxu0 0.0
        %1879 = vmatprep.subr.mxu0 0.0
        %1880 = vmatpush2.msra.mxu0 0.0
        %1881 = vmatprep.subr.mxu0 0.0
        %1882 = vmatpush2.msra.mxu0 0.0
        %1883 = vmatprep.mubr.f32.mxu0 0.0
        %1884 = vmatmul.mubr.f32.gmra.mxu0 %v1809
        %v1885 = vpop.f32.mrf.mxu0
        %v1886 = vadd.f32 0.0, %v1885
        %v1887 = vpop.f32.mrf.mxu0
        %1888 = vmatprep.mubr.f32.mxu0 0.0
        %1889 = vmatmul.mubr.f32.gmra.mxu0 %v1812
        %v1890 = vpop.f32.mrf.mxu0
        %v1891 = vadd.f32 0.0, %v1890
        %v1892 = vpop.f32.mrf.mxu0
        %1893 = vmatprep.mubr.f32.mxu0 0.0
        %1894 = vmatmul.mubr.f32.gmra.mxu0 %v1815
        %v1895 = vpop.f32.mrf.mxu0
        %v1896 = vadd.f32 0.0, %v1895
        %v1897 = vpop.f32.mrf.mxu0
        %1898 = vdwg.mxu0
        %1902 = vrot.lane.b32.xlu0 %v1414, 8
        %v1903 = vpop.permute.xlu0 %1902
        %1904 = vrot.lane.b32.xlu0 %v1419, 8
        %v1905 = vpop.permute.xlu0 %1904
        %1906 = vrot.lane.b32.xlu0 %v1424, 8
        %v1907 = vpop.permute.xlu0 %1906
        %1914 = vrot.lane.b32.xlu0 %v1650, 16
        %v1915 = vpop.permute.xlu0 %1914
        %1916 = vrot.lane.b32.xlu0 %v1655, 16
        %v1917 = vpop.permute.xlu0 %1916
        %1918 = vrot.lane.b32.xlu0 %v1660, 16
        %v1919 = vpop.permute.xlu0 %1918
        %1926 = vrot.lane.b32.xlu0 %v1886, 24
        %v1927 = vpop.permute.xlu0 %1926
        %1928 = vrot.lane.b32.xlu0 %v1891, 24
        %v1929 = vpop.permute.xlu0 %1928
        %1930 = vrot.lane.b32.xlu0 %v1896, 24
        %v1931 = vpop.permute.xlu0 %1930
        %v1935 = vsel %vm960, %v1178, %v1903
        %v1936 = vsel %vm960, %v1183, %v1905
        %v1937 = vsel %vm960, %v1188, %v1907
        %vm1938 = vcmask 130048
        %v1939 = vsel %vm1938, %v1935, %v1915
        %v1940 = vsel %vm1938, %v1936, %v1917
        %v1941 = vsel %vm1938, %v1937, %v1919
        %vm1942 = vcmask 195584
        %v1943 = vsel %vm1942, %v1939, %v1927
        %v1944 = vsel %vm1942, %v1940, %v1929
        %v1945 = vsel %vm1942, %v1941, %v1931
        %v1946 = vld [vmem:[%s9] sm:$0xff]
        %v1947 = vld [vmem:[%s9 + $0x8] sm:$0xff]
        %v1948 = vld [vmem:[%s9 + $0x10] sm:$0xff]
        %v1949 = vld [vmem:[%s9 + $0x18] sm:$0xff]
        %v1950 = vld [vmem:[%s10] sm:$0x1]
        %v1952 = vlaneseq
        %v1953 = vshrl.u32 %v1952, 7
        %v1954 = vsub.s32 0, %v1953
        %v1955 = vrot.slane %v1950, %v1954
        %v1958 = vsel %vm782, %v1943, 0
        %v1961 = vsel %vm782, %v1944, 0
        %v1964 = vsel %vm782, %v1945, 0
        %1966 = vmatprep.subr.mxu0 0.0
        %1967 = vmatpush1.msra.mxu0 0.0
        %1968 = vmatprep.subr.mxu0 0.0
        %1969 = vmatpush1.msra.mxu0 0.0
        %1970 = vmatprep.subr.mxu0 0.0
        %1971 = vmatpush1.msra.mxu0 0.0
        %1972 = vmatprep.subr.mxu0 0.0
        %1973 = vmatpush1.msra.mxu0 0.0
        %1974 = vmatprep.subr.mxu0 0.0
        %1975 = vmatpush1.msra.mxu0 0.0
        %1976 = vmatprep.subr.mxu0 0.0
        %1977 = vmatpush1.msra.mxu0 0.0
        %1978 = vmatprep.subr.mxu0 0.0
        %1979 = vmatpush1.msra.mxu0 0.0
        %1980 = vmatprep.subr.mxu0 0.0
        %1981 = vmatpush1.msra.mxu0 0.0
        %1982 = vmatprep.subr.mxu0 0.0
        %1983 = vmatpush1.msra.mxu0 0.0
        %1984 = vmatprep.subr.mxu0 0.0
        %1985 = vmatpush1.msra.mxu0 0.0
        %1986 = vmatprep.subr.mxu0 0.0
        %1987 = vmatpush1.msra.mxu0 0.0
        %1988 = vmatprep.subr.mxu0 0.0
        %1989 = vmatpush1.msra.mxu0 0.0
        %1990 = vmatprep.subr.mxu0 0.0
        %1991 = vmatpush1.msra.mxu0 %v1949
        %1992 = vmatprep.subr.mxu0 0.0
        %1993 = vmatpush1.msra.mxu0 %v1948
        %1994 = vmatprep.subr.mxu0 0.0
        %1995 = vmatpush1.msra.mxu0 %v1947
        %1996 = vmatprep.subr.mxu0 0.0
        %1997 = vmatpush1.msra.mxu0 %v1946
        %1998 = vmatprep.subr.mxu0 0.0
        %1999 = vmatpush2.msra.mxu0 0.0
        %2000 = vmatprep.subr.mxu0 0.0
        %2001 = vmatpush2.msra.mxu0 0.0
        %2002 = vmatprep.subr.mxu0 0.0
        %2003 = vmatpush2.msra.mxu0 0.0
        %2004 = vmatprep.subr.mxu0 0.0
        %2005 = vmatpush2.msra.mxu0 0.0
        %2006 = vmatprep.subr.mxu0 0.0
        %2007 = vmatpush2.msra.mxu0 0.0
        %2008 = vmatprep.subr.mxu0 0.0
        %2009 = vmatpush2.msra.mxu0 0.0
        %2010 = vmatprep.subr.mxu0 0.0
        %2011 = vmatpush2.msra.mxu0 0.0
        %2012 = vmatprep.subr.mxu0 0.0
        %2013 = vmatpush2.msra.mxu0 0.0
        %2014 = vmatprep.subr.mxu0 0.0
        %2015 = vmatpush2.msra.mxu0 0.0
        %2016 = vmatprep.subr.mxu0 0.0
        %2017 = vmatpush2.msra.mxu0 0.0
        %2018 = vmatprep.subr.mxu0 0.0
        %2019 = vmatpush2.msra.mxu0 0.0
        %2020 = vmatprep.subr.mxu0 0.0
        %2021 = vmatpush2.msra.mxu0 0.0
        %2022 = vmatprep.subr.mxu0 0.0
        %2023 = vmatpush2.msra.mxu0 0.0
        %2024 = vmatprep.subr.mxu0 0.0
        %2025 = vmatpush2.msra.mxu0 0.0
        %2026 = vmatprep.subr.mxu0 0.0
        %2027 = vmatpush2.msra.mxu0 0.0
        %2028 = vmatprep.subr.mxu0 0.0
        %2029 = vmatpush2.msra.mxu0 0.0
        %2030 = vmatprep.mubr.f32.mxu0 0.0
        %2031 = vmatmul.mubr.f32.gmra.mxu0 %v1958
        %v2032 = vpop.f32.mrf.mxu0
        %v2033 = vadd.f32 %v1955, %v2032
        %v2034 = vpop.f32.mrf.mxu0
        %2035 = vmatprep.mubr.f32.mxu0 0.0
        %2036 = vmatmul.mubr.f32.gmra.mxu0 %v1961
        %v2037 = vpop.f32.mrf.mxu0
        %v2038 = vadd.f32 %v1955, %v2037
        %v2039 = vpop.f32.mrf.mxu0
        %2040 = vmatprep.mubr.f32.mxu0 0.0
        %2041 = vmatmul.mubr.f32.gmra.mxu0 %v1964
        %v2042 = vpop.f32.mrf.mxu0
        %v2043 = vadd.f32 %v1955, %v2042
        %v2044 = vpop.f32.mrf.mxu0
        %2045 = vdwg.mxu0
        %v2046 = vadd.f32 %v785, %v2033
        %v2047 = vadd.f32 %v786, %v2038
        %v2048 = vadd.f32 %v787, %v2043
        %v2049 = vld [vmem:[%s11] sm:$0x1]
        %v2050 = vld [vmem:[%s12] sm:$0x1]
        %v2051 = vsel %vm782, %v2046, 0.0
        %2052 = vadd.xlane.f32.xlu0 %v2051
        %v2053 = vpop.xlane.xlu0 %2052
        %v2054 = vsel %vm782, %v2047, 0.0
        %2055 = vadd.xlane.f32.xlu0 %v2054
        %v2056 = vpop.xlane.xlu0 %2055
        %v2057 = vsel %vm780, %v2048, 0.0
        %2058 = vadd.xlane.f32.xlu0 %v2057
        %v2059 = vpop.xlane.xlu0 %2058
        %v2060 = vmul.f32 %v2053, %v799
        %v2061 = vmul.f32 %v2056, %v799
        %v2062 = vmul.f32 %v2059, %v799
        %v2063 = vsub.f32 %v2046, %v2060
        %v2064 = vsub.f32 %v2047, %v2061
        %v2065 = vsub.f32 %v2048, %v2062
        %v2066 = vmul.f32 %v2063, %v2063
        %v2067 = vmul.f32 %v2064, %v2064
        %v2068 = vmul.f32 %v2065, %v2065
        %v2069 = vsel %vm782, %v2066, 0.0
        %2070 = vadd.xlane.f32.xlu0 %v2069
        %v2071 = vpop.xlane.xlu0 %2070
        %v2072 = vsel %vm782, %v2067, 0.0
        %2073 = vadd.xlane.f32.xlu0 %v2072
        %v2074 = vpop.xlane.xlu0 %2073
        %v2075 = vsel %vm780, %v2068, 0.0
        %2076 = vadd.xlane.f32.xlu0 %v2075
        %v2077 = vpop.xlane.xlu0 %2076
        %v2078 = vmul.f32 %v2071, %v799
        %v2079 = vmul.f32 %v2074, %v799
        %v2080 = vmul.f32 %v2077, %v799
        %v2081 = vadd.f32 %v2078, 1e-06
        %v2082 = vadd.f32 %v2079, 1e-06
        %v2083 = vadd.f32 %v2080, 1e-06
        %v2084 = vrsqrt.pop %v2081
        %v2085 = vrsqrt.pop %v2082
        %v2086 = vrsqrt.pop %v2083
        %v2087 = vmul.f32 %v2063, %v2084
        %v2088 = vmul.f32 %v2064, %v2085
        %v2089 = vmul.f32 %v2065, %v2086
        %v2091 = vlaneseq
        %v2092 = vshrl.u32 %v2091, 7
        %v2093 = vsub.s32 0, %v2092
        %v2094 = vrot.slane %v2049, %v2093
        %v2096 = vmul.f32 %v2087, %v2094
        %v2097 = vmul.f32 %v2088, %v2094
        %v2098 = vmul.f32 %v2089, %v2094
        %v2100 = vlaneseq
        %v2101 = vshrl.u32 %v2100, 7
        %v2102 = vsub.s32 0, %v2101
        %v2103 = vrot.slane %v2050, %v2102
        %v2105 = vadd.f32 %v2096, %v2103
        %v2106 = vadd.f32 %v2097, %v2103
        %v2107 = vadd.f32 %v2098, %v2103
        %v2108 = vld [vmem:[%s13] sm:$0xff]
        %v2109 = vld [vmem:[%s13 + $0x8] sm:$0xff]
        %v2110 = vld [vmem:[%s13 + $0x10] sm:$0xff]
        %v2111 = vld [vmem:[%s13 + $0x18] sm:$0xff]
        %v2112 = vld [vmem:[%s14] sm:$0x1]
        %v2114 = vlaneseq
        %v2115 = vshrl.u32 %v2114, 7
        %v2116 = vsub.s32 0, %v2115
        %v2117 = vrot.slane %v2112, %v2116
        %v2120 = vsel %vm782, %v2105, 0
        %v2123 = vsel %vm782, %v2106, 0
        %v2126 = vsel %vm782, %v2107, 0
        %2128 = vmatprep.subr.mxu0 0.0
        %2129 = vmatpush1.msra.mxu0 0.0
        %2130 = vmatprep.subr.mxu0 0.0
        %2131 = vmatpush1.msra.mxu0 0.0
        %2132 = vmatprep.subr.mxu0 0.0
        %2133 = vmatpush1.msra.mxu0 0.0
        %2134 = vmatprep.subr.mxu0 0.0
        %2135 = vmatpush1.msra.mxu0 0.0
        %2136 = vmatprep.subr.mxu0 0.0
        %2137 = vmatpush1.msra.mxu0 0.0
        %2138 = vmatprep.subr.mxu0 0.0
        %2139 = vmatpush1.msra.mxu0 0.0
        %2140 = vmatprep.subr.mxu0 0.0
        %2141 = vmatpush1.msra.mxu0 0.0
        %2142 = vmatprep.subr.mxu0 0.0
        %2143 = vmatpush1.msra.mxu0 0.0
        %2144 = vmatprep.subr.mxu0 0.0
        %2145 = vmatpush1.msra.mxu0 0.0
        %2146 = vmatprep.subr.mxu0 0.0
        %2147 = vmatpush1.msra.mxu0 0.0
        %2148 = vmatprep.subr.mxu0 0.0
        %2149 = vmatpush1.msra.mxu0 0.0
        %2150 = vmatprep.subr.mxu0 0.0
        %2151 = vmatpush1.msra.mxu0 0.0
        %2152 = vmatprep.subr.mxu0 0.0
        %2153 = vmatpush1.msra.mxu0 %v2111
        %2154 = vmatprep.subr.mxu0 0.0
        %2155 = vmatpush1.msra.mxu0 %v2110
        %2156 = vmatprep.subr.mxu0 0.0
        %2157 = vmatpush1.msra.mxu0 %v2109
        %2158 = vmatprep.subr.mxu0 0.0
        %2159 = vmatpush1.msra.mxu0 %v2108
        %2160 = vmatprep.subr.mxu0 0.0
        %2161 = vmatpush2.msra.mxu0 0.0
        %2162 = vmatprep.subr.mxu0 0.0
        %2163 = vmatpush2.msra.mxu0 0.0
        %2164 = vmatprep.subr.mxu0 0.0
        %2165 = vmatpush2.msra.mxu0 0.0
        %2166 = vmatprep.subr.mxu0 0.0
        %2167 = vmatpush2.msra.mxu0 0.0
        %2168 = vmatprep.subr.mxu0 0.0
        %2169 = vmatpush2.msra.mxu0 0.0
        %2170 = vmatprep.subr.mxu0 0.0
        %2171 = vmatpush2.msra.mxu0 0.0
        %2172 = vmatprep.subr.mxu0 0.0
        %2173 = vmatpush2.msra.mxu0 0.0
        %2174 = vmatprep.subr.mxu0 0.0
        %2175 = vmatpush2.msra.mxu0 0.0
        %2176 = vmatprep.subr.mxu0 0.0
        %2177 = vmatpush2.msra.mxu0 0.0
        %2178 = vmatprep.subr.mxu0 0.0
        %2179 = vmatpush2.msra.mxu0 0.0
        %2180 = vmatprep.subr.mxu0 0.0
        %2181 = vmatpush2.msra.mxu0 0.0
        %2182 = vmatprep.subr.mxu0 0.0
        %2183 = vmatpush2.msra.mxu0 0.0
        %2184 = vmatprep.subr.mxu0 0.0
        %2185 = vmatpush2.msra.mxu0 0.0
        %2186 = vmatprep.subr.mxu0 0.0
        %2187 = vmatpush2.msra.mxu0 0.0
        %2188 = vmatprep.subr.mxu0 0.0
        %2189 = vmatpush2.msra.mxu0 0.0
        %2190 = vmatprep.subr.mxu0 0.0
        %2191 = vmatpush2.msra.mxu0 0.0
        %2192 = vmatprep.mubr.f32.mxu0 0.0
        %2193 = vmatmul.mubr.f32.gmra.mxu0 %v2120
        %v2194 = vpop.f32.mrf.mxu0
        %v2195 = vadd.f32 %v2117, %v2194
        %v2196 = vpop.f32.mrf.mxu0
        %2197 = vmatprep.mubr.f32.mxu0 0.0
        %2198 = vmatmul.mubr.f32.gmra.mxu0 %v2123
        %v2199 = vpop.f32.mrf.mxu0
        %v2200 = vadd.f32 %v2117, %v2199
        %v2201 = vpop.f32.mrf.mxu0
        %2202 = vmatprep.mubr.f32.mxu0 0.0
        %2203 = vmatmul.mubr.f32.gmra.mxu0 %v2126
        %v2204 = vpop.f32.mrf.mxu0
        %v2205 = vadd.f32 %v2117, %v2204
        %v2206 = vpop.f32.mrf.mxu0
        %2207 = vdwg.mxu0
        %v2208 = vmul.f32 %v2195, 0.5
        %v2209 = vmul.f32 %v2200, 0.5
        %v2210 = vmul.f32 %v2205, 0.5
        %v2211 = vmul.f32 %v2195, 0.044715
        %v2212 = vmul.f32 %v2200, 0.044715
        %v2213 = vmul.f32 %v2205, 0.044715
        %v2214 = vmul.f32 %v2211, %v2195
        %v2215 = vmul.f32 %v2212, %v2200
        %v2216 = vmul.f32 %v2213, %v2205
        %v2217 = vmul.f32 %v2214, %v2195
        %v2218 = vmul.f32 %v2215, %v2200
        %v2219 = vmul.f32 %v2216, %v2205
        %v2220 = vadd.f32 %v2195, %v2217
        %v2221 = vadd.f32 %v2200, %v2218
        %v2222 = vadd.f32 %v2205, %v2219
        %v2223 = vmul.f32 %v2220, 0.7978846
        %v2224 = vmul.f32 %v2221, 0.7978846
        %v2225 = vmul.f32 %v2222, 0.7978846
        %v2226 = vtanh.pop %v2223
        %v2227 = vtanh.pop %v2224
        %v2228 = vtanh.pop %v2225
        %v2229 = vadd.f32 %v2226, 1.0
        %v2230 = vadd.f32 %v2227, 1.0
        %v2231 = vadd.f32 %v2228, 1.0
        %v2232 = vmul.f32 %v2208, %v2229
        %v2233 = vmul.f32 %v2209, %v2230
        %v2234 = vmul.f32 %v2210, %v2231
        %v2235 = vld [vmem:[%s15] sm:$0xff]
        %v2236 = vld [vmem:[%s15 + $0x8] sm:$0xff]
        %v2237 = vld [vmem:[%s15 + $0x10] sm:$0xff]
        %v2238 = vld [vmem:[%s15 + $0x18] sm:$0xff]
        %v2239 = vld [vmem:[%s15 + $0x20] sm:$0xff]
        %v2240 = vld [vmem:[%s15 + $0x28] sm:$0xff]
        %v2241 = vld [vmem:[%s15 + $0x30] sm:$0xff]
        %v2242 = vld [vmem:[%s15 + $0x38] sm:$0xff]
        %v2243 = vld [vmem:[%s16] sm:$0x1]
        %v2245 = vlaneseq
        %v2246 = vshrl.u32 %v2245, 7
        %v2247 = vsub.s32 0, %v2246
        %v2248 = vrot.slane %v2243, %v2247
        %vm2250 = vcmask 523264
        %v2252 = vsel %vm2250, %v2232, 0
        %v2255 = vsel %vm2250, %v2233, 0
        %v2258 = vsel %vm2250, %v2234, 0
        %2260 = vmatprep.subr.mxu0 0.0
        %2261 = vmatpush1.msra.mxu0 0.0
        %2262 = vmatprep.subr.mxu0 0.0
        %2263 = vmatpush1.msra.mxu0 0.0
        %2264 = vmatprep.subr.mxu0 0.0
        %2265 = vmatpush1.msra.mxu0 0.0
        %2266 = vmatprep.subr.mxu0 0.0
        %2267 = vmatpush1.msra.mxu0 0.0
        %2268 = vmatprep.subr.mxu0 0.0
        %2269 = vmatpush1.msra.mxu0 0.0
        %2270 = vmatprep.subr.mxu0 0.0
        %2271 = vmatpush1.msra.mxu0 0.0
        %2272 = vmatprep.subr.mxu0 0.0
        %2273 = vmatpush1.msra.mxu0 0.0
        %2274 = vmatprep.subr.mxu0 0.0
        %2275 = vmatpush1.msra.mxu0 0.0
        %2276 = vmatprep.subr.mxu0 0.0
        %2277 = vmatpush1.msra.mxu0 %v2242
        %2278 = vmatprep.subr.mxu0 0.0
        %2279 = vmatpush1.msra.mxu0 %v2241
        %2280 = vmatprep.subr.mxu0 0.0
        %2281 = vmatpush1.msra.mxu0 %v2240
        %2282 = vmatprep.subr.mxu0 0.0
        %2283 = vmatpush1.msra.mxu0 %v2239
        %2284 = vmatprep.subr.mxu0 0.0
        %2285 = vmatpush1.msra.mxu0 %v2238
        %2286 = vmatprep.subr.mxu0 0.0
        %2287 = vmatpush1.msra.mxu0 %v2237
        %2288 = vmatprep.subr.mxu0 0.0
        %2289 = vmatpush1.msra.mxu0 %v2236
        %2290 = vmatprep.subr.mxu0 0.0
        %2291 = vmatpush1.msra.mxu0 %v2235
        %2292 = vmatprep.subr.mxu0 0.0
        %2293 = vmatpush2.msra.mxu0 0.0
        %2294 = vmatprep.subr.mxu0 0.0
        %2295 = vmatpush2.msra.mxu0 0.0
        %2296 = vmatprep.subr.mxu0 0.0
        %2297 = vmatpush2.msra.mxu0 0.0
        %2298 = vmatprep.subr.mxu0 0.0
        %2299 = vmatpush2.msra.mxu0 0.0
        %2300 = vmatprep.subr.mxu0 0.0
        %2301 = vmatpush2.msra.mxu0 0.0
        %2302 = vmatprep.subr.mxu0 0.0
        %2303 = vmatpush2.msra.mxu0 0.0
        %2304 = vmatprep.subr.mxu0 0.0
        %2305 = vmatpush2.msra.mxu0 0.0
        %2306 = vmatprep.subr.mxu0 0.0
        %2307 = vmatpush2.msra.mxu0 0.0
        %2308 = vmatprep.subr.mxu0 0.0
        %2309 = vmatpush2.msra.mxu0 0.0
        %2310 = vmatprep.subr.mxu0 0.0
        %2311 = vmatpush2.msra.mxu0 0.0
        %2312 = vmatprep.subr.mxu0 0.0
        %2313 = vmatpush2.msra.mxu0 0.0
        %2314 = vmatprep.subr.mxu0 0.0
        %2315 = vmatpush2.msra.mxu0 0.0
        %2316 = vmatprep.subr.mxu0 0.0
        %2317 = vmatpush2.msra.mxu0 0.0
        %2318 = vmatprep.subr.mxu0 0.0
        %2319 = vmatpush2.msra.mxu0 0.0
        %2320 = vmatprep.subr.mxu0 0.0
        %2321 = vmatpush2.msra.mxu0 0.0
        %2322 = vmatprep.subr.mxu0 0.0
        %2323 = vmatpush2.msra.mxu0 0.0
        %2324 = vmatprep.mubr.f32.mxu0 0.0
        %2325 = vmatmul.mubr.f32.gmra.mxu0 %v2252
        %v2326 = vpop.f32.mrf.mxu0
        %v2327 = vadd.f32 %v2248, %v2326
        %v2328 = vpop.f32.mrf.mxu0
        %2329 = vmatprep.mubr.f32.mxu0 0.0
        %2330 = vmatmul.mubr.f32.gmra.mxu0 %v2255
        %v2331 = vpop.f32.mrf.mxu0
        %v2332 = vadd.f32 %v2248, %v2331
        %v2333 = vpop.f32.mrf.mxu0
        %2334 = vmatprep.mubr.f32.mxu0 0.0
        %2335 = vmatmul.mubr.f32.gmra.mxu0 %v2258
        %v2336 = vpop.f32.mrf.mxu0
        %v2337 = vadd.f32 %v2248, %v2336
        %v2338 = vpop.f32.mrf.mxu0
        %2339 = vdwg.mxu0
        %v2340 = vadd.f32 %v2046, %v2327
        %v2341 = vadd.f32 %v2047, %v2332
        %v2342 = vadd.f32 %v2048, %v2337
        %vm2343 = vcmask 261121
        %2344 = vst.msk [vmem:[%s667 - $0x1] sm:$0xfe] %vm2343, %v2340
        %2345 = vst.msk [vmem:[%s667 + $0x7] sm:$0xff] %vm782, %v2341
        %2346 = vst.msk [vmem:[%s667 + $0xf] sm:$0x1] %vm780, %v2342
        %s2347 = scalar_lea.vmem %s5, 1
        %v2348 = vld [vmem:[%s2347] sm:$0x1]
        %s2349 = scalar_lea.vmem %s6, 1
        %v2350 = vld [vmem:[%s2349] sm:$0x1]
        %v2351 = vsel %vm782, %v2340, 0.0
        %2352 = vadd.xlane.f32.xlu0 %v2351
        %v2353 = vpop.xlane.xlu0 %2352
        %v2354 = vsel %vm782, %v2341, 0.0
        %2355 = vadd.xlane.f32.xlu0 %v2354
        %v2356 = vpop.xlane.xlu0 %2355
        %v2357 = vsel %vm780, %v2342, 0.0
        %2358 = vadd.xlane.f32.xlu0 %v2357
        %v2359 = vpop.xlane.xlu0 %2358
        %v2360 = vmul.f32 %v2353, %v799
        %v2361 = vmul.f32 %v2356, %v799
        %v2362 = vmul.f32 %v2359, %v799
        %v2363 = vsub.f32 %v2340, %v2360
        %v2364 = vsub.f32 %v2341, %v2361
        %v2365 = vsub.f32 %v2342, %v2362
        %v2366 = vmul.f32 %v2363, %v2363
        %v2367 = vmul.f32 %v2364, %v2364
        %v2368 = vmul.f32 %v2365, %v2365
        %v2369 = vsel %vm782, %v2366, 0.0
        %2370 = vadd.xlane.f32.xlu0 %v2369
        %v2371 = vpop.xlane.xlu0 %2370
        %v2372 = vsel %vm782, %v2367, 0.0
        %2373 = vadd.xlane.f32.xlu0 %v2372
        %v2374 = vpop.xlane.xlu0 %2373
        %v2375 = vsel %vm780, %v2368, 0.0
        %2376 = vadd.xlane.f32.xlu0 %v2375
        %v2377 = vpop.xlane.xlu0 %2376
        %v2378 = vmul.f32 %v2371, %v799
        %v2379 = vmul.f32 %v2374, %v799
        %v2380 = vmul.f32 %v2377, %v799
        %v2381 = vadd.f32 %v2378, 1e-06
        %v2382 = vadd.f32 %v2379, 1e-06
        %v2383 = vadd.f32 %v2380, 1e-06
        %v2384 = vrsqrt.pop %v2381
        %v2385 = vrsqrt.pop %v2382
        %v2386 = vrsqrt.pop %v2383
        %v2387 = vmul.f32 %v2363, %v2384
        %v2388 = vmul.f32 %v2364, %v2385
        %v2389 = vmul.f32 %v2365, %v2386
        %v2391 = vlaneseq
        %v2392 = vshrl.u32 %v2391, 7
        %v2393 = vsub.s32 0, %v2392
        %v2394 = vrot.slane %v2348, %v2393
        %v2396 = vmul.f32 %v2387, %v2394
        %v2397 = vmul.f32 %v2388, %v2394
        %v2398 = vmul.f32 %v2389, %v2394
        %v2400 = vlaneseq
        %v2401 = vshrl.u32 %v2400, 7
        %v2402 = vsub.s32 0, %v2401
        %v2403 = vrot.slane %v2350, %v2402
        %v2405 = vadd.f32 %v2396, %v2403
        %v2406 = vadd.f32 %v2397, %v2403
        %v2407 = vadd.f32 %v2398, %v2403
        %s2408 = scalar_lea.vmem %s7, 32
        %v2409 = vld [vmem:[%s2408] sm:$0xff]
        %v2410 = vld [vmem:[%s2408 + $0x8] sm:$0xff]
        %v2411 = vld [vmem:[%s2408 + $0x10] sm:$0xff]
        %v2412 = vld [vmem:[%s2408 + $0x18] sm:$0xff]
        %s2413 = scalar_lea.vmem %s8, 1
        %v2414 = vld [vmem:[%s2413] sm:$0x1]
        %v2416 = vlaneseq
        %v2417 = vshrl.u32 %v2416, 7
        %v2418 = vsub.s32 0, %v2417
        %v2419 = vrot.slane %v2414, %v2418
        %v2422 = vsel %vm782, %v2405, 0
        %v2425 = vsel %vm782, %v2406, 0
        %v2428 = vsel %vm782, %v2407, 0
        %2430 = vmatprep.subr.mxu0 0.0
        %2431 = vmatpush1.msra.mxu0 0.0
        %2432 = vmatprep.subr.mxu0 0.0
        %2433 = vmatpush1.msra.mxu0 0.0
        %2434 = vmatprep.subr.mxu0 0.0
        %2435 = vmatpush1.msra.mxu0 0.0
        %2436 = vmatprep.subr.mxu0 0.0
        %2437 = vmatpush1.msra.mxu0 0.0
        %2438 = vmatprep.subr.mxu0 0.0
        %2439 = vmatpush1.msra.mxu0 0.0
        %2440 = vmatprep.subr.mxu0 0.0
        %2441 = vmatpush1.msra.mxu0 0.0
        %2442 = vmatprep.subr.mxu0 0.0
        %2443 = vmatpush1.msra.mxu0 0.0
        %2444 = vmatprep.subr.mxu0 0.0
        %2445 = vmatpush1.msra.mxu0 0.0
        %2446 = vmatprep.subr.mxu0 0.0
        %2447 = vmatpush1.msra.mxu0 0.0
        %2448 = vmatprep.subr.mxu0 0.0
        %2449 = vmatpush1.msra.mxu0 0.0
        %2450 = vmatprep.subr.mxu0 0.0
        %2451 = vmatpush1.msra.mxu0 0.0
        %2452 = vmatprep.subr.mxu0 0.0
        %2453 = vmatpush1.msra.mxu0 0.0
        %2454 = vmatprep.subr.mxu0 0.0
        %2455 = vmatpush1.msra.mxu0 %v2412
        %2456 = vmatprep.subr.mxu0 0.0
        %2457 = vmatpush1.msra.mxu0 %v2411
        %2458 = vmatprep.subr.mxu0 0.0
        %2459 = vmatpush1.msra.mxu0 %v2410
        %2460 = vmatprep.subr.mxu0 0.0
        %2461 = vmatpush1.msra.mxu0 %v2409
        %2462 = vmatprep.subr.mxu0 0.0
        %2463 = vmatpush2.msra.mxu0 0.0
        %2464 = vmatprep.subr.mxu0 0.0
        %2465 = vmatpush2.msra.mxu0 0.0
        %2466 = vmatprep.subr.mxu0 0.0
        %2467 = vmatpush2.msra.mxu0 0.0
        %2468 = vmatprep.subr.mxu0 0.0
        %2469 = vmatpush2.msra.mxu0 0.0
        %2470 = vmatprep.subr.mxu0 0.0
        %2471 = vmatpush2.msra.mxu0 0.0
        %2472 = vmatprep.subr.mxu0 0.0
        %2473 = vmatpush2.msra.mxu0 0.0
        %2474 = vmatprep.subr.mxu0 0.0
        %2475 = vmatpush2.msra.mxu0 0.0
        %2476 = vmatprep.subr.mxu0 0.0
        %2477 = vmatpush2.msra.mxu0 0.0
        %2478 = vmatprep.subr.mxu0 0.0
        %2479 = vmatpush2.msra.mxu0 0.0
        %2480 = vmatprep.subr.mxu0 0.0
        %2481 = vmatpush2.msra.mxu0 0.0
        %2482 = vmatprep.subr.mxu0 0.0
        %2483 = vmatpush2.msra.mxu0 0.0
        %2484 = vmatprep.subr.mxu0 0.0
        %2485 = vmatpush2.msra.mxu0 0.0
        %2486 = vmatprep.subr.mxu0 0.0
        %2487 = vmatpush2.msra.mxu0 0.0
        %2488 = vmatprep.subr.mxu0 0.0
        %2489 = vmatpush2.msra.mxu0 0.0
        %2490 = vmatprep.subr.mxu0 0.0
        %2491 = vmatpush2.msra.mxu0 0.0
        %2492 = vmatprep.subr.mxu0 0.0
        %2493 = vmatpush2.msra.mxu0 0.0
        %2494 = vmatprep.mubr.f32.mxu0 0.0
        %2495 = vmatmul.mubr.f32.gmra.mxu0 %v2422
        %v2496 = vpop.f32.mrf.mxu0
        %v2497 = vadd.f32 %v2419, %v2496
        %v2498 = vpop.f32.mrf.mxu0
        %2499 = vmatprep.mubr.f32.mxu0 0.0
        %2500 = vmatmul.mubr.f32.gmra.mxu0 %v2425
        %v2501 = vpop.f32.mrf.mxu0
        %v2502 = vadd.f32 %v2419, %v2501
        %v2503 = vpop.f32.mrf.mxu0
        %2504 = vmatprep.mubr.f32.mxu0 0.0
        %2505 = vmatmul.mubr.f32.gmra.mxu0 %v2428
        %v2506 = vpop.f32.mrf.mxu0
        %v2507 = vadd.f32 %v2419, %v2506
        %v2508 = vpop.f32.mrf.mxu0
        %2509 = vdwg.mxu0
        %2513 = vrot.lane.b32.xlu0 %v2497, 96
        %v2514 = vpop.permute.xlu0 %2513
        %2515 = vrot.lane.b32.xlu0 %v2502, 96
        %v2516 = vpop.permute.xlu0 %2515
        %2517 = vrot.lane.b32.xlu0 %v2507, 96
        %v2518 = vpop.permute.xlu0 %2517
        %2522 = vst.msk [vmem:[%s677 - $0x1] sm:$0xfe] %vm2343, %v2514
        %2523 = vst.msk [vmem:[%s677 + $0x7] sm:$0xff] %vm782, %v2516
        %2524 = vst.msk [vmem:[%s677 + $0xf] sm:$0x1] %vm780, %v2518
        %v2525 = vmul.f32 %v2497, 0.35355338
        %v2526 = vmul.f32 %v2502, 0.35355338
        %v2527 = vmul.f32 %v2507, 0.35355338
        %v2529 = vsel %vm960, %v2525, 0
        %v2532 = vsel %vm960, %v2526, 0
        %v2535 = vsel %vm960, %v2527, 0
        %v2537 = vsel %vm960, %v2514, 0
        %v2539 = vsel %vm960, %v2516, 0
        %v2541 = vsel %vm960, %v2518, 0
        %2543 = vmatprep.subr.mxu0 0.0
        %2544 = vmatpush1.xpose.msra.mxu0 0.0
        %2545 = vmatprep.subr.mxu0 0.0
        %2546 = vmatpush1.xpose.msra.mxu0 0.0
        %2547 = vmatprep.subr.mxu0 0.0
        %2548 = vmatpush1.xpose.msra.mxu0 0.0
        %2549 = vmatprep.subr.mxu0 0.0
        %2550 = vmatpush1.xpose.msra.mxu0 0.0
        %2551 = vmatprep.subr.mxu0 0.0
        %2552 = vmatpush1.xpose.msra.mxu0 0.0
        %2553 = vmatprep.subr.mxu0 0.0
        %2554 = vmatpush1.xpose.msra.mxu0 0.0
        %2555 = vmatprep.subr.mxu0 0.0
        %2556 = vmatpush1.xpose.msra.mxu0 0.0
        %2557 = vmatprep.subr.mxu0 0.0
        %2558 = vmatpush1.xpose.msra.mxu0 0.0
        %2559 = vmatprep.subr.mxu0 0.0
        %2560 = vmatpush1.xpose.msra.mxu0 0.0
        %2561 = vmatprep.subr.mxu0 0.0
        %2562 = vmatpush1.xpose.msra.mxu0 0.0
        %2563 = vmatprep.subr.mxu0 0.0
        %2564 = vmatpush1.xpose.msra.mxu0 0.0
        %2565 = vmatprep.subr.mxu0 0.0
        %2566 = vmatpush1.xpose.msra.mxu0 0.0
        %2567 = vmatprep.subr.mxu0 0.0
        %2568 = vmatpush1.xpose.msra.mxu0 0.0
        %2569 = vmatprep.subr.mxu0 0.0
        %2570 = vmatpush1.xpose.msra.mxu0 %v2541
        %2571 = vmatprep.subr.mxu0 0.0
        %2572 = vmatpush1.xpose.msra.mxu0 %v2539
        %2573 = vmatprep.subr.mxu0 0.0
        %2574 = vmatpush1.xpose.msra.mxu0 %v2537
        %2575 = vmatprep.subr.mxu0 0.0
        %2576 = vmatpush2.xpose.msra.mxu0 0.0
        %2577 = vmatprep.subr.mxu0 0.0
        %2578 = vmatpush2.xpose.msra.mxu0 0.0
        %2579 = vmatprep.subr.mxu0 0.0
        %2580 = vmatpush2.xpose.msra.mxu0 0.0
        %2581 = vmatprep.subr.mxu0 0.0
        %2582 = vmatpush2.xpose.msra.mxu0 0.0
        %2583 = vmatprep.subr.mxu0 0.0
        %2584 = vmatpush2.xpose.msra.mxu0 0.0
        %2585 = vmatprep.subr.mxu0 0.0
        %2586 = vmatpush2.xpose.msra.mxu0 0.0
        %2587 = vmatprep.subr.mxu0 0.0
        %2588 = vmatpush2.xpose.msra.mxu0 0.0
        %2589 = vmatprep.subr.mxu0 0.0
        %2590 = vmatpush2.xpose.msra.mxu0 0.0
        %2591 = vmatprep.subr.mxu0 0.0
        %2592 = vmatpush2.xpose.msra.mxu0 0.0
        %2593 = vmatprep.subr.mxu0 0.0
        %2594 = vmatpush2.xpose.msra.mxu0 0.0
        %2595 = vmatprep.subr.mxu0 0.0
        %2596 = vmatpush2.xpose.msra.mxu0 0.0
        %2597 = vmatprep.subr.mxu0 0.0
        %2598 = vmatpush2.xpose.msra.mxu0 0.0
        %2599 = vmatprep.subr.mxu0 0.0
        %2600 = vmatpush2.xpose.msra.mxu0 0.0
        %2601 = vmatprep.subr.mxu0 0.0
        %2602 = vmatpush2.xpose.msra.mxu0 0.0
        %2603 = vmatprep.subr.mxu0 0.0
        %2604 = vmatpush2.xpose.msra.mxu0 0.0
        %2605 = vmatprep.subr.mxu0 0.0
        %2606 = vmatpush2.xpose.msra.mxu0 0.0
        %2607 = vmatprep.mubr.f32.mxu0 0.0
        %2608 = vmatmul.mubr.f32.gmra.mxu0 %v2529
        %v2609 = vpop.f32.mrf.mxu0
        %v2610 = vadd.f32 0.0, %v2609
        %v2611 = vpop.f32.mrf.mxu0
        %2612 = vmatprep.mubr.f32.mxu0 0.0
        %2613 = vmatmul.mubr.f32.gmra.mxu0 %v2532
        %v2614 = vpop.f32.mrf.mxu0
        %v2615 = vadd.f32 0.0, %v2614
        %v2616 = vpop.f32.mrf.mxu0
        %2617 = vmatprep.mubr.f32.mxu0 0.0
        %2618 = vmatmul.mubr.f32.gmra.mxu0 %v2535
        %v2619 = vpop.f32.mrf.mxu0
        %v2620 = vadd.f32 0.0, %v2619
        %v2621 = vpop.f32.mrf.mxu0
        %2622 = vdwg.mxu0
        %v2623 = vsel %vm1056, %v2610, -inf
        %2624 = vmax.xlane.f32.xlu0 %v2623
        %v2625 = vpop.xlane.xlu0 %2624
        %v2626 = vsel %vm1056, %v2615, -inf
        %2627 = vmax.xlane.f32.xlu0 %v2626
        %v2628 = vpop.xlane.xlu0 %2627
        %v2629 = vsel %vm1063, %v2620, -inf
        %2630 = vmax.xlane.f32.xlu0 %v2629
        %v2631 = vpop.xlane.xlu0 %2630
        %v2632 = vsub.f32 %v2610, %v2625
        %v2633 = vsub.f32 %v2615, %v2628
        %v2634 = vsub.f32 %v2620, %v2631
        %v2635 = vmul.f32 %v2632, 1.442695
        %v2636 = vpow.pop %v2635
        %v2637 = vmul.f32 %v2633, 1.442695
        %v2638 = vpow.pop %v2637
        %v2639 = vmul.f32 %v2634, 1.442695
        %v2640 = vpow.pop %v2639
        %v2641 = vsel %vm1056, %v2636, 0.0
        %2642 = vadd.xlane.f32.xlu0 %v2641
        %v2643 = vpop.xlane.xlu0 %2642
        %v2644 = vsel %vm1056, %v2638, 0.0
        %2645 = vadd.xlane.f32.xlu0 %v2644
        %v2646 = vpop.xlane.xlu0 %2645
        %v2647 = vsel %vm1063, %v2640, 0.0
        %2648 = vadd.xlane.f32.xlu0 %v2647
        %v2649 = vpop.xlane.xlu0 %2648
        %v2650 = vrcp.pop %v2643
        %v2651 = vrcp.pop %v2646
        %v2652 = vrcp.pop %v2649
        %v2653 = vmul.f32 %v2636, %v2650
        %v2654 = vmul.f32 %v2638, %v2651
        %v2655 = vmul.f32 %v2640, %v2652
        %2656 = vrot.lane.b32.xlu0 %v2497, 64
        %v2657 = vpop.permute.xlu0 %2656
        %2658 = vrot.lane.b32.xlu0 %v2502, 64
        %v2659 = vpop.permute.xlu0 %2658
        %2660 = vrot.lane.b32.xlu0 %v2507, 64
        %v2661 = vpop.permute.xlu0 %2660
        %v2665 = vsel %vm1056, %v2653, 0
        %v2668 = vsel %vm1056, %v2654, 0
        %v2671 = vsel %vm1056, %v2655, 0
        %v2673 = vsel %vm1108, %v2661, 0
        %2675 = vmatprep.subr.mxu0 0.0
        %2676 = vmatpush1.msra.mxu0 0.0
        %2677 = vmatprep.subr.mxu0 0.0
        %2678 = vmatpush1.msra.mxu0 0.0
        %2679 = vmatprep.subr.mxu0 0.0
        %2680 = vmatpush1.msra.mxu0 0.0
        %2681 = vmatprep.subr.mxu0 0.0
        %2682 = vmatpush1.msra.mxu0 0.0
        %2683 = vmatprep.subr.mxu0 0.0
        %2684 = vmatpush1.msra.mxu0 0.0
        %2685 = vmatprep.subr.mxu0 0.0
        %2686 = vmatpush1.msra.mxu0 0.0
        %2687 = vmatprep.subr.mxu0 0.0
        %2688 = vmatpush1.msra.mxu0 0.0
        %2689 = vmatprep.subr.mxu0 0.0
        %2690 = vmatpush1.msra.mxu0 0.0
        %2691 = vmatprep.subr.mxu0 0.0
        %2692 = vmatpush1.msra.mxu0 0.0
        %2693 = vmatprep.subr.mxu0 0.0
        %2694 = vmatpush1.msra.mxu0 0.0
        %2695 = vmatprep.subr.mxu0 0.0
        %2696 = vmatpush1.msra.mxu0 0.0
        %2697 = vmatprep.subr.mxu0 0.0
        %2698 = vmatpush1.msra.mxu0 0.0
        %2699 = vmatprep.subr.mxu0 0.0
        %2700 = vmatpush1.msra.mxu0 0.0
        %2701 = vmatprep.subr.mxu0 0.0
        %2702 = vmatpush1.msra.mxu0 %v2673
        %2703 = vmatprep.subr.mxu0 0.0
        %2704 = vmatpush1.msra.mxu0 %v2659
        %2705 = vmatprep.subr.mxu0 0.0
        %2706 = vmatpush1.msra.mxu0 %v2657
        %2707 = vmatprep.subr.mxu0 0.0
        %2708 = vmatpush2.msra.mxu0 0.0
        %2709 = vmatprep.subr.mxu0 0.0
        %2710 = vmatpush2.msra.mxu0 0.0
        %2711 = vmatprep.subr.mxu0 0.0
        %2712 = vmatpush2.msra.mxu0 0.0
        %2713 = vmatprep.subr.mxu0 0.0
        %2714 = vmatpush2.msra.mxu0 0.0
        %2715 = vmatprep.subr.mxu0 0.0
        %2716 = vmatpush2.msra.mxu0 0.0
        %2717 = vmatprep.subr.mxu0 0.0
        %2718 = vmatpush2.msra.mxu0 0.0
        %2719 = vmatprep.subr.mxu0 0.0
        %2720 = vmatpush2.msra.mxu0 0.0
        %2721 = vmatprep.subr.mxu0 0.0
        %2722 = vmatpush2.msra.mxu0 0.0
        %2723 = vmatprep.subr.mxu0 0.0
        %2724 = vmatpush2.msra.mxu0 0.0
        %2725 = vmatprep.subr.mxu0 0.0
        %2726 = vmatpush2.msra.mxu0 0.0
        %2727 = vmatprep.subr.mxu0 0.0
        %2728 = vmatpush2.msra.mxu0 0.0
        %2729 = vmatprep.subr.mxu0 0.0
        %2730 = vmatpush2.msra.mxu0 0.0
        %2731 = vmatprep.subr.mxu0 0.0
        %2732 = vmatpush2.msra.mxu0 0.0
        %2733 = vmatprep.subr.mxu0 0.0
        %2734 = vmatpush2.msra.mxu0 0.0
        %2735 = vmatprep.subr.mxu0 0.0
        %2736 = vmatpush2.msra.mxu0 0.0
        %2737 = vmatprep.subr.mxu0 0.0
        %2738 = vmatpush2.msra.mxu0 0.0
        %2739 = vmatprep.mubr.f32.mxu0 0.0
        %2740 = vmatmul.mubr.f32.gmra.mxu0 %v2665
        %v2741 = vpop.f32.mrf.mxu0
        %v2742 = vadd.f32 0.0, %v2741
        %v2743 = vpop.f32.mrf.mxu0
        %2744 = vmatprep.mubr.f32.mxu0 0.0
        %2745 = vmatmul.mubr.f32.gmra.mxu0 %v2668
        %v2746 = vpop.f32.mrf.mxu0
        %v2747 = vadd.f32 0.0, %v2746
        %v2748 = vpop.f32.mrf.mxu0
        %2749 = vmatprep.mubr.f32.mxu0 0.0
        %2750 = vmatmul.mubr.f32.gmra.mxu0 %v2671
        %v2751 = vpop.f32.mrf.mxu0
        %v2752 = vadd.f32 0.0, %v2751
        %v2753 = vpop.f32.mrf.mxu0
        %2754 = vdwg.mxu0
        %2755 = vrot.lane.b32.xlu0 %v2525, 120
        %v2756 = vpop.permute.xlu0 %2755
        %2757 = vrot.lane.b32.xlu0 %v2526, 120
        %v2758 = vpop.permute.xlu0 %2757
        %2759 = vrot.lane.b32.xlu0 %v2527, 120
        %v2760 = vpop.permute.xlu0 %2759
        %2761 = vrot.lane.b32.xlu0 %v2497, 88
        %v2762 = vpop.permute.xlu0 %2761
        %2763 = vrot.lane.b32.xlu0 %v2502, 88
        %v2764 = vpop.permute.xlu0 %2763
        %2765 = vrot.lane.b32.xlu0 %v2507, 88
        %v2766 = vpop.permute.xlu0 %2765
        %v2767 = vsel %vm960, %v2756, 0
        %v2769 = vsel %vm960, %v2758, 0
        %v2771 = vsel %vm960, %v2760, 0
        %v2773 = vsel %vm960, %v2762, 0
        %v2775 = vsel %vm960, %v2764, 0
        %v2777 = vsel %vm960, %v2766, 0
        %2779 = vmatprep.subr.mxu0 0.0
        %2780 = vmatpush1.xpose.msra.mxu0 0.0
        %2781 = vmatprep.subr.mxu0 0.0
        %2782 = vmatpush1.xpose.msra.mxu0 0.0
        %2783 = vmatprep.subr.mxu0 0.0
        %2784 = vmatpush1.xpose.msra.mxu0 0.0
        %2785 = vmatprep.subr.mxu0 0.0
        %2786 = vmatpush1.xpose.msra.mxu0 0.0
        %2787 = vmatprep.subr.mxu0 0.0
        %2788 = vmatpush1.xpose.msra.mxu0 0.0
        %2789 = vmatprep.subr.mxu0 0.0
        %2790 = vmatpush1.xpose.msra.mxu0 0.0
        %2791 = vmatprep.subr.mxu0 0.0
        %2792 = vmatpush1.xpose.msra.mxu0 0.0
        %2793 = vmatprep.subr.mxu0 0.0
        %2794 = vmatpush1.xpose.msra.mxu0 0.0
        %2795 = vmatprep.subr.mxu0 0.0
        %2796 = vmatpush1.xpose.msra.mxu0 0.0
        %2797 = vmatprep.subr.mxu0 0.0
        %2798 = vmatpush1.xpose.msra.mxu0 0.0
        %2799 = vmatprep.subr.mxu0 0.0
        %2800 = vmatpush1.xpose.msra.mxu0 0.0
        %2801 = vmatprep.subr.mxu0 0.0
        %2802 = vmatpush1.xpose.msra.mxu0 0.0
        %2803 = vmatprep.subr.mxu0 0.0
        %2804 = vmatpush1.xpose.msra.mxu0 0.0
        %2805 = vmatprep.subr.mxu0 0.0
        %2806 = vmatpush1.xpose.msra.mxu0 %v2777
        %2807 = vmatprep.subr.mxu0 0.0
        %2808 = vmatpush1.xpose.msra.mxu0 %v2775
        %2809 = vmatprep.subr.mxu0 0.0
        %2810 = vmatpush1.xpose.msra.mxu0 %v2773
        %2811 = vmatprep.subr.mxu0 0.0
        %2812 = vmatpush2.xpose.msra.mxu0 0.0
        %2813 = vmatprep.subr.mxu0 0.0
        %2814 = vmatpush2.xpose.msra.mxu0 0.0
        %2815 = vmatprep.subr.mxu0 0.0
        %2816 = vmatpush2.xpose.msra.mxu0 0.0
        %2817 = vmatprep.subr.mxu0 0.0
        %2818 = vmatpush2.xpose.msra.mxu0 0.0
        %2819 = vmatprep.subr.mxu0 0.0
        %2820 = vmatpush2.xpose.msra.mxu0 0.0
        %2821 = vmatprep.subr.mxu0 0.0
        %2822 = vmatpush2.xpose.msra.mxu0 0.0
        %2823 = vmatprep.subr.mxu0 0.0
        %2824 = vmatpush2.xpose.msra.mxu0 0.0
        %2825 = vmatprep.subr.mxu0 0.0
        %2826 = vmatpush2.xpose.msra.mxu0 0.0
        %2827 = vmatprep.subr.mxu0 0.0
        %2828 = vmatpush2.xpose.msra.mxu0 0.0
        %2829 = vmatprep.subr.mxu0 0.0
        %2830 = vmatpush2.xpose.msra.mxu0 0.0
        %2831 = vmatprep.subr.mxu0 0.0
        %2832 = vmatpush2.xpose.msra.mxu0 0.0
        %2833 = vmatprep.subr.mxu0 0.0
        %2834 = vmatpush2.xpose.msra.mxu0 0.0
        %2835 = vmatprep.subr.mxu0 0.0
        %2836 = vmatpush2.xpose.msra.mxu0 0.0
        %2837 = vmatprep.subr.mxu0 0.0
        %2838 = vmatpush2.xpose.msra.mxu0 0.0
        %2839 = vmatprep.subr.mxu0 0.0
        %2840 = vmatpush2.xpose.msra.mxu0 0.0
        %2841 = vmatprep.subr.mxu0 0.0
        %2842 = vmatpush2.xpose.msra.mxu0 0.0
        %2843 = vmatprep.mubr.f32.mxu0 0.0
        %2844 = vmatmul.mubr.f32.gmra.mxu0 %v2767
        %v2845 = vpop.f32.mrf.mxu0
        %v2846 = vadd.f32 0.0, %v2845
        %v2847 = vpop.f32.mrf.mxu0
        %2848 = vmatprep.mubr.f32.mxu0 0.0
        %2849 = vmatmul.mubr.f32.gmra.mxu0 %v2769
        %v2850 = vpop.f32.mrf.mxu0
        %v2851 = vadd.f32 0.0, %v2850
        %v2852 = vpop.f32.mrf.mxu0
        %2853 = vmatprep.mubr.f32.mxu0 0.0
        %2854 = vmatmul.mubr.f32.gmra.mxu0 %v2771
        %v2855 = vpop.f32.mrf.mxu0
        %v2856 = vadd.f32 0.0, %v2855
        %v2857 = vpop.f32.mrf.mxu0
        %2858 = vdwg.mxu0
        %v2859 = vsel %vm1056, %v2846, -inf
        %2860 = vmax.xlane.f32.xlu0 %v2859
        %v2861 = vpop.xlane.xlu0 %2860
        %v2862 = vsel %vm1056, %v2851, -inf
        %2863 = vmax.xlane.f32.xlu0 %v2862
        %v2864 = vpop.xlane.xlu0 %2863
        %v2865 = vsel %vm1063, %v2856, -inf
        %2866 = vmax.xlane.f32.xlu0 %v2865
        %v2867 = vpop.xlane.xlu0 %2866
        %v2868 = vsub.f32 %v2846, %v2861
        %v2869 = vsub.f32 %v2851, %v2864
        %v2870 = vsub.f32 %v2856, %v2867
        %v2871 = vmul.f32 %v2868, 1.442695
        %v2872 = vpow.pop %v2871
        %v2873 = vmul.f32 %v2869, 1.442695
        %v2874 = vpow.pop %v2873
        %v2875 = vmul.f32 %v2870, 1.442695
        %v2876 = vpow.pop %v2875
        %v2877 = vsel %vm1056, %v2872, 0.0
        %2878 = vadd.xlane.f32.xlu0 %v2877
        %v2879 = vpop.xlane.xlu0 %2878
        %v2880 = vsel %vm1056, %v2874, 0.0
        %2881 = vadd.xlane.f32.xlu0 %v2880
        %v2882 = vpop.xlane.xlu0 %2881
        %v2883 = vsel %vm1063, %v2876, 0.0
        %2884 = vadd.xlane.f32.xlu0 %v2883
        %v2885 = vpop.xlane.xlu0 %2884
        %v2886 = vrcp.pop %v2879
        %v2887 = vrcp.pop %v2882
        %v2888 = vrcp.pop %v2885
        %v2889 = vmul.f32 %v2872, %v2886
        %v2890 = vmul.f32 %v2874, %v2887
        %v2891 = vmul.f32 %v2876, %v2888
        %2892 = vrot.lane.b32.xlu0 %v2497, 56
        %v2893 = vpop.permute.xlu0 %2892
        %2894 = vrot.lane.b32.xlu0 %v2502, 56
        %v2895 = vpop.permute.xlu0 %2894
        %2896 = vrot.lane.b32.xlu0 %v2507, 56
        %v2897 = vpop.permute.xlu0 %2896
        %v2901 = vsel %vm1056, %v2889, 0
        %v2904 = vsel %vm1056, %v2890, 0
        %v2907 = vsel %vm1056, %v2891, 0
        %v2909 = vsel %vm1108, %v2897, 0
        %2911 = vmatprep.subr.mxu0 0.0
        %2912 = vmatpush1.msra.mxu0 0.0
        %2913 = vmatprep.subr.mxu0 0.0
        %2914 = vmatpush1.msra.mxu0 0.0
        %2915 = vmatprep.subr.mxu0 0.0
        %2916 = vmatpush1.msra.mxu0 0.0
        %2917 = vmatprep.subr.mxu0 0.0
        %2918 = vmatpush1.msra.mxu0 0.0
        %2919 = vmatprep.subr.mxu0 0.0
        %2920 = vmatpush1.msra.mxu0 0.0
        %2921 = vmatprep.subr.mxu0 0.0
        %2922 = vmatpush1.msra.mxu0 0.0
        %2923 = vmatprep.subr.mxu0 0.0
        %2924 = vmatpush1.msra.mxu0 0.0
        %2925 = vmatprep.subr.mxu0 0.0
        %2926 = vmatpush1.msra.mxu0 0.0
        %2927 = vmatprep.subr.mxu0 0.0
        %2928 = vmatpush1.msra.mxu0 0.0
        %2929 = vmatprep.subr.mxu0 0.0
        %2930 = vmatpush1.msra.mxu0 0.0
        %2931 = vmatprep.subr.mxu0 0.0
        %2932 = vmatpush1.msra.mxu0 0.0
        %2933 = vmatprep.subr.mxu0 0.0
        %2934 = vmatpush1.msra.mxu0 0.0
        %2935 = vmatprep.subr.mxu0 0.0
        %2936 = vmatpush1.msra.mxu0 0.0
        %2937 = vmatprep.subr.mxu0 0.0
        %2938 = vmatpush1.msra.mxu0 %v2909
        %2939 = vmatprep.subr.mxu0 0.0
        %2940 = vmatpush1.msra.mxu0 %v2895
        %2941 = vmatprep.subr.mxu0 0.0
        %2942 = vmatpush1.msra.mxu0 %v2893
        %2943 = vmatprep.subr.mxu0 0.0
        %2944 = vmatpush2.msra.mxu0 0.0
        %2945 = vmatprep.subr.mxu0 0.0
        %2946 = vmatpush2.msra.mxu0 0.0
        %2947 = vmatprep.subr.mxu0 0.0
        %2948 = vmatpush2.msra.mxu0 0.0
        %2949 = vmatprep.subr.mxu0 0.0
        %2950 = vmatpush2.msra.mxu0 0.0
        %2951 = vmatprep.subr.mxu0 0.0
        %2952 = vmatpush2.msra.mxu0 0.0
        %2953 = vmatprep.subr.mxu0 0.0
        %2954 = vmatpush2.msra.mxu0 0.0
        %2955 = vmatprep.subr.mxu0 0.0
        %2956 = vmatpush2.msra.mxu0 0.0
        %2957 = vmatprep.subr.mxu0 0.0
        %2958 = vmatpush2.msra.mxu0 0.0
        %2959 = vmatprep.subr.mxu0 0.0
        %2960 = vmatpush2.msra.mxu0 0.0
        %2961 = vmatprep.subr.mxu0 0.0
        %2962 = vmatpush2.msra.mxu0 0.0
        %2963 = vmatprep.subr.mxu0 0.0
        %2964 = vmatpush2.msra.mxu0 0.0
        %2965 = vmatprep.subr.mxu0 0.0
        %2966 = vmatpush2.msra.mxu0 0.0
        %2967 = vmatprep.subr.mxu0 0.0
        %2968 = vmatpush2.msra.mxu0 0.0
        %2969 = vmatprep.subr.mxu0 0.0
        %2970 = vmatpush2.msra.mxu0 0.0
        %2971 = vmatprep.subr.mxu0 0.0
        %2972 = vmatpush2.msra.mxu0 0.0
        %2973 = vmatprep.subr.mxu0 0.0
        %2974 = vmatpush2.msra.mxu0 0.0
        %2975 = vmatprep.mubr.f32.mxu0 0.0
        %2976 = vmatmul.mubr.f32.gmra.mxu0 %v2901
        %v2977 = vpop.f32.mrf.mxu0
        %v2978 = vadd.f32 0.0, %v2977
        %v2979 = vpop.f32.mrf.mxu0
        %2980 = vmatprep.mubr.f32.mxu0 0.0
        %2981 = vmatmul.mubr.f32.gmra.mxu0 %v2904
        %v2982 = vpop.f32.mrf.mxu0
        %v2983 = vadd.f32 0.0, %v2982
        %v2984 = vpop.f32.mrf.mxu0
        %2985 = vmatprep.mubr.f32.mxu0 0.0
        %2986 = vmatmul.mubr.f32.gmra.mxu0 %v2907
        %v2987 = vpop.f32.mrf.mxu0
        %v2988 = vadd.f32 0.0, %v2987
        %v2989 = vpop.f32.mrf.mxu0
        %2990 = vdwg.mxu0
        %2991 = vrot.lane.b32.xlu0 %v2525, 112
        %v2992 = vpop.permute.xlu0 %2991
        %2993 = vrot.lane.b32.xlu0 %v2526, 112
        %v2994 = vpop.permute.xlu0 %2993
        %2995 = vrot.lane.b32.xlu0 %v2527, 112
        %v2996 = vpop.permute.xlu0 %2995
        %2997 = vrot.lane.b32.xlu0 %v2497, 80
        %v2998 = vpop.permute.xlu0 %2997
        %2999 = vrot.lane.b32.xlu0 %v2502, 80
        %v3000 = vpop.permute.xlu0 %2999
        %3001 = vrot.lane.b32.xlu0 %v2507, 80
        %v3002 = vpop.permute.xlu0 %3001
        %v3003 = vsel %vm960, %v2992, 0
        %v3005 = vsel %vm960, %v2994, 0
        %v3007 = vsel %vm960, %v2996, 0
        %v3009 = vsel %vm960, %v2998, 0
        %v3011 = vsel %vm960, %v3000, 0
        %v3013 = vsel %vm960, %v3002, 0
        %3015 = vmatprep.subr.mxu0 0.0
        %3016 = vmatpush1.xpose.msra.mxu0 0.0
        %3017 = vmatprep.subr.mxu0 0.0
        %3018 = vmatpush1.xpose.msra.mxu0 0.0
        %3019 = vmatprep.subr.mxu0 0.0
        %3020 = vmatpush1.xpose.msra.mxu0 0.0
        %3021 = vmatprep.subr.mxu0 0.0
        %3022 = vmatpush1.xpose.msra.mxu0 0.0
        %3023 = vmatprep.subr.mxu0 0.0
        %3024 = vmatpush1.xpose.msra.mxu0 0.0
        %3025 = vmatprep.subr.mxu0 0.0
        %3026 = vmatpush1.xpose.msra.mxu0 0.0
        %3027 = vmatprep.subr.mxu0 0.0
        %3028 = vmatpush1.xpose.msra.mxu0 0.0
        %3029 = vmatprep.subr.mxu0 0.0
        %3030 = vmatpush1.xpose.msra.mxu0 0.0
        %3031 = vmatprep.subr.mxu0 0.0
        %3032 = vmatpush1.xpose.msra.mxu0 0.0
        %3033 = vmatprep.subr.mxu0 0.0
        %3034 = vmatpush1.xpose.msra.mxu0 0.0
        %3035 = vmatprep.subr.mxu0 0.0
        %3036 = vmatpush1.xpose.msra.mxu0 0.0
        %3037 = vmatprep.subr.mxu0 0.0
        %3038 = vmatpush1.xpose.msra.mxu0 0.0
        %3039 = vmatprep.subr.mxu0 0.0
        %3040 = vmatpush1.xpose.msra.mxu0 0.0
        %3041 = vmatprep.subr.mxu0 0.0
        %3042 = vmatpush1.xpose.msra.mxu0 %v3013
        %3043 = vmatprep.subr.mxu0 0.0
        %3044 = vmatpush1.xpose.msra.mxu0 %v3011
        %3045 = vmatprep.subr.mxu0 0.0
        %3046 = vmatpush1.xpose.msra.mxu0 %v3009
        %3047 = vmatprep.subr.mxu0 0.0
        %3048 = vmatpush2.xpose.msra.mxu0 0.0
        %3049 = vmatprep.subr.mxu0 0.0
        %3050 = vmatpush2.xpose.msra.mxu0 0.0
        %3051 = vmatprep.subr.mxu0 0.0
        %3052 = vmatpush2.xpose.msra.mxu0 0.0
        %3053 = vmatprep.subr.mxu0 0.0
        %3054 = vmatpush2.xpose.msra.mxu0 0.0
        %3055 = vmatprep.subr.mxu0 0.0
        %3056 = vmatpush2.xpose.msra.mxu0 0.0
        %3057 = vmatprep.subr.mxu0 0.0
        %3058 = vmatpush2.xpose.msra.mxu0 0.0
        %3059 = vmatprep.subr.mxu0 0.0
        %3060 = vmatpush2.xpose.msra.mxu0 0.0
        %3061 = vmatprep.subr.mxu0 0.0
        %3062 = vmatpush2.xpose.msra.mxu0 0.0
        %3063 = vmatprep.subr.mxu0 0.0
        %3064 = vmatpush2.xpose.msra.mxu0 0.0
        %3065 = vmatprep.subr.mxu0 0.0
        %3066 = vmatpush2.xpose.msra.mxu0 0.0
        %3067 = vmatprep.subr.mxu0 0.0
        %3068 = vmatpush2.xpose.msra.mxu0 0.0
        %3069 = vmatprep.subr.mxu0 0.0
        %3070 = vmatpush2.xpose.msra.mxu0 0.0
        %3071 = vmatprep.subr.mxu0 0.0
        %3072 = vmatpush2.xpose.msra.mxu0 0.0
        %3073 = vmatprep.subr.mxu0 0.0
        %3074 = vmatpush2.xpose.msra.mxu0 0.0
        %3075 = vmatprep.subr.mxu0 0.0
        %3076 = vmatpush2.xpose.msra.mxu0 0.0
        %3077 = vmatprep.subr.mxu0 0.0
        %3078 = vmatpush2.xpose.msra.mxu0 0.0
        %3079 = vmatprep.mubr.f32.mxu0 0.0
        %3080 = vmatmul.mubr.f32.gmra.mxu0 %v3003
        %v3081 = vpop.f32.mrf.mxu0
        %v3082 = vadd.f32 0.0, %v3081
        %v3083 = vpop.f32.mrf.mxu0
        %3084 = vmatprep.mubr.f32.mxu0 0.0
        %3085 = vmatmul.mubr.f32.gmra.mxu0 %v3005
        %v3086 = vpop.f32.mrf.mxu0
        %v3087 = vadd.f32 0.0, %v3086
        %v3088 = vpop.f32.mrf.mxu0
        %3089 = vmatprep.mubr.f32.mxu0 0.0
        %3090 = vmatmul.mubr.f32.gmra.mxu0 %v3007
        %v3091 = vpop.f32.mrf.mxu0
        %v3092 = vadd.f32 0.0, %v3091
        %v3093 = vpop.f32.mrf.mxu0
        %3094 = vdwg.mxu0
        %v3095 = vsel %vm1056, %v3082, -inf
        %3096 = vmax.xlane.f32.xlu0 %v3095
        %v3097 = vpop.xlane.xlu0 %3096
        %v3098 = vsel %vm1056, %v3087, -inf
        %3099 = vmax.xlane.f32.xlu0 %v3098
        %v3100 = vpop.xlane.xlu0 %3099
        %v3101 = vsel %vm1063, %v3092, -inf
        %3102 = vmax.xlane.f32.xlu0 %v3101
        %v3103 = vpop.xlane.xlu0 %3102
        %v3104 = vsub.f32 %v3082, %v3097
        %v3105 = vsub.f32 %v3087, %v3100
        %v3106 = vsub.f32 %v3092, %v3103
        %v3107 = vmul.f32 %v3104, 1.442695
        %v3108 = vpow.pop %v3107
        %v3109 = vmul.f32 %v3105, 1.442695
        %v3110 = vpow.pop %v3109
        %v3111 = vmul.f32 %v3106, 1.442695
        %v3112 = vpow.pop %v3111
        %v3113 = vsel %vm1056, %v3108, 0.0
        %3114 = vadd.xlane.f32.xlu0 %v3113
        %v3115 = vpop.xlane.xlu0 %3114
        %v3116 = vsel %vm1056, %v3110, 0.0
        %3117 = vadd.xlane.f32.xlu0 %v3116
        %v3118 = vpop.xlane.xlu0 %3117
        %v3119 = vsel %vm1063, %v3112, 0.0
        %3120 = vadd.xlane.f32.xlu0 %v3119
        %v3121 = vpop.xlane.xlu0 %3120
        %v3122 = vrcp.pop %v3115
        %v3123 = vrcp.pop %v3118
        %v3124 = vrcp.pop %v3121
        %v3125 = vmul.f32 %v3108, %v3122
        %v3126 = vmul.f32 %v3110, %v3123
        %v3127 = vmul.f32 %v3112, %v3124
        %3128 = vrot.lane.b32.xlu0 %v2497, 48
        %v3129 = vpop.permute.xlu0 %3128
        %3130 = vrot.lane.b32.xlu0 %v2502, 48
        %v3131 = vpop.permute.xlu0 %3130
        %3132 = vrot.lane.b32.xlu0 %v2507, 48
        %v3133 = vpop.permute.xlu0 %3132
        %v3137 = vsel %vm1056, %v3125, 0
        %v3140 = vsel %vm1056, %v3126, 0
        %v3143 = vsel %vm1056, %v3127, 0
        %v3145 = vsel %vm1108, %v3133, 0
        %3147 = vmatprep.subr.mxu0 0.0
        %3148 = vmatpush1.msra.mxu0 0.0
        %3149 = vmatprep.subr.mxu0 0.0
        %3150 = vmatpush1.msra.mxu0 0.0
        %3151 = vmatprep.subr.mxu0 0.0
        %3152 = vmatpush1.msra.mxu0 0.0
        %3153 = vmatprep.subr.mxu0 0.0
        %3154 = vmatpush1.msra.mxu0 0.0
        %3155 = vmatprep.subr.mxu0 0.0
        %3156 = vmatpush1.msra.mxu0 0.0
        %3157 = vmatprep.subr.mxu0 0.0
        %3158 = vmatpush1.msra.mxu0 0.0
        %3159 = vmatprep.subr.mxu0 0.0
        %3160 = vmatpush1.msra.mxu0 0.0
        %3161 = vmatprep.subr.mxu0 0.0
        %3162 = vmatpush1.msra.mxu0 0.0
        %3163 = vmatprep.subr.mxu0 0.0
        %3164 = vmatpush1.msra.mxu0 0.0
        %3165 = vmatprep.subr.mxu0 0.0
        %3166 = vmatpush1.msra.mxu0 0.0
        %3167 = vmatprep.subr.mxu0 0.0
        %3168 = vmatpush1.msra.mxu0 0.0
        %3169 = vmatprep.subr.mxu0 0.0
        %3170 = vmatpush1.msra.mxu0 0.0
        %3171 = vmatprep.subr.mxu0 0.0
        %3172 = vmatpush1.msra.mxu0 0.0
        %3173 = vmatprep.subr.mxu0 0.0
        %3174 = vmatpush1.msra.mxu0 %v3145
        %3175 = vmatprep.subr.mxu0 0.0
        %3176 = vmatpush1.msra.mxu0 %v3131
        %3177 = vmatprep.subr.mxu0 0.0
        %3178 = vmatpush1.msra.mxu0 %v3129
        %3179 = vmatprep.subr.mxu0 0.0
        %3180 = vmatpush2.msra.mxu0 0.0
        %3181 = vmatprep.subr.mxu0 0.0
        %3182 = vmatpush2.msra.mxu0 0.0
        %3183 = vmatprep.subr.mxu0 0.0
        %3184 = vmatpush2.msra.mxu0 0.0
        %3185 = vmatprep.subr.mxu0 0.0
        %3186 = vmatpush2.msra.mxu0 0.0
        %3187 = vmatprep.subr.mxu0 0.0
        %3188 = vmatpush2.msra.mxu0 0.0
        %3189 = vmatprep.subr.mxu0 0.0
        %3190 = vmatpush2.msra.mxu0 0.0
        %3191 = vmatprep.subr.mxu0 0.0
        %3192 = vmatpush2.msra.mxu0 0.0
        %3193 = vmatprep.subr.mxu0 0.0
        %3194 = vmatpush2.msra.mxu0 0.0
        %3195 = vmatprep.subr.mxu0 0.0
        %3196 = vmatpush2.msra.mxu0 0.0
        %3197 = vmatprep.subr.mxu0 0.0
        %3198 = vmatpush2.msra.mxu0 0.0
        %3199 = vmatprep.subr.mxu0 0.0
        %3200 = vmatpush2.msra.mxu0 0.0
        %3201 = vmatprep.subr.mxu0 0.0
        %3202 = vmatpush2.msra.mxu0 0.0
        %3203 = vmatprep.subr.mxu0 0.0
        %3204 = vmatpush2.msra.mxu0 0.0
        %3205 = vmatprep.subr.mxu0 0.0
        %3206 = vmatpush2.msra.mxu0 0.0
        %3207 = vmatprep.subr.mxu0 0.0
        %3208 = vmatpush2.msra.mxu0 0.0
        %3209 = vmatprep.subr.mxu0 0.0
        %3210 = vmatpush2.msra.mxu0 0.0
        %3211 = vmatprep.mubr.f32.mxu0 0.0
        %3212 = vmatmul.mubr.f32.gmra.mxu0 %v3137
        %v3213 = vpop.f32.mrf.mxu0
        %v3214 = vadd.f32 0.0, %v3213
        %v3215 = vpop.f32.mrf.mxu0
        %3216 = vmatprep.mubr.f32.mxu0 0.0
        %3217 = vmatmul.mubr.f32.gmra.mxu0 %v3140
        %v3218 = vpop.f32.mrf.mxu0
        %v3219 = vadd.f32 0.0, %v3218
        %v3220 = vpop.f32.mrf.mxu0
        %3221 = vmatprep.mubr.f32.mxu0 0.0
        %3222 = vmatmul.mubr.f32.gmra.mxu0 %v3143
        %v3223 = vpop.f32.mrf.mxu0
        %v3224 = vadd.f32 0.0, %v3223
        %v3225 = vpop.f32.mrf.mxu0
        %3226 = vdwg.mxu0
        %3227 = vrot.lane.b32.xlu0 %v2525, 104
        %v3228 = vpop.permute.xlu0 %3227
        %3229 = vrot.lane.b32.xlu0 %v2526, 104
        %v3230 = vpop.permute.xlu0 %3229
        %3231 = vrot.lane.b32.xlu0 %v2527, 104
        %v3232 = vpop.permute.xlu0 %3231
        %3233 = vrot.lane.b32.xlu0 %v2497, 72
        %v3234 = vpop.permute.xlu0 %3233
        %3235 = vrot.lane.b32.xlu0 %v2502, 72
        %v3236 = vpop.permute.xlu0 %3235
        %3237 = vrot.lane.b32.xlu0 %v2507, 72
        %v3238 = vpop.permute.xlu0 %3237
        %v3239 = vsel %vm960, %v3228, 0
        %v3241 = vsel %vm960, %v3230, 0
        %v3243 = vsel %vm960, %v3232, 0
        %v3245 = vsel %vm960, %v3234, 0
        %v3247 = vsel %vm960, %v3236, 0
        %v3249 = vsel %vm960, %v3238, 0
        %3251 = vmatprep.subr.mxu0 0.0
        %3252 = vmatpush1.xpose.msra.mxu0 0.0
        %3253 = vmatprep.subr.mxu0 0.0
        %3254 = vmatpush1.xpose.msra.mxu0 0.0
        %3255 = vmatprep.subr.mxu0 0.0
        %3256 = vmatpush1.xpose.msra.mxu0 0.0
        %3257 = vmatprep.subr.mxu0 0.0
        %3258 = vmatpush1.xpose.msra.mxu0 0.0
        %3259 = vmatprep.subr.mxu0 0.0
        %3260 = vmatpush1.xpose.msra.mxu0 0.0
        %3261 = vmatprep.subr.mxu0 0.0
        %3262 = vmatpush1.xpose.msra.mxu0 0.0
        %3263 = vmatprep.subr.mxu0 0.0
        %3264 = vmatpush1.xpose.msra.mxu0 0.0
        %3265 = vmatprep.subr.mxu0 0.0
        %3266 = vmatpush1.xpose.msra.mxu0 0.0
        %3267 = vmatprep.subr.mxu0 0.0
        %3268 = vmatpush1.xpose.msra.mxu0 0.0
        %3269 = vmatprep.subr.mxu0 0.0
        %3270 = vmatpush1.xpose.msra.mxu0 0.0
        %3271 = vmatprep.subr.mxu0 0.0
        %3272 = vmatpush1.xpose.msra.mxu0 0.0
        %3273 = vmatprep.subr.mxu0 0.0
        %3274 = vmatpush1.xpose.msra.mxu0 0.0
        %3275 = vmatprep.subr.mxu0 0.0
        %3276 = vmatpush1.xpose.msra.mxu0 0.0
        %3277 = vmatprep.subr.mxu0 0.0
        %3278 = vmatpush1.xpose.msra.mxu0 %v3249
        %3279 = vmatprep.subr.mxu0 0.0
        %3280 = vmatpush1.xpose.msra.mxu0 %v3247
        %3281 = vmatprep.subr.mxu0 0.0
        %3282 = vmatpush1.xpose.msra.mxu0 %v3245
        %3283 = vmatprep.subr.mxu0 0.0
        %3284 = vmatpush2.xpose.msra.mxu0 0.0
        %3285 = vmatprep.subr.mxu0 0.0
        %3286 = vmatpush2.xpose.msra.mxu0 0.0
        %3287 = vmatprep.subr.mxu0 0.0
        %3288 = vmatpush2.xpose.msra.mxu0 0.0
        %3289 = vmatprep.subr.mxu0 0.0
        %3290 = vmatpush2.xpose.msra.mxu0 0.0
        %3291 = vmatprep.subr.mxu0 0.0
        %3292 = vmatpush2.xpose.msra.mxu0 0.0
        %3293 = vmatprep.subr.mxu0 0.0
        %3294 = vmatpush2.xpose.msra.mxu0 0.0
        %3295 = vmatprep.subr.mxu0 0.0
        %3296 = vmatpush2.xpose.msra.mxu0 0.0
        %3297 = vmatprep.subr.mxu0 0.0
        %3298 = vmatpush2.xpose.msra.mxu0 0.0
        %3299 = vmatprep.subr.mxu0 0.0
        %3300 = vmatpush2.xpose.msra.mxu0 0.0
        %3301 = vmatprep.subr.mxu0 0.0
        %3302 = vmatpush2.xpose.msra.mxu0 0.0
        %3303 = vmatprep.subr.mxu0 0.0
        %3304 = vmatpush2.xpose.msra.mxu0 0.0
        %3305 = vmatprep.subr.mxu0 0.0
        %3306 = vmatpush2.xpose.msra.mxu0 0.0
        %3307 = vmatprep.subr.mxu0 0.0
        %3308 = vmatpush2.xpose.msra.mxu0 0.0
        %3309 = vmatprep.subr.mxu0 0.0
        %3310 = vmatpush2.xpose.msra.mxu0 0.0
        %3311 = vmatprep.subr.mxu0 0.0
        %3312 = vmatpush2.xpose.msra.mxu0 0.0
        %3313 = vmatprep.subr.mxu0 0.0
        %3314 = vmatpush2.xpose.msra.mxu0 0.0
        %3315 = vmatprep.mubr.f32.mxu0 0.0
        %3316 = vmatmul.mubr.f32.gmra.mxu0 %v3239
        %v3317 = vpop.f32.mrf.mxu0
        %v3318 = vadd.f32 0.0, %v3317
        %v3319 = vpop.f32.mrf.mxu0
        %3320 = vmatprep.mubr.f32.mxu0 0.0
        %3321 = vmatmul.mubr.f32.gmra.mxu0 %v3241
        %v3322 = vpop.f32.mrf.mxu0
        %v3323 = vadd.f32 0.0, %v3322
        %v3324 = vpop.f32.mrf.mxu0
        %3325 = vmatprep.mubr.f32.mxu0 0.0
        %3326 = vmatmul.mubr.f32.gmra.mxu0 %v3243
        %v3327 = vpop.f32.mrf.mxu0
        %v3328 = vadd.f32 0.0, %v3327
        %v3329 = vpop.f32.mrf.mxu0
        %3330 = vdwg.mxu0
        %v3331 = vsel %vm1056, %v3318, -inf
        %3332 = vmax.xlane.f32.xlu0 %v3331
        %v3333 = vpop.xlane.xlu0 %3332
        %v3334 = vsel %vm1056, %v3323, -inf
        %3335 = vmax.xlane.f32.xlu0 %v3334
        %v3336 = vpop.xlane.xlu0 %3335
        %v3337 = vsel %vm1063, %v3328, -inf
        %3338 = vmax.xlane.f32.xlu0 %v3337
        %v3339 = vpop.xlane.xlu0 %3338
        %v3340 = vsub.f32 %v3318, %v3333
        %v3341 = vsub.f32 %v3323, %v3336
        %v3342 = vsub.f32 %v3328, %v3339
        %v3343 = vmul.f32 %v3340, 1.442695
        %v3344 = vpow.pop %v3343
        %v3345 = vmul.f32 %v3341, 1.442695
        %v3346 = vpow.pop %v3345
        %v3347 = vmul.f32 %v3342, 1.442695
        %v3348 = vpow.pop %v3347
        %v3349 = vsel %vm1056, %v3344, 0.0
        %3350 = vadd.xlane.f32.xlu0 %v3349
        %v3351 = vpop.xlane.xlu0 %3350
        %v3352 = vsel %vm1056, %v3346, 0.0
        %3353 = vadd.xlane.f32.xlu0 %v3352
        %v3354 = vpop.xlane.xlu0 %3353
        %v3355 = vsel %vm1063, %v3348, 0.0
        %3356 = vadd.xlane.f32.xlu0 %v3355
        %v3357 = vpop.xlane.xlu0 %3356
        %v3358 = vrcp.pop %v3351
        %v3359 = vrcp.pop %v3354
        %v3360 = vrcp.pop %v3357
        %v3361 = vmul.f32 %v3344, %v3358
        %v3362 = vmul.f32 %v3346, %v3359
        %v3363 = vmul.f32 %v3348, %v3360
        %3364 = vrot.lane.b32.xlu0 %v2497, 40
        %v3365 = vpop.permute.xlu0 %3364
        %3366 = vrot.lane.b32.xlu0 %v2502, 40
        %v3367 = vpop.permute.xlu0 %3366
        %3368 = vrot.lane.b32.xlu0 %v2507, 40
        %v3369 = vpop.permute.xlu0 %3368
        %v3373 = vsel %vm1056, %v3361, 0
        %v3376 = vsel %vm1056, %v3362, 0
        %v3379 = vsel %vm1056, %v3363, 0
        %v3381 = vsel %vm1108, %v3369, 0
        %3383 = vmatprep.subr.mxu0 0.0
        %3384 = vmatpush1.msra.mxu0 0.0
        %3385 = vmatprep.subr.mxu0 0.0
        %3386 = vmatpush1.msra.mxu0 0.0
        %3387 = vmatprep.subr.mxu0 0.0
        %3388 = vmatpush1.msra.mxu0 0.0
        %3389 = vmatprep.subr.mxu0 0.0
        %3390 = vmatpush1.msra.mxu0 0.0
        %3391 = vmatprep.subr.mxu0 0.0
        %3392 = vmatpush1.msra.mxu0 0.0
        %3393 = vmatprep.subr.mxu0 0.0
        %3394 = vmatpush1.msra.mxu0 0.0
        %3395 = vmatprep.subr.mxu0 0.0
        %3396 = vmatpush1.msra.mxu0 0.0
        %3397 = vmatprep.subr.mxu0 0.0
        %3398 = vmatpush1.msra.mxu0 0.0
        %3399 = vmatprep.subr.mxu0 0.0
        %3400 = vmatpush1.msra.mxu0 0.0
        %3401 = vmatprep.subr.mxu0 0.0
        %3402 = vmatpush1.msra.mxu0 0.0
        %3403 = vmatprep.subr.mxu0 0.0
        %3404 = vmatpush1.msra.mxu0 0.0
        %3405 = vmatprep.subr.mxu0 0.0
        %3406 = vmatpush1.msra.mxu0 0.0
        %3407 = vmatprep.subr.mxu0 0.0
        %3408 = vmatpush1.msra.mxu0 0.0
        %3409 = vmatprep.subr.mxu0 0.0
        %3410 = vmatpush1.msra.mxu0 %v3381
        %3411 = vmatprep.subr.mxu0 0.0
        %3412 = vmatpush1.msra.mxu0 %v3367
        %3413 = vmatprep.subr.mxu0 0.0
        %3414 = vmatpush1.msra.mxu0 %v3365
        %3415 = vmatprep.subr.mxu0 0.0
        %3416 = vmatpush2.msra.mxu0 0.0
        %3417 = vmatprep.subr.mxu0 0.0
        %3418 = vmatpush2.msra.mxu0 0.0
        %3419 = vmatprep.subr.mxu0 0.0
        %3420 = vmatpush2.msra.mxu0 0.0
        %3421 = vmatprep.subr.mxu0 0.0
        %3422 = vmatpush2.msra.mxu0 0.0
        %3423 = vmatprep.subr.mxu0 0.0
        %3424 = vmatpush2.msra.mxu0 0.0
        %3425 = vmatprep.subr.mxu0 0.0
        %3426 = vmatpush2.msra.mxu0 0.0
        %3427 = vmatprep.subr.mxu0 0.0
        %3428 = vmatpush2.msra.mxu0 0.0
        %3429 = vmatprep.subr.mxu0 0.0
        %3430 = vmatpush2.msra.mxu0 0.0
        %3431 = vmatprep.subr.mxu0 0.0
        %3432 = vmatpush2.msra.mxu0 0.0
        %3433 = vmatprep.subr.mxu0 0.0
        %3434 = vmatpush2.msra.mxu0 0.0
        %3435 = vmatprep.subr.mxu0 0.0
        %3436 = vmatpush2.msra.mxu0 0.0
        %3437 = vmatprep.subr.mxu0 0.0
        %3438 = vmatpush2.msra.mxu0 0.0
        %3439 = vmatprep.subr.mxu0 0.0
        %3440 = vmatpush2.msra.mxu0 0.0
        %3441 = vmatprep.subr.mxu0 0.0
        %3442 = vmatpush2.msra.mxu0 0.0
        %3443 = vmatprep.subr.mxu0 0.0
        %3444 = vmatpush2.msra.mxu0 0.0
        %3445 = vmatprep.subr.mxu0 0.0
        %3446 = vmatpush2.msra.mxu0 0.0
        %3447 = vmatprep.mubr.f32.mxu0 0.0
        %3448 = vmatmul.mubr.f32.gmra.mxu0 %v3373
        %v3449 = vpop.f32.mrf.mxu0
        %v3450 = vadd.f32 0.0, %v3449
        %v3451 = vpop.f32.mrf.mxu0
        %3452 = vmatprep.mubr.f32.mxu0 0.0
        %3453 = vmatmul.mubr.f32.gmra.mxu0 %v3376
        %v3454 = vpop.f32.mrf.mxu0
        %v3455 = vadd.f32 0.0, %v3454
        %v3456 = vpop.f32.mrf.mxu0
        %3457 = vmatprep.mubr.f32.mxu0 0.0
        %3458 = vmatmul.mubr.f32.gmra.mxu0 %v3379
        %v3459 = vpop.f32.mrf.mxu0
        %v3460 = vadd.f32 0.0, %v3459
        %v3461 = vpop.f32.mrf.mxu0
        %3462 = vdwg.mxu0
        %3466 = vrot.lane.b32.xlu0 %v2978, 8
        %v3467 = vpop.permute.xlu0 %3466
        %3468 = vrot.lane.b32.xlu0 %v2983, 8
        %v3469 = vpop.permute.xlu0 %3468
        %3470 = vrot.lane.b32.xlu0 %v2988, 8
        %v3471 = vpop.permute.xlu0 %3470
        %3478 = vrot.lane.b32.xlu0 %v3214, 16
        %v3479 = vpop.permute.xlu0 %3478
        %3480 = vrot.lane.b32.xlu0 %v3219, 16
        %v3481 = vpop.permute.xlu0 %3480
        %3482 = vrot.lane.b32.xlu0 %v3224, 16
        %v3483 = vpop.permute.xlu0 %3482
        %3490 = vrot.lane.b32.xlu0 %v3450, 24
        %v3491 = vpop.permute.xlu0 %3490
        %3492 = vrot.lane.b32.xlu0 %v3455, 24
        %v3493 = vpop.permute.xlu0 %3492
        %3494 = vrot.lane.b32.xlu0 %v3460, 24
        %v3495 = vpop.permute.xlu0 %3494
        %v3499 = vsel %vm960, %v2742, %v3467
        %v3500 = vsel %vm960, %v2747, %v3469
        %v3501 = vsel %vm960, %v2752, %v3471
        %v3502 = vsel %vm1938, %v3499, %v3479
        %v3503 = vsel %vm1938, %v3500, %v3481
        %v3504 = vsel %vm1938, %v3501, %v3483
        %v3505 = vsel %vm1942, %v3502, %v3491
        %v3506 = vsel %vm1942, %v3503, %v3493
        %v3507 = vsel %vm1942, %v3504, %v3495
        %s3508 = scalar_lea.vmem %s9, 32
        %v3509 = vld [vmem:[%s3508] sm:$0xff]
        %v3510 = vld [vmem:[%s3508 + $0x8] sm:$0xff]
        %v3511 = vld [vmem:[%s3508 + $0x10] sm:$0xff]
        %v3512 = vld [vmem:[%s3508 + $0x18] sm:$0xff]
        %s3513 = scalar_lea.vmem %s10, 1
        %v3514 = vld [vmem:[%s3513] sm:$0x1]
        %v3516 = vlaneseq
        %v3517 = vshrl.u32 %v3516, 7
        %v3518 = vsub.s32 0, %v3517
        %v3519 = vrot.slane %v3514, %v3518
        %v3522 = vsel %vm782, %v3505, 0
        %v3525 = vsel %vm782, %v3506, 0
        %v3528 = vsel %vm782, %v3507, 0
        %3530 = vmatprep.subr.mxu0 0.0
        %3531 = vmatpush1.msra.mxu0 0.0
        %3532 = vmatprep.subr.mxu0 0.0
        %3533 = vmatpush1.msra.mxu0 0.0
        %3534 = vmatprep.subr.mxu0 0.0
        %3535 = vmatpush1.msra.mxu0 0.0
        %3536 = vmatprep.subr.mxu0 0.0
        %3537 = vmatpush1.msra.mxu0 0.0
        %3538 = vmatprep.subr.mxu0 0.0
        %3539 = vmatpush1.msra.mxu0 0.0
        %3540 = vmatprep.subr.mxu0 0.0
        %3541 = vmatpush1.msra.mxu0 0.0
        %3542 = vmatprep.subr.mxu0 0.0
        %3543 = vmatpush1.msra.mxu0 0.0
        %3544 = vmatprep.subr.mxu0 0.0
        %3545 = vmatpush1.msra.mxu0 0.0
        %3546 = vmatprep.subr.mxu0 0.0
        %3547 = vmatpush1.msra.mxu0 0.0
        %3548 = vmatprep.subr.mxu0 0.0
        %3549 = vmatpush1.msra.mxu0 0.0
        %3550 = vmatprep.subr.mxu0 0.0
        %3551 = vmatpush1.msra.mxu0 0.0
        %3552 = vmatprep.subr.mxu0 0.0
        %3553 = vmatpush1.msra.mxu0 0.0
        %3554 = vmatprep.subr.mxu0 0.0
        %3555 = vmatpush1.msra.mxu0 %v3512
        %3556 = vmatprep.subr.mxu0 0.0
        %3557 = vmatpush1.msra.mxu0 %v3511
        %3558 = vmatprep.subr.mxu0 0.0
        %3559 = vmatpush1.msra.mxu0 %v3510
        %3560 = vmatprep.subr.mxu0 0.0
        %3561 = vmatpush1.msra.mxu0 %v3509
        %3562 = vmatprep.subr.mxu0 0.0
        %3563 = vmatpush2.msra.mxu0 0.0
        %3564 = vmatprep.subr.mxu0 0.0
        %3565 = vmatpush2.msra.mxu0 0.0
        %3566 = vmatprep.subr.mxu0 0.0
        %3567 = vmatpush2.msra.mxu0 0.0
        %3568 = vmatprep.subr.mxu0 0.0
        %3569 = vmatpush2.msra.mxu0 0.0
        %3570 = vmatprep.subr.mxu0 0.0
        %3571 = vmatpush2.msra.mxu0 0.0
        %3572 = vmatprep.subr.mxu0 0.0
        %3573 = vmatpush2.msra.mxu0 0.0
        %3574 = vmatprep.subr.mxu0 0.0
        %3575 = vmatpush2.msra.mxu0 0.0
        %3576 = vmatprep.subr.mxu0 0.0
        %3577 = vmatpush2.msra.mxu0 0.0
        %3578 = vmatprep.subr.mxu0 0.0
        %3579 = vmatpush2.msra.mxu0 0.0
        %3580 = vmatprep.subr.mxu0 0.0
        %3581 = vmatpush2.msra.mxu0 0.0
        %3582 = vmatprep.subr.mxu0 0.0
        %3583 = vmatpush2.msra.mxu0 0.0
        %3584 = vmatprep.subr.mxu0 0.0
        %3585 = vmatpush2.msra.mxu0 0.0
        %3586 = vmatprep.subr.mxu0 0.0
        %3587 = vmatpush2.msra.mxu0 0.0
        %3588 = vmatprep.subr.mxu0 0.0
        %3589 = vmatpush2.msra.mxu0 0.0
        %3590 = vmatprep.subr.mxu0 0.0
        %3591 = vmatpush2.msra.mxu0 0.0
        %3592 = vmatprep.subr.mxu0 0.0
        %3593 = vmatpush2.msra.mxu0 0.0
        %3594 = vmatprep.mubr.f32.mxu0 0.0
        %3595 = vmatmul.mubr.f32.gmra.mxu0 %v3522
        %v3596 = vpop.f32.mrf.mxu0
        %v3597 = vadd.f32 %v3519, %v3596
        %v3598 = vpop.f32.mrf.mxu0
        %3599 = vmatprep.mubr.f32.mxu0 0.0
        %3600 = vmatmul.mubr.f32.gmra.mxu0 %v3525
        %v3601 = vpop.f32.mrf.mxu0
        %v3602 = vadd.f32 %v3519, %v3601
        %v3603 = vpop.f32.mrf.mxu0
        %3604 = vmatprep.mubr.f32.mxu0 0.0
        %3605 = vmatmul.mubr.f32.gmra.mxu0 %v3528
        %v3606 = vpop.f32.mrf.mxu0
        %v3607 = vadd.f32 %v3519, %v3606
        %v3608 = vpop.f32.mrf.mxu0
        %3609 = vdwg.mxu0
        %v3610 = vadd.f32 %v2340, %v3597
        %v3611 = vadd.f32 %v2341, %v3602
        %v3612 = vadd.f32 %v2342, %v3607
        %s3613 = scalar_lea.vmem %s11, 1
        %v3614 = vld [vmem:[%s3613] sm:$0x1]
        %s3615 = scalar_lea.vmem %s12, 1
        %v3616 = vld [vmem:[%s3615] sm:$0x1]
        %v3617 = vsel %vm782, %v3610, 0.0
        %3618 = vadd.xlane.f32.xlu0 %v3617
        %v3619 = vpop.xlane.xlu0 %3618
        %v3620 = vsel %vm782, %v3611, 0.0
        %3621 = vadd.xlane.f32.xlu0 %v3620
        %v3622 = vpop.xlane.xlu0 %3621
        %v3623 = vsel %vm780, %v3612, 0.0
        %3624 = vadd.xlane.f32.xlu0 %v3623
        %v3625 = vpop.xlane.xlu0 %3624
        %v3626 = vmul.f32 %v3619, %v799
        %v3627 = vmul.f32 %v3622, %v799
        %v3628 = vmul.f32 %v3625, %v799
        %v3629 = vsub.f32 %v3610, %v3626
        %v3630 = vsub.f32 %v3611, %v3627
        %v3631 = vsub.f32 %v3612, %v3628
        %v3632 = vmul.f32 %v3629, %v3629
        %v3633 = vmul.f32 %v3630, %v3630
        %v3634 = vmul.f32 %v3631, %v3631
        %v3635 = vsel %vm782, %v3632, 0.0
        %3636 = vadd.xlane.f32.xlu0 %v3635
        %v3637 = vpop.xlane.xlu0 %3636
        %v3638 = vsel %vm782, %v3633, 0.0
        %3639 = vadd.xlane.f32.xlu0 %v3638
        %v3640 = vpop.xlane.xlu0 %3639
        %v3641 = vsel %vm780, %v3634, 0.0
        %3642 = vadd.xlane.f32.xlu0 %v3641
        %v3643 = vpop.xlane.xlu0 %3642
        %v3644 = vmul.f32 %v3637, %v799
        %v3645 = vmul.f32 %v3640, %v799
        %v3646 = vmul.f32 %v3643, %v799
        %v3647 = vadd.f32 %v3644, 1e-06
        %v3648 = vadd.f32 %v3645, 1e-06
        %v3649 = vadd.f32 %v3646, 1e-06
        %v3650 = vrsqrt.pop %v3647
        %v3651 = vrsqrt.pop %v3648
        %v3652 = vrsqrt.pop %v3649
        %v3653 = vmul.f32 %v3629, %v3650
        %v3654 = vmul.f32 %v3630, %v3651
        %v3655 = vmul.f32 %v3631, %v3652
        %v3657 = vlaneseq
        %v3658 = vshrl.u32 %v3657, 7
        %v3659 = vsub.s32 0, %v3658
        %v3660 = vrot.slane %v3614, %v3659
        %v3662 = vmul.f32 %v3653, %v3660
        %v3663 = vmul.f32 %v3654, %v3660
        %v3664 = vmul.f32 %v3655, %v3660
        %v3666 = vlaneseq
        %v3667 = vshrl.u32 %v3666, 7
        %v3668 = vsub.s32 0, %v3667
        %v3669 = vrot.slane %v3616, %v3668
        %v3671 = vadd.f32 %v3662, %v3669
        %v3672 = vadd.f32 %v3663, %v3669
        %v3673 = vadd.f32 %v3664, %v3669
        %s3674 = scalar_lea.vmem %s13, 32
        %v3675 = vld [vmem:[%s3674] sm:$0xff]
        %v3676 = vld [vmem:[%s3674 + $0x8] sm:$0xff]
        %v3677 = vld [vmem:[%s3674 + $0x10] sm:$0xff]
        %v3678 = vld [vmem:[%s3674 + $0x18] sm:$0xff]
        %s3679 = scalar_lea.vmem %s14, 1
        %v3680 = vld [vmem:[%s3679] sm:$0x1]
        %v3682 = vlaneseq
        %v3683 = vshrl.u32 %v3682, 7
        %v3684 = vsub.s32 0, %v3683
        %v3685 = vrot.slane %v3680, %v3684
        %v3688 = vsel %vm782, %v3671, 0
        %v3691 = vsel %vm782, %v3672, 0
        %v3694 = vsel %vm782, %v3673, 0
        %3696 = vmatprep.subr.mxu0 0.0
        %3697 = vmatpush1.msra.mxu0 0.0
        %3698 = vmatprep.subr.mxu0 0.0
        %3699 = vmatpush1.msra.mxu0 0.0
        %3700 = vmatprep.subr.mxu0 0.0
        %3701 = vmatpush1.msra.mxu0 0.0
        %3702 = vmatprep.subr.mxu0 0.0
        %3703 = vmatpush1.msra.mxu0 0.0
        %3704 = vmatprep.subr.mxu0 0.0
        %3705 = vmatpush1.msra.mxu0 0.0
        %3706 = vmatprep.subr.mxu0 0.0
        %3707 = vmatpush1.msra.mxu0 0.0
        %3708 = vmatprep.subr.mxu0 0.0
        %3709 = vmatpush1.msra.mxu0 0.0
        %3710 = vmatprep.subr.mxu0 0.0
        %3711 = vmatpush1.msra.mxu0 0.0
        %3712 = vmatprep.subr.mxu0 0.0
        %3713 = vmatpush1.msra.mxu0 0.0
        %3714 = vmatprep.subr.mxu0 0.0
        %3715 = vmatpush1.msra.mxu0 0.0
        %3716 = vmatprep.subr.mxu0 0.0
        %3717 = vmatpush1.msra.mxu0 0.0
        %3718 = vmatprep.subr.mxu0 0.0
        %3719 = vmatpush1.msra.mxu0 0.0
        %3720 = vmatprep.subr.mxu0 0.0
        %3721 = vmatpush1.msra.mxu0 %v3678
        %3722 = vmatprep.subr.mxu0 0.0
        %3723 = vmatpush1.msra.mxu0 %v3677
        %3724 = vmatprep.subr.mxu0 0.0
        %3725 = vmatpush1.msra.mxu0 %v3676
        %3726 = vmatprep.subr.mxu0 0.0
        %3727 = vmatpush1.msra.mxu0 %v3675
        %3728 = vmatprep.subr.mxu0 0.0
        %3729 = vmatpush2.msra.mxu0 0.0
        %3730 = vmatprep.subr.mxu0 0.0
        %3731 = vmatpush2.msra.mxu0 0.0
        %3732 = vmatprep.subr.mxu0 0.0
        %3733 = vmatpush2.msra.mxu0 0.0
        %3734 = vmatprep.subr.mxu0 0.0
        %3735 = vmatpush2.msra.mxu0 0.0
        %3736 = vmatprep.subr.mxu0 0.0
        %3737 = vmatpush2.msra.mxu0 0.0
        %3738 = vmatprep.subr.mxu0 0.0
        %3739 = vmatpush2.msra.mxu0 0.0
        %3740 = vmatprep.subr.mxu0 0.0
        %3741 = vmatpush2.msra.mxu0 0.0
        %3742 = vmatprep.subr.mxu0 0.0
        %3743 = vmatpush2.msra.mxu0 0.0
        %3744 = vmatprep.subr.mxu0 0.0
        %3745 = vmatpush2.msra.mxu0 0.0
        %3746 = vmatprep.subr.mxu0 0.0
        %3747 = vmatpush2.msra.mxu0 0.0
        %3748 = vmatprep.subr.mxu0 0.0
        %3749 = vmatpush2.msra.mxu0 0.0
        %3750 = vmatprep.subr.mxu0 0.0
        %3751 = vmatpush2.msra.mxu0 0.0
        %3752 = vmatprep.subr.mxu0 0.0
        %3753 = vmatpush2.msra.mxu0 0.0
        %3754 = vmatprep.subr.mxu0 0.0
        %3755 = vmatpush2.msra.mxu0 0.0
        %3756 = vmatprep.subr.mxu0 0.0
        %3757 = vmatpush2.msra.mxu0 0.0
        %3758 = vmatprep.subr.mxu0 0.0
        %3759 = vmatpush2.msra.mxu0 0.0
        %3760 = vmatprep.mubr.f32.mxu0 0.0
        %3761 = vmatmul.mubr.f32.gmra.mxu0 %v3688
        %v3762 = vpop.f32.mrf.mxu0
        %v3763 = vadd.f32 %v3685, %v3762
        %v3764 = vpop.f32.mrf.mxu0
        %3765 = vmatprep.mubr.f32.mxu0 0.0
        %3766 = vmatmul.mubr.f32.gmra.mxu0 %v3691
        %v3767 = vpop.f32.mrf.mxu0
        %v3768 = vadd.f32 %v3685, %v3767
        %v3769 = vpop.f32.mrf.mxu0
        %3770 = vmatprep.mubr.f32.mxu0 0.0
        %3771 = vmatmul.mubr.f32.gmra.mxu0 %v3694
        %v3772 = vpop.f32.mrf.mxu0
        %v3773 = vadd.f32 %v3685, %v3772
        %v3774 = vpop.f32.mrf.mxu0
        %3775 = vdwg.mxu0
        %v3776 = vmul.f32 %v3763, 0.5
        %v3777 = vmul.f32 %v3768, 0.5
        %v3778 = vmul.f32 %v3773, 0.5
        %v3779 = vmul.f32 %v3763, 0.044715
        %v3780 = vmul.f32 %v3768, 0.044715
        %v3781 = vmul.f32 %v3773, 0.044715
        %v3782 = vmul.f32 %v3779, %v3763
        %v3783 = vmul.f32 %v3780, %v3768
        %v3784 = vmul.f32 %v3781, %v3773
        %v3785 = vmul.f32 %v3782, %v3763
        %v3786 = vmul.f32 %v3783, %v3768
        %v3787 = vmul.f32 %v3784, %v3773
        %v3788 = vadd.f32 %v3763, %v3785
        %v3789 = vadd.f32 %v3768, %v3786
        %v3790 = vadd.f32 %v3773, %v3787
        %v3791 = vmul.f32 %v3788, 0.7978846
        %v3792 = vmul.f32 %v3789, 0.7978846
        %v3793 = vmul.f32 %v3790, 0.7978846
        %v3794 = vtanh.pop %v3791
        %v3795 = vtanh.pop %v3792
        %v3796 = vtanh.pop %v3793
        %v3797 = vadd.f32 %v3794, 1.0
        %v3798 = vadd.f32 %v3795, 1.0
        %v3799 = vadd.f32 %v3796, 1.0
        %v3800 = vmul.f32 %v3776, %v3797
        %v3801 = vmul.f32 %v3777, %v3798
        %v3802 = vmul.f32 %v3778, %v3799
        %s3803 = scalar_lea.vmem %s15, 64
        %v3804 = vld [vmem:[%s3803] sm:$0xff]
        %v3805 = vld [vmem:[%s3803 + $0x8] sm:$0xff]
        %v3806 = vld [vmem:[%s3803 + $0x10] sm:$0xff]
        %v3807 = vld [vmem:[%s3803 + $0x18] sm:$0xff]
        %v3808 = vld [vmem:[%s3803 + $0x20] sm:$0xff]
        %v3809 = vld [vmem:[%s3803 + $0x28] sm:$0xff]
        %v3810 = vld [vmem:[%s3803 + $0x30] sm:$0xff]
        %v3811 = vld [vmem:[%s3803 + $0x38] sm:$0xff]
        %s3812 = scalar_lea.vmem %s16, 1
        %v3813 = vld [vmem:[%s3812] sm:$0x1]
        %v3815 = vlaneseq
        %v3816 = vshrl.u32 %v3815, 7
        %v3817 = vsub.s32 0, %v3816
        %v3818 = vrot.slane %v3813, %v3817
        %v3821 = vsel %vm2250, %v3800, 0
        %v3824 = vsel %vm2250, %v3801, 0
        %v3827 = vsel %vm2250, %v3802, 0
        %3829 = vmatprep.subr.mxu0 0.0
        %3830 = vmatpush1.msra.mxu0 0.0
        %3831 = vmatprep.subr.mxu0 0.0
        %3832 = vmatpush1.msra.mxu0 0.0
        %3833 = vmatprep.subr.mxu0 0.0
        %3834 = vmatpush1.msra.mxu0 0.0
        %3835 = vmatprep.subr.mxu0 0.0
        %3836 = vmatpush1.msra.mxu0 0.0
        %3837 = vmatprep.subr.mxu0 0.0
        %3838 = vmatpush1.msra.mxu0 0.0
        %3839 = vmatprep.subr.mxu0 0.0
        %3840 = vmatpush1.msra.mxu0 0.0
        %3841 = vmatprep.subr.mxu0 0.0
        %3842 = vmatpush1.msra.mxu0 0.0
        %3843 = vmatprep.subr.mxu0 0.0
        %3844 = vmatpush1.msra.mxu0 0.0
        %3845 = vmatprep.subr.mxu0 0.0
        %3846 = vmatpush1.msra.mxu0 %v3811
        %3847 = vmatprep.subr.mxu0 0.0
        %3848 = vmatpush1.msra.mxu0 %v3810
        %3849 = vmatprep.subr.mxu0 0.0
        %3850 = vmatpush1.msra.mxu0 %v3809
        %3851 = vmatprep.subr.mxu0 0.0
        %3852 = vmatpush1.msra.mxu0 %v3808
        %3853 = vmatprep.subr.mxu0 0.0
        %3854 = vmatpush1.msra.mxu0 %v3807
        %3855 = vmatprep.subr.mxu0 0.0
        %3856 = vmatpush1.msra.mxu0 %v3806
        %3857 = vmatprep.subr.mxu0 0.0
        %3858 = vmatpush1.msra.mxu0 %v3805
        %3859 = vmatprep.subr.mxu0 0.0
        %3860 = vmatpush1.msra.mxu0 %v3804
        %3861 = vmatprep.subr.mxu0 0.0
        %3862 = vmatpush2.msra.mxu0 0.0
        %3863 = vmatprep.subr.mxu0 0.0
        %3864 = vmatpush2.msra.mxu0 0.0
        %3865 = vmatprep.subr.mxu0 0.0
        %3866 = vmatpush2.msra.mxu0 0.0
        %3867 = vmatprep.subr.mxu0 0.0
        %3868 = vmatpush2.msra.mxu0 0.0
        %3869 = vmatprep.subr.mxu0 0.0
        %3870 = vmatpush2.msra.mxu0 0.0
        %3871 = vmatprep.subr.mxu0 0.0
        %3872 = vmatpush2.msra.mxu0 0.0
        %3873 = vmatprep.subr.mxu0 0.0
        %3874 = vmatpush2.msra.mxu0 0.0
        %3875 = vmatprep.subr.mxu0 0.0
        %3876 = vmatpush2.msra.mxu0 0.0
        %3877 = vmatprep.subr.mxu0 0.0
        %3878 = vmatpush2.msra.mxu0 0.0
        %3879 = vmatprep.subr.mxu0 0.0
        %3880 = vmatpush2.msra.mxu0 0.0
        %3881 = vmatprep.subr.mxu0 0.0
        %3882 = vmatpush2.msra.mxu0 0.0
        %3883 = vmatprep.subr.mxu0 0.0
        %3884 = vmatpush2.msra.mxu0 0.0
        %3885 = vmatprep.subr.mxu0 0.0
        %3886 = vmatpush2.msra.mxu0 0.0
        %3887 = vmatprep.subr.mxu0 0.0
        %3888 = vmatpush2.msra.mxu0 0.0
        %3889 = vmatprep.subr.mxu0 0.0
        %3890 = vmatpush2.msra.mxu0 0.0
        %3891 = vmatprep.subr.mxu0 0.0
        %3892 = vmatpush2.msra.mxu0 0.0
        %3893 = vmatprep.mubr.f32.mxu0 0.0
        %3894 = vmatmul.mubr.f32.gmra.mxu0 %v3821
        %v3895 = vpop.f32.mrf.mxu0
        %v3896 = vadd.f32 %v3818, %v3895
        %v3897 = vpop.f32.mrf.mxu0
        %3898 = vmatprep.mubr.f32.mxu0 0.0
        %3899 = vmatmul.mubr.f32.gmra.mxu0 %v3824
        %v3900 = vpop.f32.mrf.mxu0
        %v3901 = vadd.f32 %v3818, %v3900
        %v3902 = vpop.f32.mrf.mxu0
        %3903 = vmatprep.mubr.f32.mxu0 0.0
        %3904 = vmatmul.mubr.f32.gmra.mxu0 %v3827
        %v3905 = vpop.f32.mrf.mxu0
        %v3906 = vadd.f32 %v3818, %v3905
        %v3907 = vpop.f32.mrf.mxu0
        %3908 = vdwg.mxu0
        %v3909 = vadd.f32 %v3610, %v3896
        %v3910 = vadd.f32 %v3611, %v3901
        %v3911 = vadd.f32 %v3612, %v3906
        %v3912 = vld [vmem:[%s17] sm:$0x1]
        %v3913 = vld [vmem:[%s18] sm:$0x1]
        %v3914 = vsel %vm2343, %v3909, 0.0
        %3915 = vadd.xlane.f32.xlu0 %v3914
        %v3916 = vpop.xlane.xlu0 %3915
        %v3917 = vsel %vm782, %v3910, 0.0
        %3918 = vadd.xlane.f32.xlu0 %v3917
        %v3919 = vpop.xlane.xlu0 %3918
        %v3920 = vsel %vm780, %v3911, 0.0
        %3921 = vadd.xlane.f32.xlu0 %v3920
        %v3922 = vpop.xlane.xlu0 %3921
        %v3923 = vmul.f32 %v3916, %v799
        %v3924 = vmul.f32 %v3919, %v799
        %v3925 = vmul.f32 %v3922, %v799
        %v3926 = vsub.f32 %v3909, %v3923
        %v3927 = vsub.f32 %v3910, %v3924
        %v3928 = vsub.f32 %v3911, %v3925
        %v3929 = vmul.f32 %v3926, %v3926
        %v3930 = vmul.f32 %v3927, %v3927
        %v3931 = vmul.f32 %v3928, %v3928
        %v3932 = vsel %vm2343, %v3929, 0.0
        %3933 = vadd.xlane.f32.xlu0 %v3932
        %v3934 = vpop.xlane.xlu0 %3933
        %v3935 = vsel %vm782, %v3930, 0.0
        %3936 = vadd.xlane.f32.xlu0 %v3935
        %v3937 = vpop.xlane.xlu0 %3936
        %v3938 = vsel %vm780, %v3931, 0.0
        %3939 = vadd.xlane.f32.xlu0 %v3938
        %v3940 = vpop.xlane.xlu0 %3939
        %v3941 = vmul.f32 %v3934, %v799
        %v3942 = vmul.f32 %v3937, %v799
        %v3943 = vmul.f32 %v3940, %v799
        %v3944 = vadd.f32 %v3941, 1e-06
        %v3945 = vadd.f32 %v3942, 1e-06
        %v3946 = vadd.f32 %v3943, 1e-06
        %v3947 = vrsqrt.pop %v3944
        %v3948 = vrsqrt.pop %v3945
        %v3949 = vrsqrt.pop %v3946
        %v3950 = vmul.f32 %v3926, %v3947
        %v3951 = vmul.f32 %v3927, %v3948
        %v3952 = vmul.f32 %v3928, %v3949
        %v3954 = vlaneseq
        %v3955 = vshrl.u32 %v3954, 7
        %v3956 = vsub.s32 0, %v3955
        %v3957 = vrot.slane %v3912, %v3956
        %v3959 = vmul.f32 %v3950, %v3957
        %v3960 = vmul.f32 %v3951, %v3957
        %v3961 = vmul.f32 %v3952, %v3957
        %v3963 = vlaneseq
        %v3964 = vshrl.u32 %v3963, 7
        %v3965 = vsub.s32 0, %v3964
        %v3966 = vrot.slane %v3913, %v3965
        %v3968 = vadd.f32 %v3959, %v3966
        %v3969 = vadd.f32 %v3960, %v3966
        %v3970 = vadd.f32 %v3961, %v3966
        %v3971 = vmul.f32 %v3968, %v3968
        %v3972 = vmul.f32 %v3969, %v3969
        %v3973 = vmul.f32 %v3970, %v3970
        %v3974 = vsel %vm2343, %v3971, 0.0
        %3975 = vadd.xlane.f32.xlu0 %v3974
        %v3976 = vpop.xlane.xlu0 %3975
        %v3977 = vsel %vm782, %v3972, 0.0
        %3978 = vadd.xlane.f32.xlu0 %v3977
        %v3979 = vpop.xlane.xlu0 %3978
        %v3980 = vsel %vm780, %v3973, 0.0
        %3981 = vadd.xlane.f32.xlu0 %v3980
        %v3982 = vpop.xlane.xlu0 %3981
        %v3983 = vrsqrt.pop %v3976
        %v3984 = vmul.f32 %v3976, %v3983
        %vm3985 = vcmp.eq.f32.partialorder %v3976, inf
        %v3986 = vsel %vm3985, %v3976, %v3984
        %vm3987 = vcmp.eq.f32.partialorder %v3976, 0.0
        %v3988 = vand.u32 %v3976, 2147483648
        %v3989 = vsel %vm3987, %v3988, %v3986
        %v3990 = vrsqrt.pop %v3979
        %v3991 = vmul.f32 %v3979, %v3990
        %vm3992 = vcmp.eq.f32.partialorder %v3979, inf
        %v3993 = vsel %vm3992, %v3979, %v3991
        %vm3994 = vcmp.eq.f32.partialorder %v3979, 0.0
        %v3995 = vand.u32 %v3979, 2147483648
        %v3996 = vsel %vm3994, %v3995, %v3993
        %v3997 = vrsqrt.pop %v3982
        %v3998 = vmul.f32 %v3982, %v3997
        %vm3999 = vcmp.eq.f32.partialorder %v3982, inf
        %v4000 = vsel %vm3999, %v3982, %v3998
        %vm4001 = vcmp.eq.f32.partialorder %v3982, 0.0
        %v4002 = vand.u32 %v3982, 2147483648
        %v4003 = vsel %vm4001, %v4002, %v4000
        %v4004 = vmax.f32 %v3989, 1e-12
        %v4005 = vmax.f32 %v3996, 1e-12
        %v4006 = vmax.f32 %v4003, 1e-12
        %v4007 = vrcp.pop %v4004
        %v4008 = vmul.f32 %v3968, %v4007
        %v4009 = vrcp.pop %v4005
        %v4010 = vmul.f32 %v3969, %v4009
        %v4011 = vrcp.pop %v4006
        %v4012 = vmul.f32 %v3970, %v4011
        %4013 = vst.msk [vmem:[%s653 - $0x1] sm:$0xfe] %vm2343, %v4008
        %4014 = vst.msk [vmem:[%s653 + $0x7] sm:$0xff] %vm782, %v4010
        %4015 = vst.msk [vmem:[%s653 + $0xf] sm:$0x1] %vm780, %v4012
        %s4016 = sand.u32 %s451, 1
        %s4017 = scalar_lea.sflag [#allocation4], %s4016
        %s4018 = sand.u32 %s451, 1
        %s4019 = smul.addr %s4018, 16
        %s4020 = scalar_lea.vmem [#allocation3], %s4019
        %p4021 = scmp.lt.s32.totalorder %s39, 1
        %s4022 = scalar_select %p4021, %s39, 1
        %s4023 = smul.addr %s4022, 2
        %s4024 = smul.addr %s4023, 8
        %s4025 = scalar_lea.vmem %s20, %s4024
        %s4026 = sand.u32 %s503, 1
        %s4027 = scalar_lea.sflag [#allocation6], %s4026
        %s4028 = sand.u32 %s503, 1
        %s4029 = smul.addr %s4028, 16
        %s4030 = scalar_lea.vmem [#allocation5], %s4029
        // Predicated region
        $region97: #{vit_forward.1} parent=95 // pred_check
          %p4031 = pneg %p461
        $region98: #{vit_forward.1} parent=95 // pred_check_branch
          %4033 = sbr.rel (%p4031) target = $region100
        $region99: #{vit_forward.1} parent=95 // pred_region
          %s4035 = ssub.s32 256, 256
          %4036 = vsyncadd %s4017, %s4035
          %s4037 = smul.addr %s39, 2
          %s4038 = smul.addr %s4037, 128
          %s4039 = scalar_lea.hbm %s19, %s4038
          %s4040 = sshll.u32 %s4020, 4
          %s4041 = int_to_ptr.vmem [resolvable:$true] %s4040
          %4046 = dma.vmem_to_hbm [thread:$0]  %s4041, 256, %s4039, %s4017, 128, 128, 8
        $region100: #{vit_forward.1} parent=95 // pred_fallthru
          _
        // Predicated region
        $region101: #{vit_forward.1} parent=95 // pred_check
          %p4047 = pneg %p487
        $region102: #{vit_forward.1} parent=95 // pred_check_branch
          %4049 = sbr.rel (%p4047) target = $region104
        $region103: #{vit_forward.1} parent=95 // pred_region
          _
        $region104: #{vit_forward.1} parent=95 // pred_fallthru
          _
        // Predicated region
        $region105: #{vit_forward.1} parent=95 // pred_check
          %p4050 = pneg %p513
        $region106: #{vit_forward.1} parent=95 // pred_check_branch
          %4052 = sbr.rel (%p4050) target = $region108
        $region107: #{vit_forward.1} parent=95 // pred_region
          %s4054 = ssub.s32 256, 256
          %4055 = vsyncadd %s4027, %s4054
          %s4056 = smul.addr %s39, 2
          %s4057 = smul.addr %s4056, 128
          %s4058 = scalar_lea.hbm %s21, %s4057
          %s4059 = sshll.u32 %s4030, 4
          %s4060 = int_to_ptr.vmem [resolvable:$true] %s4059
          %4065 = dma.vmem_to_hbm [thread:$0]  %s4060, 256, %s4058, %s4027, 128, 128, 8
        $region108: #{vit_forward.1} parent=95 // pred_fallthru
          _
      $region96: #{vit_forward.1} parent=5 // pred_fallthru
        _
      %p4066 = scmp.le.s32.totalorder 2, %s34
      // Predicated region
      $region109: #{vit_forward.1} parent=5 // pred_check
        %p4067 = pneg %p4066
      $region110: #{vit_forward.1} parent=5 // pred_check_branch
        %4069 = sbr.rel (%p4067) target = $region112
      $region111: #{vit_forward.1} parent=5 // pred_region
        %s4070 = ssub.s32 %s34, 2
        // Predicated region
        $region113: #{vit_forward.1} parent=111 // pred_check
          %p4071 = pneg %p467
        $region114: #{vit_forward.1} parent=111 // pred_check_branch
          %4073 = sbr.rel (%p4071) target = $region116
        $region115: #{vit_forward.1} parent=111 // pred_region
          %s4074 = sand.u32 %s452, 1
          %s4075 = scalar_lea.sflag [#allocation4], %s4074
          %s4076 = sand.u32 %s452, 1
          %s4077 = smul.addr %s4076, 16
          %s4078 = scalar_lea.vmem [#allocation3], %s4077
          %4079 = dma.done %s4075, 256
        $region116: #{vit_forward.1} parent=111 // pred_fallthru
          _
        // Predicated region
        $region117: #{vit_forward.1} parent=111 // pred_check
          %p4080 = pneg %p493
        $region118: #{vit_forward.1} parent=111 // pred_check_branch
          %4082 = sbr.rel (%p4080) target = $region120
        $region119: #{vit_forward.1} parent=111 // pred_region
          %p4083 = scmp.lt.s32.totalorder %s40, 1
          %s4084 = scalar_select %p4083, %s40, 1
          %s4085 = smul.addr %s4084, 2
          %s4086 = smul.addr %s4085, 8
          %s4087 = scalar_lea.vmem %s20, %s4086
        $region120: #{vit_forward.1} parent=111 // pred_fallthru
          _
        // Predicated region
        $region121: #{vit_forward.1} parent=111 // pred_check
          %p4088 = pneg %p519
        $region122: #{vit_forward.1} parent=111 // pred_check_branch
          %4090 = sbr.rel (%p4088) target = $region124
        $region123: #{vit_forward.1} parent=111 // pred_region
          %s4091 = sand.u32 %s504, 1
          %s4092 = scalar_lea.sflag [#allocation6], %s4091
          %s4093 = sand.u32 %s504, 1
          %s4094 = smul.addr %s4093, 16
          %s4095 = scalar_lea.vmem [#allocation5], %s4094
          %4096 = dma.done %s4092, 256
        $region124: #{vit_forward.1} parent=111 // pred_fallthru
          _
      $region112: #{vit_forward.1} parent=5 // pred_fallthru
        _
    $region6: #{vit_forward.1} parent=1 // loop_footer
      %s38 = sadd.s32 1, %s34
    $region7: #{vit_forward.1} parent=1 // loop_footer_branch
      %33 = sbr.rel target = $region3
    $region8: #{vit_forward.1} parent=1 // loop_exit
      _
    %4097 = vsyncpa [#allocation4], 1
    %s4098 = scalar_lea.sflag [#allocation4], 1
    %4099 = vsyncpa %s4098, 1
    %4100 = vsyncpa [#allocation6], 1
    %s4101 = scalar_lea.sflag [#allocation6], 1
    %4102 = vsyncpa %s4101, 1

</llo_original>
